<compile_context>
chip_gen: v6e
topology: v6e:2x2x1
jax: 0.10.0
libtpu: 0.0.40
codegen_flags: <defaults>
</compile_context>

<pallas_src>
import functools

import numpy as np
import jax
import jax.numpy as jnp
from jax.experimental import pallas as pl
from jax.experimental.pallas import tpu as pltpu

# Reduced MobileNetV3-small-style block config:
# (kernel, expand_ch (0 = no expand), out_ch, use_se, activation, stride)
BLOCK_CFG = [
    (3, 0,  8,  True,  "relu",      2),   # depthwise-separable block
    (3, 16, 16, False, "relu",      2),
    (3, 24, 16, False, "relu",      1),   # residual
    (5, 32, 24, True,  "hardswish", 2),
    (5, 48, 24, True,  "hardswish", 1),   # residual
]
STEM_CH = 8
HEAD_CH = 32   # == classifier in_features of the synthetic model
IN_CH = 3


def _act(x, act):
    if act == "linear":
        return x
    if act == "relu":
        return jnp.maximum(x, 0.0)
    if act == "hardswish":
        return x * jnp.clip(x + 3.0, 0.0, 6.0) * (1.0 / 6.0)
    if act == "hardsigmoid":
        return jnp.clip(x + 3.0, 0.0, 6.0) * (1.0 / 6.0)
    raise ValueError(act)


# ---------------------- host-side (static-shape) helpers --------------------

def _same_out_pad(size, k, s):
    """TF 'SAME' conv: output size and leading pad (extra pad goes to the end)."""
    out = -(-size // s)                       # ceil(size / s)
    pad = max((out - 1) * s + k - size, 0)
    return out, pad // 2


def _build_sel_np(H, W, k, s):
    """0/1 selection matrices for a k x k conv gather with TF-SAME padding.

    sel[t, ohw, hw] == 1 iff output pixel ohw reads input pixel hw under tap t
    (zero where the tap falls in padding), so no padded / im2col tensor is ever
    materialized in HBM.
    """
    OH, ph = _same_out_pad(H, k, s)
    OW, pw = _same_out_pad(W, k, s)
    sel = np.zeros((k * k, OH * OW, H * W), np.float32)
    for kh in range(k):
        for kw in range(k):
            t = kh * k + kw
            for oh in range(OH):
                ih = oh * s + kh - ph
                if ih < 0 or ih >= H:
                    continue
                for ow in range(OW):
                    iw = ow * s + kw - pw
                    if 0 <= iw < W:
                        sel[t, oh * OW + ow, ih * W + iw] = 1.0
    return sel, OH, OW


def _pack_rows(entries, align):
    """Pack a list of (name, 2-D np array) into one padded 2-D buffer.

    Returns ({name: (row, rows, cols)}, buffer).  Each slot starts at a row
    offset rounded up to `align`; columns start at 0 (lane-aligned slices).
    """
    width = max(a.shape[1] for _, a in entries)
    offs, rows = {}, 0
    for name, a in entries:
        r, c = a.shape
        offs[name] = (rows, r, c)
        rows += -(-r // align) * align
    rows = -(-rows // 8) * 8
    buf = np.zeros((rows, width), np.float32)
    for name, a in entries:
        row, r, c = offs[name]
        buf[row:row + r, :c] = a
    return offs, buf


# ----------------------------- fused Pallas kernel --------------------------

def _mobnet_kernel(*refs, plan):
    """Whole forward pass for one batch element; everything VMEM/vreg resident."""
    f32, bf16 = jnp.float32, jnp.bfloat16
    it = iter(refs)
    x_ref = next(it)
    sel_stem_ref = next(it)
    blk_sel = [next(it) if bp["dw_path"] == "mxu" else None for bp in plan["blocks"]]
    mats_ref = next(it)
    vecs_ref = next(it)
    o_ref = next(it)

    def mat(name, dtype=None):
        row, r, c = plan["mats"][name]
        v = mats_ref[row:row + r, :c]          # bf16, static slice
        return v if dtype is None else v.astype(dtype)

    def vec(name):
        row, r, c = plan["vecs"][name]
        return vecs_ref[row:row + r, :c]        # f32, static slice

    # ---- conv_stem (3x3/s2, TF-SAME) + bn1 + act1(hardswish) ----------------
    sp = plan["stem"]
    ohw0 = sp["OHW"]
    x = x_ref[0]                                                  # (HW0, 3) f32
    # one merged gather matmul over all k*k taps (rows ordered tap-major)
    g = jnp.dot(sel_stem_ref[...], x.astype(bf16),
                preferred_element_type=f32)                       # (kk*OHW0, 3)
    acc = None
    for t in range(sp["kk"]):
        gt = g[t * ohw0:(t + 1) * ohw0, :].astype(bf16)           # aligned slice
        term = jnp.dot(gt, mat(f"stem_w{t}"), preferred_element_type=f32)
        acc = term if acc is None else acc + term
    y = _act(acc * vec("stem_s") + vec("stem_b"), "hardswish")    # (OHW0, STEM_CH)

    # ---- inverted-residual blocks -------------------------------------------
    for bi, bp in enumerate(plan["blocks"]):
        xin = y
        act = bp["act"]

        # 1x1 expand + folded BN + act (MXU)
        if bp["has_exp"]:
            e = jnp.dot(xin.astype(bf16), mat(f"b{bi}_exp_w"),
                        preferred_element_type=f32)
            e = _act(e * vec(f"b{bi}_exp_s") + vec(f"b{bi}_exp_b"), act)
        else:
            e = xin

        # depthwise conv; TF-SAME padding is folded into sel / weff host-side
        if bp["dw_path"] == "vpu1":
            # OHW == 1: sel folded into weff host-side -> pure VPU weighted sum
            d = jnp.sum(e * vec(f"b{bi}_weff"), axis=0, keepdims=True)
        elif bp["dw_path"] == "vpuN":
            # small unaligned HW: per-input-pixel VPU FMAs, no MXU / no reshape
            weff = vec(f"b{bi}_weff")                             # (HW*OHW, mid)
            ohw = bp["OHW"]
            d = None
            for hw in range(bp["HW"]):
                term = e[hw:hw + 1, :] * weff[hw * ohw:(hw + 1) * ohw, :]
                d = term if d is None else d + term
        else:
            # single merged MXU matmul over all k*k taps
            dw_w = mat(f"b{bi}_dw_w", f32)                        # (kk, mid)
            stacked = (dw_w[:, None, :] * e[None, :, :]).reshape(
                bp["kk"] * bp["HW"], bp["mid"]).astype(bf16)      # (kk*HW, mid)
            d = jnp.dot(blk_sel[bi][...], stacked, preferred_element_type=f32)
        d = _act(d * vec(f"b{bi}_dw_s") + vec(f"b{bi}_dw_b"), act)

        # squeeze-excite (tiny MXU matmuls, fully resident)
        if bp["has_se"]:
            pooled = jnp.mean(d, axis=0, keepdims=True)           # (1, mid)
            s1 = jnp.dot(pooled.astype(bf16), mat(f"b{bi}_se_w1"),
                         preferred_element_type=f32) + vec(f"b{bi}_se_b1")
            s1 = jnp.maximum(s1, 0.0)
            gate = jnp.dot(s1.astype(bf16), mat(f"b{bi}_se_w2"),
                           preferred_element_type=f32) + vec(f"b{bi}_se_b2")
            d = d * _act(gate, "hardsigmoid")

        # 1x1 project + folded BN (linear) + residual
        yb = jnp.dot(d.astype(bf16), mat(f"b{bi}_pw_w"), preferred_element_type=f32)
        yb = yb * vec(f"b{bi}_pw_s") + vec(f"b{bi}_pw_b")
        if bp["has_res"]:
            yb = yb + xin
        y = yb

    # ---- global_pool + conv_head(1x1, bias) + act2(hardswish) + flatten -----
    pooled = jnp.mean(y, axis=0, keepdims=True)                   # (1, C_last)
    h = jnp.dot(pooled.astype(bf16), mat("head_w"),
                preferred_element_type=f32) + vec("head_b")
    o_ref[0] = _act(h, "hardswish").astype(o_ref.dtype)


# ------------------------------ params / packing ----------------------------

def init_params(key):
    keys = iter(jax.random.split(key, 256))

    def nrm(shape, scale=0.1):
        return scale * jax.random.normal(next(keys), shape, jnp.float32)

    def bn(c):  # folded BatchNorm: per-channel scale / shift, stored (1, C)
        return 1.0 + nrm((1, c)), nrm((1, c))

    params = {}
    params["stem_w"] = nrm((3 * 3, IN_CH, STEM_CH))       # conv_stem 3x3 s2, no bias
    params["stem_s"], params["stem_b"] = bn(STEM_CH)      # bn1
    blocks = []
    cin = STEM_CH
    for (k, exp, out, use_se, _act_name, _stride) in BLOCK_CFG:
        p = {}
        mid = exp if exp > 0 else cin
        if exp > 0:
            p["exp_w"] = nrm((cin, exp))
            p["exp_s"], p["exp_b"] = bn(exp)
        p["dw_w"] = nrm((k * k, mid))
        p["dw_s"], p["dw_b"] = bn(mid)
        if use_se:
            se_c = max(mid // 4, 4)
            p["se_w1"], p["se_b1"] = nrm((mid, se_c)), nrm((1, se_c))
            p["se_w2"], p["se_b2"] = nrm((se_c, mid)), nrm((1, mid))
        p["pw_w"] = nrm((mid, out))
        p["pw_s"], p["pw_b"] = bn(out)
        blocks.append(p)
        cin = out
    params["blocks"] = blocks
    params["head_w"] = nrm((cin, HEAD_CH))                # conv_head 1x1 (bias, no BN)
    params["head_b"] = nrm((1, HEAD_CH))
    return params


def build_model(params, H, W):
    """Fold sel matrices / weights into packed kernel inputs + a static plan."""
    npf = lambda a: np.asarray(a, np.float32)
    mats, vecs, sel_inputs = [], [], []

    # stem: row-stacked selection matrix (tap-major rows) + 9 tiny tap weights
    sel_np, OH, OW = _build_sel_np(H, W, 3, 2)
    stem = {"HW": H * W, "OHW": OH * OW, "kk": 9}
    sel_inputs.append(("sel_stem", sel_np.reshape(9 * OH * OW, H * W)))
    w = npf(params["stem_w"])                              # (9, 3, STEM_CH)
    for t in range(9):
        mats.append((f"stem_w{t}", w[t]))
    vecs.append(("stem_s", npf(params["stem_s"])))
    vecs.append(("stem_b", npf(params["stem_b"])))

    blocks_meta = []
    cin, curH, curW = STEM_CH, OH, OW
    for bi, ((k, exp, out, use_se, act, stride), p) in enumerate(
            zip(BLOCK_CFG, params["blocks"])):
        kk = k * k
        mid = exp if exp > 0 else cin
        sel_np, OH, OW = _build_sel_np(curH, curW, k, stride)
        HW, OHW = curH * curW, OH * OW
        dw_np = npf(p["dw_w"])                             # (kk, mid)

        if OHW == 1:
            dw_path = "vpu1"   # fold sel into the dw weight host-side
            weff = np.einsum("th,tc->hc", sel_np[:, 0, :], dw_np)     # (HW, mid)
            vecs.append((f"b{bi}_weff", weff))
        elif HW % 8 == 0:
            dw_path = "mxu"    # one merged matmul: sel_wide @ stack_t(e * dw_w[t])
            sel_inputs.append(
                (f"sel_b{bi}", sel_np.transpose(1, 0, 2).reshape(OHW, kk * HW)))
            mats.append((f"b{bi}_dw_w", dw_np))
        else:
            dw_path = "vpuN"   # per-input-pixel VPU FMAs with host-folded weights
            weff = np.einsum("toh,tc->hoc", sel_np, dw_np).reshape(HW * OHW, mid)
            vecs.append((f"b{bi}_weff", weff))

        if exp > 0:
            mats.append((f"b{bi}_exp_w", npf(p["exp_w"])))
            vecs.append((f"b{bi}_exp_s", npf(p["exp_s"])))
            vecs.append((f"b{bi}_exp_b", npf(p["exp_b"])))
        vecs.append((f"b{bi}_dw_s", npf(p["dw_s"])))
        vecs.append((f"b{bi}_dw_b", npf(p["dw_b"])))
        se_c = 0
        if use_se:
            se_c = int(p["se_w1"].shape[1])
            mats.append((f"b{bi}_se_w1", npf(p["se_w1"])))
            mats.append((f"b{bi}_se_w2", npf(p["se_w2"])))
            vecs.append((f"b{bi}_se_b1", npf(p["se_b1"])))
            vecs.append((f"b{bi}_se_b2", npf(p["se_b2"])))
        mats.append((f"b{bi}_pw_w", npf(p["pw_w"])))
        vecs.append((f"b{bi}_pw_s", npf(p["pw_s"])))
        vecs.append((f"b{bi}_pw_b", npf(p["pw_b"])))

        blocks_meta.append(dict(
            kk=kk, HW=HW, OHW=OHW, mid=mid, out=out, act=act,
            has_exp=exp > 0, has_se=use_se, se_c=se_c,
            has_res=(stride == 1 and out == cin), dw_path=dw_path))
        cin, curH, curW = out, OH, OW

    mats.append(("head_w", npf(params["head_w"])))
    vecs.append(("head_b", npf(params["head_b"])))

    mat_offs, mat_buf = _pack_rows(mats, align=8)          # bf16 matmul operands
    vec_offs, vec_buf = _pack_rows(vecs, align=1)          # f32 BN/SE/weff vectors

    inputs = {name: jnp.asarray(a, jnp.bfloat16) for name, a in sel_inputs}
    inputs["mats"] = jnp.asarray(mat_buf, jnp.bfloat16)
    inputs["vecs"] = jnp.asarray(vec_buf, jnp.float32)

    plan = {"stem": stem, "blocks": blocks_meta, "mats": mat_offs,
            "vecs": vec_offs, "sel_names": [name for name, _ in sel_inputs]}
    return inputs, plan


# ------------------------------ forward wrapper ------------------------------

def make_forward(plan):
    sel_names = plan["sel_names"]

    def forward(inputs, x_nchw):
        # PyTorch NCHW -> NHWC (channels-last -> TPU lane dim)
        x = jnp.transpose(x_nchw, (0, 2, 3, 1)).astype(jnp.float32)
        N, H, W, C = x.shape
        HW = H * W
        x2 = x.reshape(N, HW, C)

        args = [x2] + [inputs[n] for n in sel_names] + [inputs["mats"], inputs["vecs"]]
        in_specs = [pl.BlockSpec((1, HW, C), lambda n: (n, 0, 0))]
        for a in args[1:]:                      # all remaining inputs are 2-D, full-spec
            in_specs.append(pl.BlockSpec(a.shape, lambda n: (0, 0)))

        out = pl.pallas_call(
            functools.partial(_mobnet_kernel, plan=plan),
            out_shape=jax.ShapeDtypeStruct((N, 1, HEAD_CH), jnp.float32),
            grid=(N,),
            in_specs=in_specs,
            out_specs=pl.BlockSpec((1, 1, HEAD_CH), lambda n: (n, 0, 0)),
            compiler_params=pltpu.CompilerParams(
                dimension_semantics=("parallel",)),
        )(*args)
        return out.reshape(N, HEAD_CH)

    return forward


if __name__ == "__main__":
    key = jax.random.PRNGKey(0)
    pkey, xkey = jax.random.split(key)
    params = init_params(pkey)
    x = jax.random.normal(xkey, (2, 3, 16, 16), jnp.float32)    # NCHW, like PyTorch
    inputs, plan = build_model(params, 16, 16)                  # one-time host packing
    fwd = jax.jit(make_forward(plan))
    out = jax.block_until_ready(fwd(inputs, x))
    assert out.shape == (2, HEAD_CH) and out.dtype == jnp.float32
    print("KERNEL_OK")
</pallas_src>

<mosaic_0001>
module attributes {stable_mosaic.version = 11 : i64} {
  func.func @_mobnet_kernel(%arg0: i32, %arg1: memref<1x256x3xf32, #tpu.memory_space<vmem>>, %arg2: memref<576x256xbf16, #tpu.memory_space<vmem>>, %arg3: memref<16x576xbf16, #tpu.memory_space<vmem>>, %arg4: memref<4x144xbf16, #tpu.memory_space<vmem>>, %arg5: memref<440x48xbf16, #tpu.memory_space<vmem>>, %arg6: memref<64x48xf32, #tpu.memory_space<vmem>>, %arg7: memref<1x1x32xf32, #tpu.memory_space<vmem>>) attributes {dimension_semantics = [#tpu.dimension_semantics<parallel>], iteration_bounds = array<i64: 2>, scalar_prefetch = 0 : i64, scratch_operands = 0 : i64, tpu.core_type = #tpu.core_type<tc>, window_params = [{transform_indices = @transform_0, window_bounds = array<i64: 1, 256, 3>}, {pipeline_mode = #tpu.pipeline_mode<synchronous>, transform_indices = @transform_1, window_bounds = array<i64: 576, 256>}, {pipeline_mode = #tpu.pipeline_mode<synchronous>, transform_indices = @transform_2, window_bounds = array<i64: 16, 576>}, {pipeline_mode = #tpu.pipeline_mode<synchronous>, transform_indices = @transform_3, window_bounds = array<i64: 4, 144>}, {pipeline_mode = #tpu.pipeline_mode<synchronous>, transform_indices = @transform_4, window_bounds = array<i64: 440, 48>}, {pipeline_mode = #tpu.pipeline_mode<synchronous>, transform_indices = @transform_5, window_bounds = array<i64: 64, 48>}, {transform_indices = @transform_6, window_bounds = array<i64: 1, 1, 32>}]} {
    %c0 = arith.constant 0 : index
    %c0_0 = arith.constant 0 : index
    %c0_1 = arith.constant 0 : index
    %0 = vector.load %arg1[%c0, %c0_0, %c0_1] : memref<1x256x3xf32, #tpu.memory_space<vmem>>, vector<1x256x3xf32>
    %1 = vector.shape_cast %0 : vector<1x256x3xf32> to vector<256x3xf32>
    %c0_2 = arith.constant 0 : index
    %c0_3 = arith.constant 0 : index
    %2 = vector.load %arg2[%c0_2, %c0_3] : memref<576x256xbf16, #tpu.memory_space<vmem>>, vector<576x256xbf16>
    %3 = arith.truncf %1 : vector<256x3xf32> to vector<256x3xbf16>
    %cst = arith.constant dense<0.000000e+00> : vector<576x3xf32>
    %4 = tpu.matmul %2, %3, %cst {dimension_numbers = #tpu.dot_dimension_numbers<[1], [0], [0], [1], [0, 0, 1, 1], [], []>} : vector<576x256xbf16>, vector<256x3xbf16>, vector<576x3xf32> -> vector<576x3xf32>
    %5 = vector.extract_strided_slice %4 {offsets = [0, 0], sizes = [64, 3], strides = [1, 1]} : vector<576x3xf32> to vector<64x3xf32>
    %6 = arith.truncf %5 : vector<64x3xf32> to vector<64x3xbf16>
    %c0_4 = arith.constant 0 : index
    %c0_5 = arith.constant 0 : index
    %7 = vector.load %arg5[%c0_4, %c0_5] : memref<440x48xbf16, #tpu.memory_space<vmem>>, vector<3x8xbf16>
    %cst_6 = arith.constant dense<0.000000e+00> : vector<64x8xf32>
    %8 = tpu.matmul %6, %7, %cst_6 {dimension_numbers = #tpu.dot_dimension_numbers<[1], [0], [0], [1], [0, 0, 1, 1], [], []>} : vector<64x3xbf16>, vector<3x8xbf16>, vector<64x8xf32> -> vector<64x8xf32>
    %9 = vector.extract_strided_slice %4 {offsets = [64, 0], sizes = [64, 3], strides = [1, 1]} : vector<576x3xf32> to vector<64x3xf32>
    %10 = arith.truncf %9 : vector<64x3xf32> to vector<64x3xbf16>
    %c8 = arith.constant 8 : index
    %c0_7 = arith.constant 0 : index
    %11 = vector.load %arg5[%c8, %c0_7] : memref<440x48xbf16, #tpu.memory_space<vmem>>, vector<3x8xbf16>
    %cst_8 = arith.constant dense<0.000000e+00> : vector<64x8xf32>
    %12 = tpu.matmul %10, %11, %cst_8 {dimension_numbers = #tpu.dot_dimension_numbers<[1], [0], [0], [1], [0, 0, 1, 1], [], []>} : vector<64x3xbf16>, vector<3x8xbf16>, vector<64x8xf32> -> vector<64x8xf32>
    %13 = arith.addf %8, %12 : vector<64x8xf32>
    %14 = vector.extract_strided_slice %4 {offsets = [128, 0], sizes = [64, 3], strides = [1, 1]} : vector<576x3xf32> to vector<64x3xf32>
    %15 = arith.truncf %14 : vector<64x3xf32> to vector<64x3xbf16>
    %c16 = arith.constant 16 : index
    %c0_9 = arith.constant 0 : index
    %16 = vector.load %arg5[%c16, %c0_9] : memref<440x48xbf16, #tpu.memory_space<vmem>>, vector<3x8xbf16>
    %cst_10 = arith.constant dense<0.000000e+00> : vector<64x8xf32>
    %17 = tpu.matmul %15, %16, %cst_10 {dimension_numbers = #tpu.dot_dimension_numbers<[1], [0], [0], [1], [0, 0, 1, 1], [], []>} : vector<64x3xbf16>, vector<3x8xbf16>, vector<64x8xf32> -> vector<64x8xf32>
    %18 = arith.addf %13, %17 : vector<64x8xf32>
    %19 = vector.extract_strided_slice %4 {offsets = [192, 0], sizes = [64, 3], strides = [1, 1]} : vector<576x3xf32> to vector<64x3xf32>
    %20 = arith.truncf %19 : vector<64x3xf32> to vector<64x3xbf16>
    %c24 = arith.constant 24 : index
    %c0_11 = arith.constant 0 : index
    %21 = vector.load %arg5[%c24, %c0_11] : memref<440x48xbf16, #tpu.memory_space<vmem>>, vector<3x8xbf16>
    %cst_12 = arith.constant dense<0.000000e+00> : vector<64x8xf32>
    %22 = tpu.matmul %20, %21, %cst_12 {dimension_numbers = #tpu.dot_dimension_numbers<[1], [0], [0], [1], [0, 0, 1, 1], [], []>} : vector<64x3xbf16>, vector<3x8xbf16>, vector<64x8xf32> -> vector<64x8xf32>
    %23 = arith.addf %18, %22 : vector<64x8xf32>
    %24 = vector.extract_strided_slice %4 {offsets = [256, 0], sizes = [64, 3], strides = [1, 1]} : vector<576x3xf32> to vector<64x3xf32>
    %25 = arith.truncf %24 : vector<64x3xf32> to vector<64x3xbf16>
    %c32 = arith.constant 32 : index
    %c0_13 = arith.constant 0 : index
    %26 = vector.load %arg5[%c32, %c0_13] : memref<440x48xbf16, #tpu.memory_space<vmem>>, vector<3x8xbf16>
    %cst_14 = arith.constant dense<0.000000e+00> : vector<64x8xf32>
    %27 = tpu.matmul %25, %26, %cst_14 {dimension_numbers = #tpu.dot_dimension_numbers<[1], [0], [0], [1], [0, 0, 1, 1], [], []>} : vector<64x3xbf16>, vector<3x8xbf16>, vector<64x8xf32> -> vector<64x8xf32>
    %28 = arith.addf %23, %27 : vector<64x8xf32>
    %29 = vector.extract_strided_slice %4 {offsets = [320, 0], sizes = [64, 3], strides = [1, 1]} : vector<576x3xf32> to vector<64x3xf32>
    %30 = arith.truncf %29 : vector<64x3xf32> to vector<64x3xbf16>
    %c40 = arith.constant 40 : index
    %c0_15 = arith.constant 0 : index
    %31 = vector.load %arg5[%c40, %c0_15] : memref<440x48xbf16, #tpu.memory_space<vmem>>, vector<3x8xbf16>
    %cst_16 = arith.constant dense<0.000000e+00> : vector<64x8xf32>
    %32 = tpu.matmul %30, %31, %cst_16 {dimension_numbers = #tpu.dot_dimension_numbers<[1], [0], [0], [1], [0, 0, 1, 1], [], []>} : vector<64x3xbf16>, vector<3x8xbf16>, vector<64x8xf32> -> vector<64x8xf32>
    %33 = arith.addf %28, %32 : vector<64x8xf32>
    %34 = vector.extract_strided_slice %4 {offsets = [384, 0], sizes = [64, 3], strides = [1, 1]} : vector<576x3xf32> to vector<64x3xf32>
    %35 = arith.truncf %34 : vector<64x3xf32> to vector<64x3xbf16>
    %c48 = arith.constant 48 : index
    %c0_17 = arith.constant 0 : index
    %36 = vector.load %arg5[%c48, %c0_17] : memref<440x48xbf16, #tpu.memory_space<vmem>>, vector<3x8xbf16>
    %cst_18 = arith.constant dense<0.000000e+00> : vector<64x8xf32>
    %37 = tpu.matmul %35, %36, %cst_18 {dimension_numbers = #tpu.dot_dimension_numbers<[1], [0], [0], [1], [0, 0, 1, 1], [], []>} : vector<64x3xbf16>, vector<3x8xbf16>, vector<64x8xf32> -> vector<64x8xf32>
    %38 = arith.addf %33, %37 : vector<64x8xf32>
    %39 = vector.extract_strided_slice %4 {offsets = [448, 0], sizes = [64, 3], strides = [1, 1]} : vector<576x3xf32> to vector<64x3xf32>
    %40 = arith.truncf %39 : vector<64x3xf32> to vector<64x3xbf16>
    %c56 = arith.constant 56 : index
    %c0_19 = arith.constant 0 : index
    %41 = vector.load %arg5[%c56, %c0_19] : memref<440x48xbf16, #tpu.memory_space<vmem>>, vector<3x8xbf16>
    %cst_20 = arith.constant dense<0.000000e+00> : vector<64x8xf32>
    %42 = tpu.matmul %40, %41, %cst_20 {dimension_numbers = #tpu.dot_dimension_numbers<[1], [0], [0], [1], [0, 0, 1, 1], [], []>} : vector<64x3xbf16>, vector<3x8xbf16>, vector<64x8xf32> -> vector<64x8xf32>
    %43 = arith.addf %38, %42 : vector<64x8xf32>
    %44 = vector.extract_strided_slice %4 {offsets = [512, 0], sizes = [64, 3], strides = [1, 1]} : vector<576x3xf32> to vector<64x3xf32>
    %45 = arith.truncf %44 : vector<64x3xf32> to vector<64x3xbf16>
    %c64 = arith.constant 64 : index
    %c0_21 = arith.constant 0 : index
    %46 = vector.load %arg5[%c64, %c0_21] : memref<440x48xbf16, #tpu.memory_space<vmem>>, vector<3x8xbf16>
    %cst_22 = arith.constant dense<0.000000e+00> : vector<64x8xf32>
    %47 = tpu.matmul %45, %46, %cst_22 {dimension_numbers = #tpu.dot_dimension_numbers<[1], [0], [0], [1], [0, 0, 1, 1], [], []>} : vector<64x3xbf16>, vector<3x8xbf16>, vector<64x8xf32> -> vector<64x8xf32>
    %48 = arith.addf %43, %47 : vector<64x8xf32>
    %c0_23 = arith.constant 0 : index
    %c0_24 = arith.constant 0 : index
    %49 = vector.load %arg6[%c0_23, %c0_24] : memref<64x48xf32, #tpu.memory_space<vmem>>, vector<1x8xf32>
    %50 = vector.broadcast %49 : vector<1x8xf32> to vector<64x8xf32>
    %51 = arith.mulf %48, %50 : vector<64x8xf32>
    %c1 = arith.constant 1 : index
    %c0_25 = arith.constant 0 : index
    %52 = vector.load %arg6[%c1, %c0_25] : memref<64x48xf32, #tpu.memory_space<vmem>>, vector<1x8xf32>
    %53 = vector.broadcast %52 : vector<1x8xf32> to vector<64x8xf32>
    %54 = arith.addf %51, %53 : vector<64x8xf32>
    %cst_26 = arith.constant 3.000000e+00 : f32
    %55 = vector.broadcast %cst_26 : f32 to vector<64x8xf32>
    %56 = arith.addf %54, %55 : vector<64x8xf32>
    %cst_27 = arith.constant 0.000000e+00 : f32
    %cst_28 = arith.constant 6.000000e+00 : f32
    %57 = vector.broadcast %cst_27 : f32 to vector<64x8xf32>
    %58 = arith.maximumf %57, %56 : vector<64x8xf32>
    %59 = vector.broadcast %cst_28 : f32 to vector<64x8xf32>
    %60 = arith.minimumf %59, %58 : vector<64x8xf32>
    %61 = arith.mulf %54, %60 : vector<64x8xf32>
    %cst_29 = arith.constant 0.166666672 : f32
    %62 = vector.broadcast %cst_29 : f32 to vector<64x8xf32>
    %63 = arith.mulf %61, %62 : vector<64x8xf32>
    %c72 = arith.constant 72 : index
    %c0_30 = arith.constant 0 : index
    %64 = vector.load %arg5[%c72, %c0_30] : memref<440x48xbf16, #tpu.memory_space<vmem>>, vector<9x8xbf16>
    %65 = arith.extf %64 : vector<9x8xbf16> to vector<9x8xf32>
    %66 = vector.shape_cast %65 : vector<9x8xf32> to vector<9x1x8xf32>
    %67 = vector.shape_cast %63 : vector<64x8xf32> to vector<1x64x8xf32>
    %68 = vector.broadcast %66 : vector<9x1x8xf32> to vector<9x64x8xf32>
    %69 = vector.broadcast %67 : vector<1x64x8xf32> to vector<9x64x8xf32>
    %70 = arith.mulf %68, %69 : vector<9x64x8xf32>
    %71 = vector.shape_cast %70 : vector<9x64x8xf32> to vector<576x8xf32>
    %72 = arith.truncf %71 : vector<576x8xf32> to vector<576x8xbf16>
    %c0_31 = arith.constant 0 : index
    %c0_32 = arith.constant 0 : index
    %73 = vector.load %arg3[%c0_31, %c0_32] : memref<16x576xbf16, #tpu.memory_space<vmem>>, vector<16x576xbf16>
    %cst_33 = arith.constant dense<0.000000e+00> : vector<16x8xf32>
    %74 = tpu.matmul %73, %72, %cst_33 {dimension_numbers = #tpu.dot_dimension_numbers<[1], [0], [0], [1], [0, 0, 1, 1], [], []>} : vector<16x576xbf16>, vector<576x8xbf16>, vector<16x8xf32> -> vector<16x8xf32>
    %c2 = arith.constant 2 : index
    %c0_34 = arith.constant 0 : index
    %75 = vector.load %arg6[%c2, %c0_34] : memref<64x48xf32, #tpu.memory_space<vmem>>, vector<1x8xf32>
    %76 = vector.broadcast %75 : vector<1x8xf32> to vector<16x8xf32>
    %77 = arith.mulf %74, %76 : vector<16x8xf32>
    %c3 = arith.constant 3 : index
    %c0_35 = arith.constant 0 : index
    %78 = vector.load %arg6[%c3, %c0_35] : memref<64x48xf32, #tpu.memory_space<vmem>>, vector<1x8xf32>
    %79 = vector.broadcast %78 : vector<1x8xf32> to vector<16x8xf32>
    %80 = arith.addf %77, %79 : vector<16x8xf32>
    %cst_36 = arith.constant 0.000000e+00 : f32
    %81 = vector.broadcast %cst_36 : f32 to vector<16x8xf32>
    %82 = arith.maximumf %80, %81 : vector<16x8xf32>
    %cst_37 = arith.constant dense<0.000000e+00> : vector<8xf32>
    %83 = vector.multi_reduction <add>, %82, %cst_37 [0] : vector<16x8xf32> to vector<8xf32>
    %84 = vector.shape_cast %83 : vector<8xf32> to vector<1x8xf32>
    %cst_38 = arith.constant 1.600000e+01 : f32
    %85 = vector.broadcast %cst_38 : f32 to vector<1x8xf32>
    %86 = arith.divf %84, %85 : vector<1x8xf32>
    %87 = arith.truncf %86 : vector<1x8xf32> to vector<1x8xbf16>
    %c88 = arith.constant 88 : index
    %c0_39 = arith.constant 0 : index
    %88 = vector.load %arg5[%c88, %c0_39] : memref<440x48xbf16, #tpu.memory_space<vmem>>, vector<8x4xbf16>
    %cst_40 = arith.constant dense<0.000000e+00> : vector<1x4xf32>
    %89 = tpu.matmul %87, %88, %cst_40 {dimension_numbers = #tpu.dot_dimension_numbers<[1], [0], [0], [1], [0, 0, 1, 1], [], []>} : vector<1x8xbf16>, vector<8x4xbf16>, vector<1x4xf32> -> vector<1x4xf32>
    %c4 = arith.constant 4 : index
    %c0_41 = arith.constant 0 : index
    %90 = vector.load %arg6[%c4, %c0_41] : memref<64x48xf32, #tpu.memory_space<vmem>>, vector<1x4xf32>
    %91 = arith.addf %89, %90 : vector<1x4xf32>
    %cst_42 = arith.constant 0.000000e+00 : f32
    %92 = vector.broadcast %cst_42 : f32 to vector<1x4xf32>
    %93 = arith.maximumf %91, %92 : vector<1x4xf32>
    %94 = arith.truncf %93 : vector<1x4xf32> to vector<1x4xbf16>
    %c96 = arith.constant 96 : index
    %c0_43 = arith.constant 0 : index
    %95 = vector.load %arg5[%c96, %c0_43] : memref<440x48xbf16, #tpu.memory_space<vmem>>, vector<4x8xbf16>
    %cst_44 = arith.constant dense<0.000000e+00> : vector<1x8xf32>
    %96 = tpu.matmul %94, %95, %cst_44 {dimension_numbers = #tpu.dot_dimension_numbers<[1], [0], [0], [1], [0, 0, 1, 1], [], []>} : vector<1x4xbf16>, vector<4x8xbf16>, vector<1x8xf32> -> vector<1x8xf32>
    %c5 = arith.constant 5 : index
    %c0_45 = arith.constant 0 : index
    %97 = vector.load %arg6[%c5, %c0_45] : memref<64x48xf32, #tpu.memory_space<vmem>>, vector<1x8xf32>
    %98 = arith.addf %96, %97 : vector<1x8xf32>
    %cst_46 = arith.constant 3.000000e+00 : f32
    %99 = vector.broadcast %cst_46 : f32 to vector<1x8xf32>
    %100 = arith.addf %98, %99 : vector<1x8xf32>
    %cst_47 = arith.constant 0.000000e+00 : f32
    %cst_48 = arith.constant 6.000000e+00 : f32
    %101 = vector.broadcast %cst_47 : f32 to vector<1x8xf32>
    %102 = arith.maximumf %101, %100 : vector<1x8xf32>
    %103 = vector.broadcast %cst_48 : f32 to vector<1x8xf32>
    %104 = arith.minimumf %103, %102 : vector<1x8xf32>
    %cst_49 = arith.constant 0.166666672 : f32
    %105 = vector.broadcast %cst_49 : f32 to vector<1x8xf32>
    %106 = arith.mulf %104, %105 : vector<1x8xf32>
    %107 = vector.broadcast %106 : vector<1x8xf32> to vector<16x8xf32>
    %108 = arith.mulf %82, %107 : vector<16x8xf32>
    %109 = arith.truncf %108 : vector<16x8xf32> to vector<16x8xbf16>
    %c104 = arith.constant 104 : index
    %c0_50 = arith.constant 0 : index
    %110 = vector.load %arg5[%c104, %c0_50] : memref<440x48xbf16, #tpu.memory_space<vmem>>, vector<8x8xbf16>
    %cst_51 = arith.constant dense<0.000000e+00> : vector<16x8xf32>
    %111 = tpu.matmul %109, %110, %cst_51 {dimension_numbers = #tpu.dot_dimension_numbers<[1], [0], [0], [1], [0, 0, 1, 1], [], []>} : vector<16x8xbf16>, vector<8x8xbf16>, vector<16x8xf32> -> vector<16x8xf32>
    %c6 = arith.constant 6 : index
    %c0_52 = arith.constant 0 : index
    %112 = vector.load %arg6[%c6, %c0_52] : memref<64x48xf32, #tpu.memory_space<vmem>>, vector<1x8xf32>
    %113 = vector.broadcast %112 : vector<1x8xf32> to vector<16x8xf32>
    %114 = arith.mulf %111, %113 : vector<16x8xf32>
    %c7 = arith.constant 7 : index
    %c0_53 = arith.constant 0 : index
    %115 = vector.load %arg6[%c7, %c0_53] : memref<64x48xf32, #tpu.memory_space<vmem>>, vector<1x8xf32>
    %116 = vector.broadcast %115 : vector<1x8xf32> to vector<16x8xf32>
    %117 = arith.addf %114, %116 : vector<16x8xf32>
    %118 = arith.truncf %117 : vector<16x8xf32> to vector<16x8xbf16>
    %c128 = arith.constant 128 : index
    %c0_54 = arith.constant 0 : index
    %119 = vector.load %arg5[%c128, %c0_54] : memref<440x48xbf16, #tpu.memory_space<vmem>>, vector<8x16xbf16>
    %cst_55 = arith.constant dense<0.000000e+00> : vector<16x16xf32>
    %120 = tpu.matmul %118, %119, %cst_55 {dimension_numbers = #tpu.dot_dimension_numbers<[1], [0], [0], [1], [0, 0, 1, 1], [], []>} : vector<16x8xbf16>, vector<8x16xbf16>, vector<16x16xf32> -> vector<16x16xf32>
    %c8_56 = arith.constant 8 : index
    %c0_57 = arith.constant 0 : index
    %121 = vector.load %arg6[%c8_56, %c0_57] : memref<64x48xf32, #tpu.memory_space<vmem>>, vector<1x16xf32>
    %122 = vector.broadcast %121 : vector<1x16xf32> to vector<16x16xf32>
    %123 = arith.mulf %120, %122 : vector<16x16xf32>
    %c9 = arith.constant 9 : index
    %c0_58 = arith.constant 0 : index
    %124 = vector.load %arg6[%c9, %c0_58] : memref<64x48xf32, #tpu.memory_space<vmem>>, vector<1x16xf32>
    %125 = vector.broadcast %124 : vector<1x16xf32> to vector<16x16xf32>
    %126 = arith.addf %123, %125 : vector<16x16xf32>
    %cst_59 = arith.constant 0.000000e+00 : f32
    %127 = vector.broadcast %cst_59 : f32 to vector<16x16xf32>
    %128 = arith.maximumf %126, %127 : vector<16x16xf32>
    %c112 = arith.constant 112 : index
    %c0_60 = arith.constant 0 : index
    %129 = vector.load %arg5[%c112, %c0_60] : memref<440x48xbf16, #tpu.memory_space<vmem>>, vector<9x16xbf16>
    %130 = arith.extf %129 : vector<9x16xbf16> to vector<9x16xf32>
    %131 = vector.shape_cast %130 : vector<9x16xf32> to vector<9x1x16xf32>
    %132 = vector.shape_cast %128 : vector<16x16xf32> to vector<1x16x16xf32>
    %133 = vector.broadcast %131 : vector<9x1x16xf32> to vector<9x16x16xf32>
    %134 = vector.broadcast %132 : vector<1x16x16xf32> to vector<9x16x16xf32>
    %135 = arith.mulf %133, %134 : vector<9x16x16xf32>
    %136 = vector.shape_cast %135 : vector<9x16x16xf32> to vector<144x16xf32>
    %137 = arith.truncf %136 : vector<144x16xf32> to vector<144x16xbf16>
    %c0_61 = arith.constant 0 : index
    %c0_62 = arith.constant 0 : index
    %138 = vector.load %arg4[%c0_61, %c0_62] : memref<4x144xbf16, #tpu.memory_space<vmem>>, vector<4x144xbf16>
    %cst_63 = arith.constant dense<0.000000e+00> : vector<4x16xf32>
    %139 = tpu.matmul %138, %137, %cst_63 {dimension_numbers = #tpu.dot_dimension_numbers<[1], [0], [0], [1], [0, 0, 1, 1], [], []>} : vector<4x144xbf16>, vector<144x16xbf16>, vector<4x16xf32> -> vector<4x16xf32>
    %c10 = arith.constant 10 : index
    %c0_64 = arith.constant 0 : index
    %140 = vector.load %arg6[%c10, %c0_64] : memref<64x48xf32, #tpu.memory_space<vmem>>, vector<1x16xf32>
    %141 = vector.broadcast %140 : vector<1x16xf32> to vector<4x16xf32>
    %142 = arith.mulf %139, %141 : vector<4x16xf32>
    %c11 = arith.constant 11 : index
    %c0_65 = arith.constant 0 : index
    %143 = vector.load %arg6[%c11, %c0_65] : memref<64x48xf32, #tpu.memory_space<vmem>>, vector<1x16xf32>
    %144 = vector.broadcast %143 : vector<1x16xf32> to vector<4x16xf32>
    %145 = arith.addf %142, %144 : vector<4x16xf32>
    %cst_66 = arith.constant 0.000000e+00 : f32
    %146 = vector.broadcast %cst_66 : f32 to vector<4x16xf32>
    %147 = arith.maximumf %145, %146 : vector<4x16xf32>
    %148 = arith.truncf %147 : vector<4x16xf32> to vector<4x16xbf16>
    %c136 = arith.constant 136 : index
    %c0_67 = arith.constant 0 : index
    %149 = vector.load %arg5[%c136, %c0_67] : memref<440x48xbf16, #tpu.memory_space<vmem>>, vector<16x16xbf16>
    %cst_68 = arith.constant dense<0.000000e+00> : vector<4x16xf32>
    %150 = tpu.matmul %148, %149, %cst_68 {dimension_numbers = #tpu.dot_dimension_numbers<[1], [0], [0], [1], [0, 0, 1, 1], [], []>} : vector<4x16xbf16>, vector<16x16xbf16>, vector<4x16xf32> -> vector<4x16xf32>
    %c12 = arith.constant 12 : index
    %c0_69 = arith.constant 0 : index
    %151 = vector.load %arg6[%c12, %c0_69] : memref<64x48xf32, #tpu.memory_space<vmem>>, vector<1x16xf32>
    %152 = vector.broadcast %151 : vector<1x16xf32> to vector<4x16xf32>
    %153 = arith.mulf %150, %152 : vector<4x16xf32>
    %c13 = arith.constant 13 : index
    %c0_70 = arith.constant 0 : index
    %154 = vector.load %arg6[%c13, %c0_70] : memref<64x48xf32, #tpu.memory_space<vmem>>, vector<1x16xf32>
    %155 = vector.broadcast %154 : vector<1x16xf32> to vector<4x16xf32>
    %156 = arith.addf %153, %155 : vector<4x16xf32>
    %157 = arith.truncf %156 : vector<4x16xf32> to vector<4x16xbf16>
    %c152 = arith.constant 152 : index
    %c0_71 = arith.constant 0 : index
    %158 = vector.load %arg5[%c152, %c0_71] : memref<440x48xbf16, #tpu.memory_space<vmem>>, vector<16x24xbf16>
    %cst_72 = arith.constant dense<0.000000e+00> : vector<4x24xf32>
    %159 = tpu.matmul %157, %158, %cst_72 {dimension_numbers = #tpu.dot_dimension_numbers<[1], [0], [0], [1], [0, 0, 1, 1], [], []>} : vector<4x16xbf16>, vector<16x24xbf16>, vector<4x24xf32> -> vector<4x24xf32>
    %c30 = arith.constant 30 : index
    %c0_73 = arith.constant 0 : index
    %160 = vector.load %arg6[%c30, %c0_73] : memref<64x48xf32, #tpu.memory_space<vmem>>, vector<1x24xf32>
    %161 = vector.broadcast %160 : vector<1x24xf32> to vector<4x24xf32>
    %162 = arith.mulf %159, %161 : vector<4x24xf32>
    %c31 = arith.constant 31 : index
    %c0_74 = arith.constant 0 : index
    %163 = vector.load %arg6[%c31, %c0_74] : memref<64x48xf32, #tpu.memory_space<vmem>>, vector<1x24xf32>
    %164 = vector.broadcast %163 : vector<1x24xf32> to vector<4x24xf32>
    %165 = arith.addf %162, %164 : vector<4x24xf32>
    %cst_75 = arith.constant 0.000000e+00 : f32
    %166 = vector.broadcast %cst_75 : f32 to vector<4x24xf32>
    %167 = arith.maximumf %165, %166 : vector<4x24xf32>
    %c14 = arith.constant 14 : index
    %c0_76 = arith.constant 0 : index
    %168 = vector.load %arg6[%c14, %c0_76] : memref<64x48xf32, #tpu.memory_space<vmem>>, vector<16x24xf32>
    %169 = vector.extract_strided_slice %167 {offsets = [0, 0], sizes = [1, 24], strides = [1, 1]} : vector<4x24xf32> to vector<1x24xf32>
    %170 = vector.extract_strided_slice %168 {offsets = [0, 0], sizes = [4, 24], strides = [1, 1]} : vector<16x24xf32> to vector<4x24xf32>
    %171 = vector.broadcast %169 : vector<1x24xf32> to vector<4x24xf32>
    %172 = arith.mulf %171, %170 : vector<4x24xf32>
    %173 = vector.extract_strided_slice %167 {offsets = [1, 0], sizes = [1, 24], strides = [1, 1]} : vector<4x24xf32> to vector<1x24xf32>
    %174 = vector.extract_strided_slice %168 {offsets = [4, 0], sizes = [4, 24], strides = [1, 1]} : vector<16x24xf32> to vector<4x24xf32>
    %175 = vector.broadcast %173 : vector<1x24xf32> to vector<4x24xf32>
    %176 = arith.mulf %175, %174 : vector<4x24xf32>
    %177 = arith.addf %172, %176 : vector<4x24xf32>
    %178 = vector.extract_strided_slice %167 {offsets = [2, 0], sizes = [1, 24], strides = [1, 1]} : vector<4x24xf32> to vector<1x24xf32>
    %179 = vector.extract_strided_slice %168 {offsets = [8, 0], sizes = [4, 24], strides = [1, 1]} : vector<16x24xf32> to vector<4x24xf32>
    %180 = vector.broadcast %178 : vector<1x24xf32> to vector<4x24xf32>
    %181 = arith.mulf %180, %179 : vector<4x24xf32>
    %182 = arith.addf %177, %181 : vector<4x24xf32>
    %183 = vector.extract_strided_slice %167 {offsets = [3, 0], sizes = [1, 24], strides = [1, 1]} : vector<4x24xf32> to vector<1x24xf32>
    %184 = vector.extract_strided_slice %168 {offsets = [12, 0], sizes = [4, 24], strides = [1, 1]} : vector<16x24xf32> to vector<4x24xf32>
    %185 = vector.broadcast %183 : vector<1x24xf32> to vector<4x24xf32>
    %186 = arith.mulf %185, %184 : vector<4x24xf32>
    %187 = arith.addf %182, %186 : vector<4x24xf32>
    %c32_77 = arith.constant 32 : index
    %c0_78 = arith.constant 0 : index
    %188 = vector.load %arg6[%c32_77, %c0_78] : memref<64x48xf32, #tpu.memory_space<vmem>>, vector<1x24xf32>
    %189 = vector.broadcast %188 : vector<1x24xf32> to vector<4x24xf32>
    %190 = arith.mulf %187, %189 : vector<4x24xf32>
    %c33 = arith.constant 33 : index
    %c0_79 = arith.constant 0 : index
    %191 = vector.load %arg6[%c33, %c0_79] : memref<64x48xf32, #tpu.memory_space<vmem>>, vector<1x24xf32>
    %192 = vector.broadcast %191 : vector<1x24xf32> to vector<4x24xf32>
    %193 = arith.addf %190, %192 : vector<4x24xf32>
    %cst_80 = arith.constant 0.000000e+00 : f32
    %194 = vector.broadcast %cst_80 : f32 to vector<4x24xf32>
    %195 = arith.maximumf %193, %194 : vector<4x24xf32>
    %196 = arith.truncf %195 : vector<4x24xf32> to vector<4x24xbf16>
    %c168 = arith.constant 168 : index
    %c0_81 = arith.constant 0 : index
    %197 = vector.load %arg5[%c168, %c0_81] : memref<440x48xbf16, #tpu.memory_space<vmem>>, vector<24x16xbf16>
    %cst_82 = arith.constant dense<0.000000e+00> : vector<4x16xf32>
    %198 = tpu.matmul %196, %197, %cst_82 {dimension_numbers = #tpu.dot_dimension_numbers<[1], [0], [0], [1], [0, 0, 1, 1], [], []>} : vector<4x24xbf16>, vector<24x16xbf16>, vector<4x16xf32> -> vector<4x16xf32>
    %c34 = arith.constant 34 : index
    %c0_83 = arith.constant 0 : index
    %199 = vector.load %arg6[%c34, %c0_83] : memref<64x48xf32, #tpu.memory_space<vmem>>, vector<1x16xf32>
    %200 = vector.broadcast %199 : vector<1x16xf32> to vector<4x16xf32>
    %201 = arith.mulf %198, %200 : vector<4x16xf32>
    %c35 = arith.constant 35 : index
    %c0_84 = arith.constant 0 : index
    %202 = vector.load %arg6[%c35, %c0_84] : memref<64x48xf32, #tpu.memory_space<vmem>>, vector<1x16xf32>
    %203 = vector.broadcast %202 : vector<1x16xf32> to vector<4x16xf32>
    %204 = arith.addf %201, %203 : vector<4x16xf32>
    %205 = arith.addf %204, %156 : vector<4x16xf32>
    %206 = arith.truncf %205 : vector<4x16xf32> to vector<4x16xbf16>
    %c192 = arith.constant 192 : index
    %c0_85 = arith.constant 0 : index
    %207 = vector.load %arg5[%c192, %c0_85] : memref<440x48xbf16, #tpu.memory_space<vmem>>, vector<16x32xbf16>
    %cst_86 = arith.constant dense<0.000000e+00> : vector<4x32xf32>
    %208 = tpu.matmul %206, %207, %cst_86 {dimension_numbers = #tpu.dot_dimension_numbers<[1], [0], [0], [1], [0, 0, 1, 1], [], []>} : vector<4x16xbf16>, vector<16x32xbf16>, vector<4x32xf32> -> vector<4x32xf32>
    %c40_87 = arith.constant 40 : index
    %c0_88 = arith.constant 0 : index
    %209 = vector.load %arg6[%c40_87, %c0_88] : memref<64x48xf32, #tpu.memory_space<vmem>>, vector<1x32xf32>
    %210 = vector.broadcast %209 : vector<1x32xf32> to vector<4x32xf32>
    %211 = arith.mulf %208, %210 : vector<4x32xf32>
    %c41 = arith.constant 41 : index
    %c0_89 = arith.constant 0 : index
    %212 = vector.load %arg6[%c41, %c0_89] : memref<64x48xf32, #tpu.memory_space<vmem>>, vector<1x32xf32>
    %213 = vector.broadcast %212 : vector<1x32xf32> to vector<4x32xf32>
    %214 = arith.addf %211, %213 : vector<4x32xf32>
    %cst_90 = arith.constant 3.000000e+00 : f32
    %215 = vector.broadcast %cst_90 : f32 to vector<4x32xf32>
    %216 = arith.addf %214, %215 : vector<4x32xf32>
    %cst_91 = arith.constant 0.000000e+00 : f32
    %cst_92 = arith.constant 6.000000e+00 : f32
    %217 = vector.broadcast %cst_91 : f32 to vector<4x32xf32>
    %218 = arith.maximumf %217, %216 : vector<4x32xf32>
    %219 = vector.broadcast %cst_92 : f32 to vector<4x32xf32>
    %220 = arith.minimumf %219, %218 : vector<4x32xf32>
    %221 = arith.mulf %214, %220 : vector<4x32xf32>
    %cst_93 = arith.constant 0.166666672 : f32
    %222 = vector.broadcast %cst_93 : f32 to vector<4x32xf32>
    %223 = arith.mulf %221, %222 : vector<4x32xf32>
    %c36 = arith.constant 36 : index
    %c0_94 = arith.constant 0 : index
    %224 = vector.load %arg6[%c36, %c0_94] : memref<64x48xf32, #tpu.memory_space<vmem>>, vector<4x32xf32>
    %225 = arith.mulf %223, %224 : vector<4x32xf32>
    %cst_95 = arith.constant dense<0.000000e+00> : vector<32xf32>
    %226 = vector.multi_reduction <add>, %225, %cst_95 [0] : vector<4x32xf32> to vector<32xf32>
    %227 = vector.shape_cast %226 : vector<32xf32> to vector<1x32xf32>
    %c42 = arith.constant 42 : index
    %c0_96 = arith.constant 0 : index
    %228 = vector.load %arg6[%c42, %c0_96] : memref<64x48xf32, #tpu.memory_space<vmem>>, vector<1x32xf32>
    %229 = arith.mulf %227, %228 : vector<1x32xf32>
    %c43 = arith.constant 43 : index
    %c0_97 = arith.constant 0 : index
    %230 = vector.load %arg6[%c43, %c0_97] : memref<64x48xf32, #tpu.memory_space<vmem>>, vector<1x32xf32>
    %231 = arith.addf %229, %230 : vector<1x32xf32>
    %cst_98 = arith.constant 3.000000e+00 : f32
    %232 = vector.broadcast %cst_98 : f32 to vector<1x32xf32>
    %233 = arith.addf %231, %232 : vector<1x32xf32>
    %cst_99 = arith.constant 0.000000e+00 : f32
    %cst_100 = arith.constant 6.000000e+00 : f32
    %234 = vector.broadcast %cst_99 : f32 to vector<1x32xf32>
    %235 = arith.maximumf %234, %233 : vector<1x32xf32>
    %236 = vector.broadcast %cst_100 : f32 to vector<1x32xf32>
    %237 = arith.minimumf %236, %235 : vector<1x32xf32>
    %238 = arith.mulf %231, %237 : vector<1x32xf32>
    %cst_101 = arith.constant 0.166666672 : f32
    %239 = vector.broadcast %cst_101 : f32 to vector<1x32xf32>
    %240 = arith.mulf %238, %239 : vector<1x32xf32>
    %cst_102 = arith.constant dense<0.000000e+00> : vector<32xf32>
    %241 = vector.multi_reduction <add>, %240, %cst_102 [0] : vector<1x32xf32> to vector<32xf32>
    %242 = vector.shape_cast %241 : vector<32xf32> to vector<1x32xf32>
    %cst_103 = arith.constant 1.000000e+00 : f32
    %243 = vector.broadcast %cst_103 : f32 to vector<1x32xf32>
    %244 = arith.divf %242, %243 : vector<1x32xf32>
    %245 = arith.truncf %244 : vector<1x32xf32> to vector<1x32xbf16>
    %c208 = arith.constant 208 : index
    %c0_104 = arith.constant 0 : index
    %246 = vector.load %arg5[%c208, %c0_104] : memref<440x48xbf16, #tpu.memory_space<vmem>>, vector<32x8xbf16>
    %cst_105 = arith.constant dense<0.000000e+00> : vector<1x8xf32>
    %247 = tpu.matmul %245, %246, %cst_105 {dimension_numbers = #tpu.dot_dimension_numbers<[1], [0], [0], [1], [0, 0, 1, 1], [], []>} : vector<1x32xbf16>, vector<32x8xbf16>, vector<1x8xf32> -> vector<1x8xf32>
    %c44 = arith.constant 44 : index
    %c0_106 = arith.constant 0 : index
    %248 = vector.load %arg6[%c44, %c0_106] : memref<64x48xf32, #tpu.memory_space<vmem>>, vector<1x8xf32>
    %249 = arith.addf %247, %248 : vector<1x8xf32>
    %cst_107 = arith.constant 0.000000e+00 : f32
    %250 = vector.broadcast %cst_107 : f32 to vector<1x8xf32>
    %251 = arith.maximumf %249, %250 : vector<1x8xf32>
    %252 = arith.truncf %251 : vector<1x8xf32> to vector<1x8xbf16>
    %c240 = arith.constant 240 : index
    %c0_108 = arith.constant 0 : index
    %253 = vector.load %arg5[%c240, %c0_108] : memref<440x48xbf16, #tpu.memory_space<vmem>>, vector<8x32xbf16>
    %cst_109 = arith.constant dense<0.000000e+00> : vector<1x32xf32>
    %254 = tpu.matmul %252, %253, %cst_109 {dimension_numbers = #tpu.dot_dimension_numbers<[1], [0], [0], [1], [0, 0, 1, 1], [], []>} : vector<1x8xbf16>, vector<8x32xbf16>, vector<1x32xf32> -> vector<1x32xf32>
    %c45 = arith.constant 45 : index
    %c0_110 = arith.constant 0 : index
    %255 = vector.load %arg6[%c45, %c0_110] : memref<64x48xf32, #tpu.memory_space<vmem>>, vector<1x32xf32>
    %256 = arith.addf %254, %255 : vector<1x32xf32>
    %cst_111 = arith.constant 3.000000e+00 : f32
    %257 = vector.broadcast %cst_111 : f32 to vector<1x32xf32>
    %258 = arith.addf %256, %257 : vector<1x32xf32>
    %cst_112 = arith.constant 0.000000e+00 : f32
    %cst_113 = arith.constant 6.000000e+00 : f32
    %259 = vector.broadcast %cst_112 : f32 to vector<1x32xf32>
    %260 = arith.maximumf %259, %258 : vector<1x32xf32>
    %261 = vector.broadcast %cst_113 : f32 to vector<1x32xf32>
    %262 = arith.minimumf %261, %260 : vector<1x32xf32>
    %cst_114 = arith.constant 0.166666672 : f32
    %263 = vector.broadcast %cst_114 : f32 to vector<1x32xf32>
    %264 = arith.mulf %262, %263 : vector<1x32xf32>
    %265 = arith.mulf %240, %264 : vector<1x32xf32>
    %266 = arith.truncf %265 : vector<1x32xf32> to vector<1x32xbf16>
    %c248 = arith.constant 248 : index
    %c0_115 = arith.constant 0 : index
    %267 = vector.load %arg5[%c248, %c0_115] : memref<440x48xbf16, #tpu.memory_space<vmem>>, vector<32x24xbf16>
    %cst_116 = arith.constant dense<0.000000e+00> : vector<1x24xf32>
    %268 = tpu.matmul %266, %267, %cst_116 {dimension_numbers = #tpu.dot_dimension_numbers<[1], [0], [0], [1], [0, 0, 1, 1], [], []>} : vector<1x32xbf16>, vector<32x24xbf16>, vector<1x24xf32> -> vector<1x24xf32>
    %c46 = arith.constant 46 : index
    %c0_117 = arith.constant 0 : index
    %269 = vector.load %arg6[%c46, %c0_117] : memref<64x48xf32, #tpu.memory_space<vmem>>, vector<1x24xf32>
    %270 = arith.mulf %268, %269 : vector<1x24xf32>
    %c47 = arith.constant 47 : index
    %c0_118 = arith.constant 0 : index
    %271 = vector.load %arg6[%c47, %c0_118] : memref<64x48xf32, #tpu.memory_space<vmem>>, vector<1x24xf32>
    %272 = arith.addf %270, %271 : vector<1x24xf32>
    %273 = arith.truncf %272 : vector<1x24xf32> to vector<1x24xbf16>
    %c280 = arith.constant 280 : index
    %c0_119 = arith.constant 0 : index
    %274 = vector.load %arg5[%c280, %c0_119] : memref<440x48xbf16, #tpu.memory_space<vmem>>, vector<24x48xbf16>
    %cst_120 = arith.constant dense<0.000000e+00> : vector<1x48xf32>
    %275 = tpu.matmul %273, %274, %cst_120 {dimension_numbers = #tpu.dot_dimension_numbers<[1], [0], [0], [1], [0, 0, 1, 1], [], []>} : vector<1x24xbf16>, vector<24x48xbf16>, vector<1x48xf32> -> vector<1x48xf32>
    %c49 = arith.constant 49 : index
    %c0_121 = arith.constant 0 : index
    %276 = vector.load %arg6[%c49, %c0_121] : memref<64x48xf32, #tpu.memory_space<vmem>>, vector<1x48xf32>
    %277 = arith.mulf %275, %276 : vector<1x48xf32>
    %c50 = arith.constant 50 : index
    %c0_122 = arith.constant 0 : index
    %278 = vector.load %arg6[%c50, %c0_122] : memref<64x48xf32, #tpu.memory_space<vmem>>, vector<1x48xf32>
    %279 = arith.addf %277, %278 : vector<1x48xf32>
    %cst_123 = arith.constant 3.000000e+00 : f32
    %280 = vector.broadcast %cst_123 : f32 to vector<1x48xf32>
    %281 = arith.addf %279, %280 : vector<1x48xf32>
    %cst_124 = arith.constant 0.000000e+00 : f32
    %cst_125 = arith.constant 6.000000e+00 : f32
    %282 = vector.broadcast %cst_124 : f32 to vector<1x48xf32>
    %283 = arith.maximumf %282, %281 : vector<1x48xf32>
    %284 = vector.broadcast %cst_125 : f32 to vector<1x48xf32>
    %285 = arith.minimumf %284, %283 : vector<1x48xf32>
    %286 = arith.mulf %279, %285 : vector<1x48xf32>
    %cst_126 = arith.constant 0.166666672 : f32
    %287 = vector.broadcast %cst_126 : f32 to vector<1x48xf32>
    %288 = arith.mulf %286, %287 : vector<1x48xf32>
    %c48_127 = arith.constant 48 : index
    %c0_128 = arith.constant 0 : index
    %289 = vector.load %arg6[%c48_127, %c0_128] : memref<64x48xf32, #tpu.memory_space<vmem>>, vector<1x48xf32>
    %290 = arith.mulf %288, %289 : vector<1x48xf32>
    %cst_129 = arith.constant dense<0.000000e+00> : vector<48xf32>
    %291 = vector.multi_reduction <add>, %290, %cst_129 [0] : vector<1x48xf32> to vector<48xf32>
    %292 = vector.shape_cast %291 : vector<48xf32> to vector<1x48xf32>
    %c51 = arith.constant 51 : index
    %c0_130 = arith.constant 0 : index
    %293 = vector.load %arg6[%c51, %c0_130] : memref<64x48xf32, #tpu.memory_space<vmem>>, vector<1x48xf32>
    %294 = arith.mulf %292, %293 : vector<1x48xf32>
    %c52 = arith.constant 52 : index
    %c0_131 = arith.constant 0 : index
    %295 = vector.load %arg6[%c52, %c0_131] : memref<64x48xf32, #tpu.memory_space<vmem>>, vector<1x48xf32>
    %296 = arith.addf %294, %295 : vector<1x48xf32>
    %cst_132 = arith.constant 3.000000e+00 : f32
    %297 = vector.broadcast %cst_132 : f32 to vector<1x48xf32>
    %298 = arith.addf %296, %297 : vector<1x48xf32>
    %cst_133 = arith.constant 0.000000e+00 : f32
    %cst_134 = arith.constant 6.000000e+00 : f32
    %299 = vector.broadcast %cst_133 : f32 to vector<1x48xf32>
    %300 = arith.maximumf %299, %298 : vector<1x48xf32>
    %301 = vector.broadcast %cst_134 : f32 to vector<1x48xf32>
    %302 = arith.minimumf %301, %300 : vector<1x48xf32>
    %303 = arith.mulf %296, %302 : vector<1x48xf32>
    %cst_135 = arith.constant 0.166666672 : f32
    %304 = vector.broadcast %cst_135 : f32 to vector<1x48xf32>
    %305 = arith.mulf %303, %304 : vector<1x48xf32>
    %cst_136 = arith.constant dense<0.000000e+00> : vector<48xf32>
    %306 = vector.multi_reduction <add>, %305, %cst_136 [0] : vector<1x48xf32> to vector<48xf32>
    %307 = vector.shape_cast %306 : vector<48xf32> to vector<1x48xf32>
    %cst_137 = arith.constant 1.000000e+00 : f32
    %308 = vector.broadcast %cst_137 : f32 to vector<1x48xf32>
    %309 = arith.divf %307, %308 : vector<1x48xf32>
    %310 = arith.truncf %309 : vector<1x48xf32> to vector<1x48xbf16>
    %c304 = arith.constant 304 : index
    %c0_138 = arith.constant 0 : index
    %311 = vector.load %arg5[%c304, %c0_138] : memref<440x48xbf16, #tpu.memory_space<vmem>>, vector<48x12xbf16>
    %cst_139 = arith.constant dense<0.000000e+00> : vector<1x12xf32>
    %312 = tpu.matmul %310, %311, %cst_139 {dimension_numbers = #tpu.dot_dimension_numbers<[1], [0], [0], [1], [0, 0, 1, 1], [], []>} : vector<1x48xbf16>, vector<48x12xbf16>, vector<1x12xf32> -> vector<1x12xf32>
    %c53 = arith.constant 53 : index
    %c0_140 = arith.constant 0 : index
    %313 = vector.load %arg6[%c53, %c0_140] : memref<64x48xf32, #tpu.memory_space<vmem>>, vector<1x12xf32>
    %314 = arith.addf %312, %313 : vector<1x12xf32>
    %cst_141 = arith.constant 0.000000e+00 : f32
    %315 = vector.broadcast %cst_141 : f32 to vector<1x12xf32>
    %316 = arith.maximumf %314, %315 : vector<1x12xf32>
    %317 = arith.truncf %316 : vector<1x12xf32> to vector<1x12xbf16>
    %c352 = arith.constant 352 : index
    %c0_142 = arith.constant 0 : index
    %318 = vector.load %arg5[%c352, %c0_142] : memref<440x48xbf16, #tpu.memory_space<vmem>>, vector<12x48xbf16>
    %cst_143 = arith.constant dense<0.000000e+00> : vector<1x48xf32>
    %319 = tpu.matmul %317, %318, %cst_143 {dimension_numbers = #tpu.dot_dimension_numbers<[1], [0], [0], [1], [0, 0, 1, 1], [], []>} : vector<1x12xbf16>, vector<12x48xbf16>, vector<1x48xf32> -> vector<1x48xf32>
    %c54 = arith.constant 54 : index
    %c0_144 = arith.constant 0 : index
    %320 = vector.load %arg6[%c54, %c0_144] : memref<64x48xf32, #tpu.memory_space<vmem>>, vector<1x48xf32>
    %321 = arith.addf %319, %320 : vector<1x48xf32>
    %cst_145 = arith.constant 3.000000e+00 : f32
    %322 = vector.broadcast %cst_145 : f32 to vector<1x48xf32>
    %323 = arith.addf %321, %322 : vector<1x48xf32>
    %cst_146 = arith.constant 0.000000e+00 : f32
    %cst_147 = arith.constant 6.000000e+00 : f32
    %324 = vector.broadcast %cst_146 : f32 to vector<1x48xf32>
    %325 = arith.maximumf %324, %323 : vector<1x48xf32>
    %326 = vector.broadcast %cst_147 : f32 to vector<1x48xf32>
    %327 = arith.minimumf %326, %325 : vector<1x48xf32>
    %cst_148 = arith.constant 0.166666672 : f32
    %328 = vector.broadcast %cst_148 : f32 to vector<1x48xf32>
    %329 = arith.mulf %327, %328 : vector<1x48xf32>
    %330 = arith.mulf %305, %329 : vector<1x48xf32>
    %331 = arith.truncf %330 : vector<1x48xf32> to vector<1x48xbf16>
    %c368 = arith.constant 368 : index
    %c0_149 = arith.constant 0 : index
    %332 = vector.load %arg5[%c368, %c0_149] : memref<440x48xbf16, #tpu.memory_space<vmem>>, vector<48x24xbf16>
    %cst_150 = arith.constant dense<0.000000e+00> : vector<1x24xf32>
    %333 = tpu.matmul %331, %332, %cst_150 {dimension_numbers = #tpu.dot_dimension_numbers<[1], [0], [0], [1], [0, 0, 1, 1], [], []>} : vector<1x48xbf16>, vector<48x24xbf16>, vector<1x24xf32> -> vector<1x24xf32>
    %c55 = arith.constant 55 : index
    %c0_151 = arith.constant 0 : index
    %334 = vector.load %arg6[%c55, %c0_151] : memref<64x48xf32, #tpu.memory_space<vmem>>, vector<1x24xf32>
    %335 = arith.mulf %333, %334 : vector<1x24xf32>
    %c56_152 = arith.constant 56 : index
    %c0_153 = arith.constant 0 : index
    %336 = vector.load %arg6[%c56_152, %c0_153] : memref<64x48xf32, #tpu.memory_space<vmem>>, vector<1x24xf32>
    %337 = arith.addf %335, %336 : vector<1x24xf32>
    %338 = arith.addf %337, %272 : vector<1x24xf32>
    %cst_154 = arith.constant dense<0.000000e+00> : vector<24xf32>
    %339 = vector.multi_reduction <add>, %338, %cst_154 [0] : vector<1x24xf32> to vector<24xf32>
    %340 = vector.shape_cast %339 : vector<24xf32> to vector<1x24xf32>
    %cst_155 = arith.constant 1.000000e+00 : f32
    %341 = vector.broadcast %cst_155 : f32 to vector<1x24xf32>
    %342 = arith.divf %340, %341 : vector<1x24xf32>
    %343 = arith.truncf %342 : vector<1x24xf32> to vector<1x24xbf16>
    %c416 = arith.constant 416 : index
    %c0_156 = arith.constant 0 : index
    %344 = vector.load %arg5[%c416, %c0_156] : memref<440x48xbf16, #tpu.memory_space<vmem>>, vector<24x32xbf16>
    %cst_157 = arith.constant dense<0.000000e+00> : vector<1x32xf32>
    %345 = tpu.matmul %343, %344, %cst_157 {dimension_numbers = #tpu.dot_dimension_numbers<[1], [0], [0], [1], [0, 0, 1, 1], [], []>} : vector<1x24xbf16>, vector<24x32xbf16>, vector<1x32xf32> -> vector<1x32xf32>
    %c57 = arith.constant 57 : index
    %c0_158 = arith.constant 0 : index
    %346 = vector.load %arg6[%c57, %c0_158] : memref<64x48xf32, #tpu.memory_space<vmem>>, vector<1x32xf32>
    %347 = arith.addf %345, %346 : vector<1x32xf32>
    %cst_159 = arith.constant 3.000000e+00 : f32
    %348 = vector.broadcast %cst_159 : f32 to vector<1x32xf32>
    %349 = arith.addf %347, %348 : vector<1x32xf32>
    %cst_160 = arith.constant 0.000000e+00 : f32
    %cst_161 = arith.constant 6.000000e+00 : f32
    %350 = vector.broadcast %cst_160 : f32 to vector<1x32xf32>
    %351 = arith.maximumf %350, %349 : vector<1x32xf32>
    %352 = vector.broadcast %cst_161 : f32 to vector<1x32xf32>
    %353 = arith.minimumf %352, %351 : vector<1x32xf32>
    %354 = arith.mulf %347, %353 : vector<1x32xf32>
    %cst_162 = arith.constant 0.166666672 : f32
    %355 = vector.broadcast %cst_162 : f32 to vector<1x32xf32>
    %356 = arith.mulf %354, %355 : vector<1x32xf32>
    %c0_163 = arith.constant 0 : index
    %c0_164 = arith.constant 0 : index
    %c0_165 = arith.constant 0 : index
    %357 = vector.load %arg7[%c0_163, %c0_164, %c0_165] : memref<1x1x32xf32, #tpu.memory_space<vmem>>, vector<1x1x32xf32>
    %358 = vector.shape_cast %357 : vector<1x1x32xf32> to vector<1x32xf32>
    %359 = vector.shape_cast %356 : vector<1x32xf32> to vector<1x1x32xf32>
    tpu.vector_store %arg7[%c0_163, %c0_164, %c0_165], %359 {strides = array<i32>} : memref<1x1x32xf32, #tpu.memory_space<vmem>>, vector<1x1x32xf32>,
    return
  }
  func.func @transform_0(%arg0: i32) -> (i32, i32, i32) {
    %c0_i32 = arith.constant 0 : i32
    %c0_i32_0 = arith.constant 0 : i32
    %c0_i32_1 = arith.constant 0 : i32
    return %arg0, %c0_i32, %c0_i32_0 : i32, i32, i32
  }
  func.func @transform_1(%arg0: i32) -> (i32, i32) {
    %c0_i32 = arith.constant 0 : i32
    %c0_i32_0 = arith.constant 0 : i32
    %c0_i32_1 = arith.constant 0 : i32
    return %c0_i32, %c0_i32_0 : i32, i32
  }
  func.func @transform_2(%arg0: i32) -> (i32, i32) {
    %c0_i32 = arith.constant 0 : i32
    %c0_i32_0 = arith.constant 0 : i32
    %c0_i32_1 = arith.constant 0 : i32
    return %c0_i32, %c0_i32_0 : i32, i32
  }
  func.func @transform_3(%arg0: i32) -> (i32, i32) {
    %c0_i32 = arith.constant 0 : i32
    %c0_i32_0 = arith.constant 0 : i32
    %c0_i32_1 = arith.constant 0 : i32
    return %c0_i32, %c0_i32_0 : i32, i32
  }
  func.func @transform_4(%arg0: i32) -> (i32, i32) {
    %c0_i32 = arith.constant 0 : i32
    %c0_i32_0 = arith.constant 0 : i32
    %c0_i32_1 = arith.constant 0 : i32
    return %c0_i32, %c0_i32_0 : i32, i32
  }
  func.func @transform_5(%arg0: i32) -> (i32, i32) {
    %c0_i32 = arith.constant 0 : i32
    %c0_i32_0 = arith.constant 0 : i32
    %c0_i32_1 = arith.constant 0 : i32
    return %c0_i32, %c0_i32_0 : i32, i32
  }
  func.func @transform_6(%arg0: i32) -> (i32, i32, i32) {
    %c0_i32 = arith.constant 0 : i32
    %c0_i32_0 = arith.constant 0 : i32
    %c0_i32_1 = arith.constant 0 : i32
    return %arg0, %c0_i32, %c0_i32_0 : i32, i32, i32
  }
}

</mosaic_0001>

<llo_original>
// kernel: forward.1
$region0: #{forward.1}
  #allocation0 [shape = 'u32[]', space=smem, size = 0x4, offset = 0x4, fixed_abs, tag = 'smem constant byte address 0x4 - core index']
  #allocation1 [shape = 'u32[144,128]{1,0:T(1,128)}', space=vmem, size = 0x12000, scoped, tag = 'internal scratch']
  %s0 = inlined_call_operand.vmem [shape: f32[2,256,3], index: 0, kind: input, shape index: {}]
  %s1 = inlined_call_operand.vmem [shape: bf16[576,256], index: 1, kind: input, shape index: {}]
  %s2 = inlined_call_operand.vmem [shape: bf16[16,576], index: 2, kind: input, shape index: {}]
  %s3 = inlined_call_operand.vmem [shape: bf16[4,144], index: 3, kind: input, shape index: {}]
  %s4 = inlined_call_operand.vmem [shape: bf16[440,48], index: 4, kind: input, shape index: {}]
  %s5 = inlined_call_operand.vmem [shape: f32[64,48], index: 5, kind: input, shape index: {}]
  %s6 = inlined_call_operand.hbm [shape: f32[2,1,32], index: 6, kind: output, shape index: {}]
  %s7 = sld [smem:[#allocation0]]
  $region57: #{forward.1} parent=0
    _
  %s9 = ssub.s32 1, %s7
  %s10 = scalar_select 0, %s9, %s7
  $region1: #{forward.1} parent=0
    #allocation2 [shape = 'u8[1024]{0}', space=vmem, size = 0x400, scoped, tag = 'output window, operand 0']
    #allocation3 [shape = 's32[2]{0}', space=sflag, size = 0x8, scoped, tag = 'scoped memory for forward.1']
    %11 = vsyncpa [#allocation3], 0
    %s12 = scalar_lea.sflag [#allocation3], 1
    %13 = vsyncpa %s12, 0
    loop: start=0, step=1, limit=4
    $region2: #{forward.1} parent=1 // loop_pre_header
      _
    $region3: #{forward.1} parent=1 // loop_header
      %s15 = sphi 0, %s19
      %p16 = scmp.ge.s32.totalorder %s15, 4
      %s25 = sphi 0, %s27
      %s28 = sphi 0, %s25
      %s29 = sphi 0, %s28
      %s45 = sphi 0, %s29
      %s49 = sphi 0, %s49
      %s51 = sphi 0, %s49
      %s52 = sphi 0, %s51
      %s66 = sphi 0, %s52
      %s70 = sphi 0, %s70
      %s72 = sphi 0, %s70
      %s73 = sphi 0, %s72
      %s87 = sphi 0, %s73
      %s91 = sphi 0, %s91
      %s93 = sphi 0, %s91
      %s94 = sphi 0, %s93
      %s108 = sphi 0, %s94
      %s112 = sphi 0, %s112
      %s114 = sphi 0, %s112
      %s115 = sphi 0, %s114
      %s129 = sphi 0, %s115
      %s133 = sphi 0, %s133
      %s135 = sphi 0, %s133
      %s136 = sphi 0, %s135
      %s150 = sphi 0, %s136
      %s156 = sphi 0, %s158
      %s159 = sphi 0, %s156
      %s160 = sphi 0, %s159
      %s176 = sphi 0, %s160
    $region4: #{forward.1} parent=1 // loop_header_branch
      %18 = sbr.rel (%p16) target = $region8
    $region5: #{forward.1} parent=1 // loop_body
      %s20 = ssub.s32 %s15, 1
      %s21 = ssub.s32 %s15, 2
      %s22 = sadd.s32 %s15, 1
      %s23 = ssub.s32 %s15, %s22
      %p24 = scmp.eq.s32.totalorder %s23, 0
      %s26 = sadd.s32 %s25, 1
      %s27 = scalar_select %p24, %s25, %s26
      %p30 = pneg %p24
      %p31 = scmp.eq.s32.totalorder %s15, 1
      %p32 = por %p30, %p31
      %p33 = scmp.ne.s32.totalorder %s25, %s28
      %p34 = scmp.eq.s32.totalorder %s15, 0
      %p35 = por %p33, %p34
      %p36 = scmp.ne.s32.totalorder %s25, %s28
      %p37 = scmp.eq.s32.totalorder %s20, 1
      %p38 = por %p36, %p37
      %p39 = scmp.ne.s32.totalorder %s28, %s29
      %p40 = scmp.eq.s32.totalorder %s20, 0
      %p41 = por %p39, %p40
      %p42 = scmp.ne.s32.totalorder %s28, %s29
      %p43 = scmp.eq.s32.totalorder %s21, 1
      %p44 = por %p42, %p43
      %p46 = scmp.ne.s32.totalorder %s29, %s45
      %p47 = scmp.eq.s32.totalorder %s21, 0
      %p48 = por %p46, %p47
      %s50 = sadd.s32 %s49, 1
      %p53 = scmp.eq.s32.totalorder %s15, 1
      %p54 = scmp.ne.s32.totalorder %s49, %s51
      %p55 = scmp.eq.s32.totalorder %s15, 0
      %p56 = por %p54, %p55
      %p57 = scmp.ne.s32.totalorder %s49, %s51
      %p58 = scmp.eq.s32.totalorder %s20, 1
      %p59 = por %p57, %p58
      %p60 = scmp.ne.s32.totalorder %s51, %s52
      %p61 = scmp.eq.s32.totalorder %s20, 0
      %p62 = por %p60, %p61
      %p63 = scmp.ne.s32.totalorder %s51, %s52
      %p64 = scmp.eq.s32.totalorder %s21, 1
      %p65 = por %p63, %p64
      %p67 = scmp.ne.s32.totalorder %s52, %s66
      %p68 = scmp.eq.s32.totalorder %s21, 0
      %p69 = por %p67, %p68
      %s71 = sadd.s32 %s70, 1
      %p74 = scmp.eq.s32.totalorder %s15, 1
      %p75 = scmp.ne.s32.totalorder %s70, %s72
      %p76 = scmp.eq.s32.totalorder %s15, 0
      %p77 = por %p75, %p76
      %p78 = scmp.ne.s32.totalorder %s70, %s72
      %p79 = scmp.eq.s32.totalorder %s20, 1
      %p80 = por %p78, %p79
      %p81 = scmp.ne.s32.totalorder %s72, %s73
      %p82 = scmp.eq.s32.totalorder %s20, 0
      %p83 = por %p81, %p82
      %p84 = scmp.ne.s32.totalorder %s72, %s73
      %p85 = scmp.eq.s32.totalorder %s21, 1
      %p86 = por %p84, %p85
      %p88 = scmp.ne.s32.totalorder %s73, %s87
      %p89 = scmp.eq.s32.totalorder %s21, 0
      %p90 = por %p88, %p89
      %s92 = sadd.s32 %s91, 1
      %p95 = scmp.eq.s32.totalorder %s15, 1
      %p96 = scmp.ne.s32.totalorder %s91, %s93
      %p97 = scmp.eq.s32.totalorder %s15, 0
      %p98 = por %p96, %p97
      %p99 = scmp.ne.s32.totalorder %s91, %s93
      %p100 = scmp.eq.s32.totalorder %s20, 1
      %p101 = por %p99, %p100
      %p102 = scmp.ne.s32.totalorder %s93, %s94
      %p103 = scmp.eq.s32.totalorder %s20, 0
      %p104 = por %p102, %p103
      %p105 = scmp.ne.s32.totalorder %s93, %s94
      %p106 = scmp.eq.s32.totalorder %s21, 1
      %p107 = por %p105, %p106
      %p109 = scmp.ne.s32.totalorder %s94, %s108
      %p110 = scmp.eq.s32.totalorder %s21, 0
      %p111 = por %p109, %p110
      %s113 = sadd.s32 %s112, 1
      %p116 = scmp.eq.s32.totalorder %s15, 1
      %p117 = scmp.ne.s32.totalorder %s112, %s114
      %p118 = scmp.eq.s32.totalorder %s15, 0
      %p119 = por %p117, %p118
      %p120 = scmp.ne.s32.totalorder %s112, %s114
      %p121 = scmp.eq.s32.totalorder %s20, 1
      %p122 = por %p120, %p121
      %p123 = scmp.ne.s32.totalorder %s114, %s115
      %p124 = scmp.eq.s32.totalorder %s20, 0
      %p125 = por %p123, %p124
      %p126 = scmp.ne.s32.totalorder %s114, %s115
      %p127 = scmp.eq.s32.totalorder %s21, 1
      %p128 = por %p126, %p127
      %p130 = scmp.ne.s32.totalorder %s115, %s129
      %p131 = scmp.eq.s32.totalorder %s21, 0
      %p132 = por %p130, %p131
      %s134 = sadd.s32 %s133, 1
      %p137 = scmp.eq.s32.totalorder %s15, 1
      %p138 = scmp.ne.s32.totalorder %s133, %s135
      %p139 = scmp.eq.s32.totalorder %s15, 0
      %p140 = por %p138, %p139
      %p141 = scmp.ne.s32.totalorder %s133, %s135
      %p142 = scmp.eq.s32.totalorder %s20, 1
      %p143 = por %p141, %p142
      %p144 = scmp.ne.s32.totalorder %s135, %s136
      %p145 = scmp.eq.s32.totalorder %s20, 0
      %p146 = por %p144, %p145
      %p147 = scmp.ne.s32.totalorder %s135, %s136
      %p148 = scmp.eq.s32.totalorder %s21, 1
      %p149 = por %p147, %p148
      %p151 = scmp.ne.s32.totalorder %s136, %s150
      %p152 = scmp.eq.s32.totalorder %s21, 0
      %p153 = por %p151, %p152
      %s154 = ssub.s32 %s15, %s22
      %p155 = scmp.eq.s32.totalorder %s154, 0
      %s157 = sadd.s32 %s156, 1
      %s158 = scalar_select %p155, %s156, %s157
      %p161 = pneg %p155
      %p162 = scmp.eq.s32.totalorder %s15, 1
      %p163 = por %p161, %p162
      %p164 = scmp.ne.s32.totalorder %s156, %s159
      %p165 = scmp.eq.s32.totalorder %s15, 0
      %p166 = por %p164, %p165
      %p167 = scmp.ne.s32.totalorder %s156, %s159
      %p168 = scmp.eq.s32.totalorder %s20, 1
      %p169 = por %p167, %p168
      %p170 = scmp.ne.s32.totalorder %s159, %s160
      %p171 = scmp.eq.s32.totalorder %s20, 0
      %p172 = por %p170, %p171
      %p173 = scmp.ne.s32.totalorder %s159, %s160
      %p174 = scmp.eq.s32.totalorder %s21, 1
      %p175 = por %p173, %p174
      %p177 = scmp.ne.s32.totalorder %s160, %s176
      %p178 = scmp.eq.s32.totalorder %s21, 0
      %p179 = por %p177, %p178
      %p180 = scmp.le.s32.totalorder 1, %s15
      %p181 = scmp.lt.s32.totalorder %s15, 3
      %p182 = pnand %p180, %p181
      %p183 = pneg %p182
      // Predicated region
      $region9: #{forward.1} parent=5 // pred_check
        _
      $region10: #{forward.1} parent=5 // pred_check_branch
        %185 = sbr.rel (%p182) target = $region12
      $region11: #{forward.1} parent=5 // pred_region
        %s186 = ssub.s32 %s15, 1
        // Predicated region
        $region13: #{forward.1} parent=11 // pred_check
          %p187 = pneg %p62
        $region14: #{forward.1} parent=11 // pred_check_branch
          %189 = sbr.rel (%p187) target = $region16
        $region15: #{forward.1} parent=11 // pred_region
          _
        $region16: #{forward.1} parent=11 // pred_fallthru
          _
        // Predicated region
        $region17: #{forward.1} parent=11 // pred_check
          %p190 = pneg %p83
        $region18: #{forward.1} parent=11 // pred_check_branch
          %192 = sbr.rel (%p190) target = $region20
        $region19: #{forward.1} parent=11 // pred_region
          _
        $region20: #{forward.1} parent=11 // pred_fallthru
          _
        // Predicated region
        $region21: #{forward.1} parent=11 // pred_check
          %p193 = pneg %p104
        $region22: #{forward.1} parent=11 // pred_check_branch
          %195 = sbr.rel (%p193) target = $region24
        $region23: #{forward.1} parent=11 // pred_region
          _
        $region24: #{forward.1} parent=11 // pred_fallthru
          _
        // Predicated region
        $region25: #{forward.1} parent=11 // pred_check
          %p196 = pneg %p125
        $region26: #{forward.1} parent=11 // pred_check_branch
          %198 = sbr.rel (%p196) target = $region28
        $region27: #{forward.1} parent=11 // pred_region
          _
        $region28: #{forward.1} parent=11 // pred_fallthru
          _
        // Predicated region
        $region29: #{forward.1} parent=11 // pred_check
          %p199 = pneg %p146
        $region30: #{forward.1} parent=11 // pred_check_branch
          %201 = sbr.rel (%p199) target = $region32
        $region31: #{forward.1} parent=11 // pred_region
          _
        $region32: #{forward.1} parent=11 // pred_fallthru
          _
      $region12: #{forward.1} parent=5 // pred_fallthru
        _
      %p202 = scmp.lt.s32.totalorder %s15, 2
      // Predicated region
      $region33: #{forward.1} parent=5 // pred_check
        %p203 = pneg %p202
      $region34: #{forward.1} parent=5 // pred_check_branch
        %205 = sbr.rel (%p203) target = $region36
      $region35: #{forward.1} parent=5 // pred_region
        // Predicated region
        $region37: #{forward.1} parent=35 // pred_check
          %p206 = pneg %p35
        $region38: #{forward.1} parent=35 // pred_check_branch
          %208 = sbr.rel (%p206) target = $region40
        $region39: #{forward.1} parent=35 // pred_region
          %p209 = scmp.lt.s32.totalorder %s15, 1
          %s210 = scalar_select %p209, %s15, 1
          %s211 = smul.addr %s210, 32
          %s212 = smul.addr %s211, 8
          %s213 = scalar_lea.vmem %s0, %s212
        $region40: #{forward.1} parent=35 // pred_fallthru
          _
      $region36: #{forward.1} parent=5 // pred_fallthru
        _
      %p214 = scmp.le.s32.totalorder 1, %s15
      %p215 = scmp.lt.s32.totalorder %s15, 3
      %p216 = pnand %p214, %p215
      %p217 = pneg %p216
      // Predicated region
      $region41: #{forward.1} parent=5 // pred_check
        _
      $region42: #{forward.1} parent=5 // pred_check_branch
        %219 = sbr.rel (%p216) target = $region44
      $region43: #{forward.1} parent=5 // pred_region
        %s220 = ssub.s32 %s15, 1
        %p221 = scmp.lt.s32.totalorder %s20, 1
        %s222 = scalar_select %p221, %s20, 1
        %s223 = smul.addr %s222, 32
        %s224 = smul.addr %s223, 8
        %s225 = scalar_lea.vmem %s0, %s224
        %p226 = pneg %p41
        %p227 = pneg %p38
        %p228 = pneg %p62
        %p229 = pneg %p59
        %p230 = pneg %p83
        %p231 = pneg %p80
        %p232 = pneg %p104
        %p233 = pneg %p101
        %p234 = pneg %p125
        %p235 = pneg %p122
        %p236 = pneg %p146
        %p237 = pneg %p143
        %p238 = pneg %p172
        %p239 = pneg %p169
        %s240 = sand.u32 %s159, 1
        %s241 = scalar_lea.sflag [#allocation3], %s240
        %s242 = sand.u32 %s159, 1
        %s243 = scalar_lea.vmem [#allocation2], %s242
        %p244 = scmp.lt.s32.totalorder %s20, 1
        %s245 = scalar_select %p244, %s20, 1
        %s246 = smul.addr %s245, 32
        %s247 = smul.addr %s246, 8
        %s248 = scalar_lea.vmem %s0, %s247
        %v250 = vld [vmem:[%s248] sm:$0xff]
        %v251 = vld [vmem:[%s248 + $0x8] sm:$0xff]
        %v252 = vld [vmem:[%s248 + $0x10] sm:$0xff]
        %v253 = vld [vmem:[%s248 + $0x18] sm:$0xff]
        %v254 = vld [vmem:[%s248 + $0x20] sm:$0xff]
        %v255 = vld [vmem:[%s248 + $0x28] sm:$0xff]
        %v256 = vld [vmem:[%s248 + $0x30] sm:$0xff]
        %v257 = vld [vmem:[%s248 + $0x38] sm:$0xff]
        %v258 = vld [vmem:[%s248 + $0x40] sm:$0xff]
        %v259 = vld [vmem:[%s248 + $0x48] sm:$0xff]
        %v260 = vld [vmem:[%s248 + $0x50] sm:$0xff]
        %v261 = vld [vmem:[%s248 + $0x58] sm:$0xff]
        %v262 = vld [vmem:[%s248 + $0x60] sm:$0xff]
        %v263 = vld [vmem:[%s248 + $0x68] sm:$0xff]
        %v264 = vld [vmem:[%s248 + $0x70] sm:$0xff]
        %v265 = vld [vmem:[%s248 + $0x78] sm:$0xff]
        %v266 = vld [vmem:[%s248 + $0x80] sm:$0xff]
        %v267 = vld [vmem:[%s248 + $0x88] sm:$0xff]
        %v268 = vld [vmem:[%s248 + $0x90] sm:$0xff]
        %v269 = vld [vmem:[%s248 + $0x98] sm:$0xff]
        %v270 = vld [vmem:[%s248 + $0xa0] sm:$0xff]
        %v271 = vld [vmem:[%s248 + $0xa8] sm:$0xff]
        %v272 = vld [vmem:[%s248 + $0xb0] sm:$0xff]
        %v273 = vld [vmem:[%s248 + $0xb8] sm:$0xff]
        %v274 = vld [vmem:[%s248 + $0xc0] sm:$0xff]
        %v275 = vld [vmem:[%s248 + $0xc8] sm:$0xff]
        %v276 = vld [vmem:[%s248 + $0xd0] sm:$0xff]
        %v277 = vld [vmem:[%s248 + $0xd8] sm:$0xff]
        %v278 = vld [vmem:[%s248 + $0xe0] sm:$0xff]
        %v279 = vld [vmem:[%s248 + $0xe8] sm:$0xff]
        %v280 = vld [vmem:[%s248 + $0xf0] sm:$0xff]
        %v281 = vld [vmem:[%s248 + $0xf8] sm:$0xff]
        %v282 = vld [vmem:[%s1] sm:$0xff]
        %v283 = vld [vmem:[%s1 + $0x8] sm:$0xff]
        %v284 = vld [vmem:[%s1 + $0x10] sm:$0xff]
        %v285 = vld [vmem:[%s1 + $0x18] sm:$0xff]
        %v286 = vld [vmem:[%s1 + $0x20] sm:$0xff]
        %v287 = vld [vmem:[%s1 + $0x28] sm:$0xff]
        %v288 = vld [vmem:[%s1 + $0x30] sm:$0xff]
        %v289 = vld [vmem:[%s1 + $0x38] sm:$0xff]
        %v290 = vld [vmem:[%s1 + $0x40] sm:$0xff]
        %v291 = vld [vmem:[%s1 + $0x48] sm:$0xff]
        %v292 = vld [vmem:[%s1 + $0x50] sm:$0xff]
        %v293 = vld [vmem:[%s1 + $0x58] sm:$0xff]
        %v294 = vld [vmem:[%s1 + $0x60] sm:$0xff]
        %v295 = vld [vmem:[%s1 + $0x68] sm:$0xff]
        %v296 = vld [vmem:[%s1 + $0x70] sm:$0xff]
        %v297 = vld [vmem:[%s1 + $0x78] sm:$0xff]
        %v298 = vld [vmem:[%s1 + $0x80] sm:$0xff]
        %v299 = vld [vmem:[%s1 + $0x88] sm:$0xff]
        %v300 = vld [vmem:[%s1 + $0x90] sm:$0xff]
        %v301 = vld [vmem:[%s1 + $0x98] sm:$0xff]
        %v302 = vld [vmem:[%s1 + $0xa0] sm:$0xff]
        %v303 = vld [vmem:[%s1 + $0xa8] sm:$0xff]
        %v304 = vld [vmem:[%s1 + $0xb0] sm:$0xff]
        %v305 = vld [vmem:[%s1 + $0xb8] sm:$0xff]
        %v306 = vld [vmem:[%s1 + $0xc0] sm:$0xff]
        %v307 = vld [vmem:[%s1 + $0xc8] sm:$0xff]
        %v308 = vld [vmem:[%s1 + $0xd0] sm:$0xff]
        %v309 = vld [vmem:[%s1 + $0xd8] sm:$0xff]
        %v310 = vld [vmem:[%s1 + $0xe0] sm:$0xff]
        %v311 = vld [vmem:[%s1 + $0xe8] sm:$0xff]
        %v312 = vld [vmem:[%s1 + $0xf0] sm:$0xff]
        %v313 = vld [vmem:[%s1 + $0xf8] sm:$0xff]
        %v314 = vld [vmem:[%s1 + $0x100] sm:$0xff]
        %v315 = vld [vmem:[%s1 + $0x108] sm:$0xff]
        %v316 = vld [vmem:[%s1 + $0x110] sm:$0xff]
        %v317 = vld [vmem:[%s1 + $0x118] sm:$0xff]
        %v318 = vld [vmem:[%s1 + $0x120] sm:$0xff]
        %v319 = vld [vmem:[%s1 + $0x128] sm:$0xff]
        %v320 = vld [vmem:[%s1 + $0x130] sm:$0xff]
        %v321 = vld [vmem:[%s1 + $0x138] sm:$0xff]
        %v322 = vld [vmem:[%s1 + $0x140] sm:$0xff]
        %v323 = vld [vmem:[%s1 + $0x148] sm:$0xff]
        %v324 = vld [vmem:[%s1 + $0x150] sm:$0xff]
        %v325 = vld [vmem:[%s1 + $0x158] sm:$0xff]
        %v326 = vld [vmem:[%s1 + $0x160] sm:$0xff]
        %v327 = vld [vmem:[%s1 + $0x168] sm:$0xff]
        %v328 = vld [vmem:[%s1 + $0x170] sm:$0xff]
        %v329 = vld [vmem:[%s1 + $0x178] sm:$0xff]
        %v330 = vld [vmem:[%s1 + $0x180] sm:$0xff]
        %v331 = vld [vmem:[%s1 + $0x188] sm:$0xff]
        %v332 = vld [vmem:[%s1 + $0x190] sm:$0xff]
        %v333 = vld [vmem:[%s1 + $0x198] sm:$0xff]
        %v334 = vld [vmem:[%s1 + $0x1a0] sm:$0xff]
        %v335 = vld [vmem:[%s1 + $0x1a8] sm:$0xff]
        %v336 = vld [vmem:[%s1 + $0x1b0] sm:$0xff]
        %v337 = vld [vmem:[%s1 + $0x1b8] sm:$0xff]
        %v338 = vld [vmem:[%s1 + $0x1c0] sm:$0xff]
        %v339 = vld [vmem:[%s1 + $0x1c8] sm:$0xff]
        %v340 = vld [vmem:[%s1 + $0x1d0] sm:$0xff]
        %v341 = vld [vmem:[%s1 + $0x1d8] sm:$0xff]
        %v342 = vld [vmem:[%s1 + $0x1e0] sm:$0xff]
        %v343 = vld [vmem:[%s1 + $0x1e8] sm:$0xff]
        %v344 = vld [vmem:[%s1 + $0x1f0] sm:$0xff]
        %v345 = vld [vmem:[%s1 + $0x1f8] sm:$0xff]
        %v346 = vld [vmem:[%s1 + $0x200] sm:$0xff]
        %v347 = vld [vmem:[%s1 + $0x208] sm:$0xff]
        %v348 = vld [vmem:[%s1 + $0x210] sm:$0xff]
        %v349 = vld [vmem:[%s1 + $0x218] sm:$0xff]
        %v350 = vld [vmem:[%s1 + $0x220] sm:$0xff]
        %v351 = vld [vmem:[%s1 + $0x228] sm:$0xff]
        %v352 = vld [vmem:[%s1 + $0x230] sm:$0xff]
        %v353 = vld [vmem:[%s1 + $0x238] sm:$0xff]
        %v354 = vpack.c.bf16 %v251, %v250
        %v355 = vpack.c.bf16 %v253, %v252
        %v356 = vpack.c.bf16 %v255, %v254
        %v357 = vpack.c.bf16 %v257, %v256
        %v358 = vpack.c.bf16 %v259, %v258
        %v359 = vpack.c.bf16 %v261, %v260
        %v360 = vpack.c.bf16 %v263, %v262
        %v361 = vpack.c.bf16 %v265, %v264
        %v362 = vpack.c.bf16 %v267, %v266
        %v363 = vpack.c.bf16 %v269, %v268
        %v364 = vpack.c.bf16 %v271, %v270
        %v365 = vpack.c.bf16 %v273, %v272
        %v366 = vpack.c.bf16 %v275, %v274
        %v367 = vpack.c.bf16 %v277, %v276
        %v368 = vpack.c.bf16 %v279, %v278
        %v369 = vpack.c.bf16 %v281, %v280
        %v442 = vunpack.c.l.b16 %v282
        %v443 = vunpack.c.h.b16 %v282
        %v444 = vunpack.c.l.b16 %v283
        %v445 = vunpack.c.h.b16 %v283
        %v446 = vunpack.c.l.b16 %v284
        %v447 = vunpack.c.h.b16 %v284
        %v448 = vunpack.c.l.b16 %v285
        %v449 = vunpack.c.h.b16 %v285
        %v450 = vunpack.c.l.b16 %v286
        %v451 = vunpack.c.h.b16 %v286
        %v452 = vunpack.c.l.b16 %v287
        %v453 = vunpack.c.h.b16 %v287
        %v454 = vunpack.c.l.b16 %v288
        %v455 = vunpack.c.h.b16 %v288
        %v456 = vunpack.c.l.b16 %v289
        %v457 = vunpack.c.h.b16 %v289
        %v458 = vunpack.c.l.b16 %v290
        %v459 = vunpack.c.h.b16 %v290
        %v460 = vunpack.c.l.b16 %v291
        %v461 = vunpack.c.h.b16 %v291
        %v462 = vunpack.c.l.b16 %v292
        %v463 = vunpack.c.h.b16 %v292
        %v464 = vunpack.c.l.b16 %v293
        %v465 = vunpack.c.h.b16 %v293
        %v466 = vunpack.c.l.b16 %v294
        %v467 = vunpack.c.h.b16 %v294
        %v468 = vunpack.c.l.b16 %v295
        %v469 = vunpack.c.h.b16 %v295
        %v470 = vunpack.c.l.b16 %v296
        %v471 = vunpack.c.h.b16 %v296
        %v472 = vunpack.c.l.b16 %v297
        %v473 = vunpack.c.h.b16 %v297
        %v474 = vunpack.c.l.b16 %v298
        %v475 = vunpack.c.h.b16 %v298
        %v476 = vunpack.c.l.b16 %v299
        %v477 = vunpack.c.h.b16 %v299
        %v478 = vunpack.c.l.b16 %v300
        %v479 = vunpack.c.h.b16 %v300
        %v480 = vunpack.c.l.b16 %v301
        %v481 = vunpack.c.h.b16 %v301
        %v482 = vunpack.c.l.b16 %v302
        %v483 = vunpack.c.h.b16 %v302
        %v484 = vunpack.c.l.b16 %v303
        %v485 = vunpack.c.h.b16 %v303
        %v486 = vunpack.c.l.b16 %v304
        %v487 = vunpack.c.h.b16 %v304
        %v488 = vunpack.c.l.b16 %v305
        %v489 = vunpack.c.h.b16 %v305
        %v490 = vunpack.c.l.b16 %v306
        %v491 = vunpack.c.h.b16 %v306
        %v492 = vunpack.c.l.b16 %v307
        %v493 = vunpack.c.h.b16 %v307
        %v494 = vunpack.c.l.b16 %v308
        %v495 = vunpack.c.h.b16 %v308
        %v496 = vunpack.c.l.b16 %v309
        %v497 = vunpack.c.h.b16 %v309
        %v498 = vunpack.c.l.b16 %v310
        %v499 = vunpack.c.h.b16 %v310
        %v500 = vunpack.c.l.b16 %v311
        %v501 = vunpack.c.h.b16 %v311
        %v502 = vunpack.c.l.b16 %v312
        %v503 = vunpack.c.h.b16 %v312
        %v504 = vunpack.c.l.b16 %v313
        %v505 = vunpack.c.h.b16 %v313
        %v506 = vunpack.c.l.b16 %v314
        %v507 = vunpack.c.h.b16 %v314
        %v508 = vunpack.c.l.b16 %v315
        %v509 = vunpack.c.h.b16 %v315
        %v510 = vunpack.c.l.b16 %v316
        %v511 = vunpack.c.h.b16 %v316
        %v512 = vunpack.c.l.b16 %v317
        %v513 = vunpack.c.h.b16 %v317
        %v514 = vunpack.c.l.b16 %v318
        %v515 = vunpack.c.h.b16 %v318
        %v516 = vunpack.c.l.b16 %v319
        %v517 = vunpack.c.h.b16 %v319
        %v518 = vunpack.c.l.b16 %v320
        %v519 = vunpack.c.h.b16 %v320
        %v520 = vunpack.c.l.b16 %v321
        %v521 = vunpack.c.h.b16 %v321
        %v522 = vunpack.c.l.b16 %v322
        %v523 = vunpack.c.h.b16 %v322
        %v524 = vunpack.c.l.b16 %v323
        %v525 = vunpack.c.h.b16 %v323
        %v526 = vunpack.c.l.b16 %v324
        %v527 = vunpack.c.h.b16 %v324
        %v528 = vunpack.c.l.b16 %v325
        %v529 = vunpack.c.h.b16 %v325
        %v530 = vunpack.c.l.b16 %v326
        %v531 = vunpack.c.h.b16 %v326
        %v532 = vunpack.c.l.b16 %v327
        %v533 = vunpack.c.h.b16 %v327
        %v534 = vunpack.c.l.b16 %v328
        %v535 = vunpack.c.h.b16 %v328
        %v536 = vunpack.c.l.b16 %v329
        %v537 = vunpack.c.h.b16 %v329
        %v538 = vunpack.c.l.b16 %v330
        %v539 = vunpack.c.h.b16 %v330
        %v540 = vunpack.c.l.b16 %v331
        %v541 = vunpack.c.h.b16 %v331
        %v542 = vunpack.c.l.b16 %v332
        %v543 = vunpack.c.h.b16 %v332
        %v544 = vunpack.c.l.b16 %v333
        %v545 = vunpack.c.h.b16 %v333
        %v546 = vunpack.c.l.b16 %v334
        %v547 = vunpack.c.h.b16 %v334
        %v548 = vunpack.c.l.b16 %v335
        %v549 = vunpack.c.h.b16 %v335
        %v550 = vunpack.c.l.b16 %v336
        %v551 = vunpack.c.h.b16 %v336
        %v552 = vunpack.c.l.b16 %v337
        %v553 = vunpack.c.h.b16 %v337
        %v554 = vunpack.c.l.b16 %v338
        %v555 = vunpack.c.h.b16 %v338
        %v556 = vunpack.c.l.b16 %v339
        %v557 = vunpack.c.h.b16 %v339
        %v558 = vunpack.c.l.b16 %v340
        %v559 = vunpack.c.h.b16 %v340
        %v560 = vunpack.c.l.b16 %v341
        %v561 = vunpack.c.h.b16 %v341
        %v562 = vunpack.c.l.b16 %v342
        %v563 = vunpack.c.h.b16 %v342
        %v564 = vunpack.c.l.b16 %v343
        %v565 = vunpack.c.h.b16 %v343
        %v566 = vunpack.c.l.b16 %v344
        %v567 = vunpack.c.h.b16 %v344
        %v568 = vunpack.c.l.b16 %v345
        %v569 = vunpack.c.h.b16 %v345
        %v570 = vunpack.c.l.b16 %v346
        %v571 = vunpack.c.h.b16 %v346
        %v572 = vunpack.c.l.b16 %v347
        %v573 = vunpack.c.h.b16 %v347
        %v574 = vunpack.c.l.b16 %v348
        %v575 = vunpack.c.h.b16 %v348
        %v576 = vunpack.c.l.b16 %v349
        %v577 = vunpack.c.h.b16 %v349
        %v578 = vunpack.c.l.b16 %v350
        %v579 = vunpack.c.h.b16 %v350
        %v580 = vunpack.c.l.b16 %v351
        %v581 = vunpack.c.h.b16 %v351
        %v582 = vunpack.c.l.b16 %v352
        %v583 = vunpack.c.h.b16 %v352
        %v584 = vunpack.c.l.b16 %v353
        %v585 = vunpack.c.h.b16 %v353
        %v586 = vpack.c.b16 %v444, %v442
        %v587 = vpack.c.b16 %v445, %v443
        %v588 = vpack.c.b16 %v448, %v446
        %v589 = vpack.c.b16 %v449, %v447
        %v590 = vpack.c.b16 %v452, %v450
        %v591 = vpack.c.b16 %v453, %v451
        %v592 = vpack.c.b16 %v456, %v454
        %v593 = vpack.c.b16 %v457, %v455
        %v594 = vpack.c.b16 %v460, %v458
        %v595 = vpack.c.b16 %v461, %v459
        %v596 = vpack.c.b16 %v464, %v462
        %v597 = vpack.c.b16 %v465, %v463
        %v598 = vpack.c.b16 %v468, %v466
        %v599 = vpack.c.b16 %v469, %v467
        %v600 = vpack.c.b16 %v472, %v470
        %v601 = vpack.c.b16 %v473, %v471
        %v602 = vpack.c.b16 %v476, %v474
        %v603 = vpack.c.b16 %v477, %v475
        %v604 = vpack.c.b16 %v480, %v478
        %v605 = vpack.c.b16 %v481, %v479
        %v606 = vpack.c.b16 %v484, %v482
        %v607 = vpack.c.b16 %v485, %v483
        %v608 = vpack.c.b16 %v488, %v486
        %v609 = vpack.c.b16 %v489, %v487
        %v610 = vpack.c.b16 %v492, %v490
        %v611 = vpack.c.b16 %v493, %v491
        %v612 = vpack.c.b16 %v496, %v494
        %v613 = vpack.c.b16 %v497, %v495
        %v614 = vpack.c.b16 %v500, %v498
        %v615 = vpack.c.b16 %v501, %v499
        %v616 = vpack.c.b16 %v504, %v502
        %v617 = vpack.c.b16 %v505, %v503
        %v618 = vpack.c.b16 %v508, %v506
        %v619 = vpack.c.b16 %v509, %v507
        %v620 = vpack.c.b16 %v512, %v510
        %v621 = vpack.c.b16 %v513, %v511
        %v622 = vpack.c.b16 %v516, %v514
        %v623 = vpack.c.b16 %v517, %v515
        %v624 = vpack.c.b16 %v520, %v518
        %v625 = vpack.c.b16 %v521, %v519
        %v626 = vpack.c.b16 %v524, %v522
        %v627 = vpack.c.b16 %v525, %v523
        %v628 = vpack.c.b16 %v528, %v526
        %v629 = vpack.c.b16 %v529, %v527
        %v630 = vpack.c.b16 %v532, %v530
        %v631 = vpack.c.b16 %v533, %v531
        %v632 = vpack.c.b16 %v536, %v534
        %v633 = vpack.c.b16 %v537, %v535
        %v634 = vpack.c.b16 %v540, %v538
        %v635 = vpack.c.b16 %v541, %v539
        %v636 = vpack.c.b16 %v544, %v542
        %v637 = vpack.c.b16 %v545, %v543
        %v638 = vpack.c.b16 %v548, %v546
        %v639 = vpack.c.b16 %v549, %v547
        %v640 = vpack.c.b16 %v552, %v550
        %v641 = vpack.c.b16 %v553, %v551
        %v642 = vpack.c.b16 %v556, %v554
        %v643 = vpack.c.b16 %v557, %v555
        %v644 = vpack.c.b16 %v560, %v558
        %v645 = vpack.c.b16 %v561, %v559
        %v646 = vpack.c.b16 %v564, %v562
        %v647 = vpack.c.b16 %v565, %v563
        %v648 = vpack.c.b16 %v568, %v566
        %v649 = vpack.c.b16 %v569, %v567
        %v650 = vpack.c.b16 %v572, %v570
        %v651 = vpack.c.b16 %v573, %v571
        %v652 = vpack.c.b16 %v576, %v574
        %v653 = vpack.c.b16 %v577, %v575
        %v654 = vpack.c.b16 %v580, %v578
        %v655 = vpack.c.b16 %v581, %v579
        %v656 = vpack.c.b16 %v584, %v582
        %v657 = vpack.c.b16 %v585, %v583
        %730 = vmatprep.subr.bf16.mxu0 0
        %731 = vmatpush1.bf16.msra.mxu0 %v361
        %732 = vmatprep.subr.bf16.mxu0 0
        %733 = vmatpush1.bf16.msra.mxu0 %v360
        %734 = vmatprep.subr.bf16.mxu0 0
        %735 = vmatpush1.bf16.msra.mxu0 %v359
        %736 = vmatprep.subr.bf16.mxu0 0
        %737 = vmatpush1.bf16.msra.mxu0 %v358
        %738 = vmatprep.subr.bf16.mxu0 0
        %739 = vmatpush1.bf16.msra.mxu0 %v357
        %740 = vmatprep.subr.bf16.mxu0 0
        %741 = vmatpush1.bf16.msra.mxu0 %v356
        %742 = vmatprep.subr.bf16.mxu0 0
        %743 = vmatpush1.bf16.msra.mxu0 %v355
        %744 = vmatprep.subr.bf16.mxu0 0
        %745 = vmatpush1.bf16.msra.mxu0 %v354
        %746 = vmatprep.subr.bf16.mxu0 0
        %747 = vmatpush2.bf16.msra.mxu0 %v369
        %748 = vmatprep.subr.bf16.mxu0 0
        %749 = vmatpush2.bf16.msra.mxu0 %v368
        %750 = vmatprep.subr.bf16.mxu0 0
        %751 = vmatpush2.bf16.msra.mxu0 %v367
        %752 = vmatprep.subr.bf16.mxu0 0
        %753 = vmatpush2.bf16.msra.mxu0 %v366
        %754 = vmatprep.subr.bf16.mxu0 0
        %755 = vmatpush2.bf16.msra.mxu0 %v365
        %756 = vmatprep.subr.bf16.mxu0 0
        %757 = vmatpush2.bf16.msra.mxu0 %v364
        %758 = vmatprep.subr.bf16.mxu0 0
        %759 = vmatpush2.bf16.msra.mxu0 %v363
        %760 = vmatprep.subr.bf16.mxu0 0
        %761 = vmatpush2.bf16.msra.mxu0 %v362
        %762 = vmatprep.mubr.bf16.mxu0 %v587
        %763 = vmatmul.mubr.bf16.gmra.mxu0 %v586
        %v764 = vpop.f32.mrf.mxu0
        %v765 = vadd.f32 0.0, %v764
        %v766 = vpop.f32.mrf.mxu0
        %v767 = vpop.f32.mrf.mxu0
        %v768 = vadd.f32 0.0, %v767
        %v769 = vpop.f32.mrf.mxu0
        %770 = vmatprep.mubr.bf16.mxu0 %v589
        %771 = vmatmul.mubr.bf16.gmra.mxu0 %v588
        %v772 = vpop.f32.mrf.mxu0
        %v773 = vadd.f32 0.0, %v772
        %v774 = vpop.f32.mrf.mxu0
        %v775 = vpop.f32.mrf.mxu0
        %v776 = vadd.f32 0.0, %v775
        %v777 = vpop.f32.mrf.mxu0
        %778 = vmatprep.mubr.bf16.mxu0 %v591
        %779 = vmatmul.mubr.bf16.gmra.mxu0 %v590
        %v780 = vpop.f32.mrf.mxu0
        %v781 = vadd.f32 0.0, %v780
        %v782 = vpop.f32.mrf.mxu0
        %v783 = vpop.f32.mrf.mxu0
        %v784 = vadd.f32 0.0, %v783
        %v785 = vpop.f32.mrf.mxu0
        %786 = vmatprep.mubr.bf16.mxu0 %v593
        %787 = vmatmul.mubr.bf16.gmra.mxu0 %v592
        %v788 = vpop.f32.mrf.mxu0
        %v789 = vadd.f32 0.0, %v788
        %v790 = vpop.f32.mrf.mxu0
        %v791 = vpop.f32.mrf.mxu0
        %v792 = vadd.f32 0.0, %v791
        %v793 = vpop.f32.mrf.mxu0
        %794 = vmatprep.mubr.bf16.mxu0 %v595
        %795 = vmatmul.mubr.bf16.gmra.mxu0 %v594
        %v796 = vpop.f32.mrf.mxu0
        %v797 = vadd.f32 0.0, %v796
        %v798 = vpop.f32.mrf.mxu0
        %v799 = vpop.f32.mrf.mxu0
        %v800 = vadd.f32 0.0, %v799
        %v801 = vpop.f32.mrf.mxu0
        %802 = vmatprep.mubr.bf16.mxu0 %v597
        %803 = vmatmul.mubr.bf16.gmra.mxu0 %v596
        %v804 = vpop.f32.mrf.mxu0
        %v805 = vadd.f32 0.0, %v804
        %v806 = vpop.f32.mrf.mxu0
        %v807 = vpop.f32.mrf.mxu0
        %v808 = vadd.f32 0.0, %v807
        %v809 = vpop.f32.mrf.mxu0
        %810 = vmatprep.mubr.bf16.mxu0 %v599
        %811 = vmatmul.mubr.bf16.gmra.mxu0 %v598
        %v812 = vpop.f32.mrf.mxu0
        %v813 = vadd.f32 0.0, %v812
        %v814 = vpop.f32.mrf.mxu0
        %v815 = vpop.f32.mrf.mxu0
        %v816 = vadd.f32 0.0, %v815
        %v817 = vpop.f32.mrf.mxu0
        %818 = vmatprep.mubr.bf16.mxu0 %v601
        %819 = vmatmul.mubr.bf16.gmra.mxu0 %v600
        %v820 = vpop.f32.mrf.mxu0
        %v821 = vadd.f32 0.0, %v820
        %v822 = vpop.f32.mrf.mxu0
        %v823 = vpop.f32.mrf.mxu0
        %v824 = vadd.f32 0.0, %v823
        %v825 = vpop.f32.mrf.mxu0
        %826 = vmatprep.mubr.bf16.mxu0 %v603
        %827 = vmatmul.mubr.bf16.gmra.mxu0 %v602
        %v828 = vpop.f32.mrf.mxu0
        %v829 = vadd.f32 0.0, %v828
        %v830 = vpop.f32.mrf.mxu0
        %v831 = vpop.f32.mrf.mxu0
        %v832 = vadd.f32 0.0, %v831
        %v833 = vpop.f32.mrf.mxu0
        %834 = vmatprep.mubr.bf16.mxu0 %v605
        %835 = vmatmul.mubr.bf16.gmra.mxu0 %v604
        %v836 = vpop.f32.mrf.mxu0
        %v837 = vadd.f32 0.0, %v836
        %v838 = vpop.f32.mrf.mxu0
        %v839 = vpop.f32.mrf.mxu0
        %v840 = vadd.f32 0.0, %v839
        %v841 = vpop.f32.mrf.mxu0
        %842 = vmatprep.mubr.bf16.mxu0 %v607
        %843 = vmatmul.mubr.bf16.gmra.mxu0 %v606
        %v844 = vpop.f32.mrf.mxu0
        %v845 = vadd.f32 0.0, %v844
        %v846 = vpop.f32.mrf.mxu0
        %v847 = vpop.f32.mrf.mxu0
        %v848 = vadd.f32 0.0, %v847
        %v849 = vpop.f32.mrf.mxu0
        %850 = vmatprep.mubr.bf16.mxu0 %v609
        %851 = vmatmul.mubr.bf16.gmra.mxu0 %v608
        %v852 = vpop.f32.mrf.mxu0
        %v853 = vadd.f32 0.0, %v852
        %v854 = vpop.f32.mrf.mxu0
        %v855 = vpop.f32.mrf.mxu0
        %v856 = vadd.f32 0.0, %v855
        %v857 = vpop.f32.mrf.mxu0
        %858 = vmatprep.mubr.bf16.mxu0 %v611
        %859 = vmatmul.mubr.bf16.gmra.mxu0 %v610
        %v860 = vpop.f32.mrf.mxu0
        %v861 = vadd.f32 0.0, %v860
        %v862 = vpop.f32.mrf.mxu0
        %v863 = vpop.f32.mrf.mxu0
        %v864 = vadd.f32 0.0, %v863
        %v865 = vpop.f32.mrf.mxu0
        %866 = vmatprep.mubr.bf16.mxu0 %v613
        %867 = vmatmul.mubr.bf16.gmra.mxu0 %v612
        %v868 = vpop.f32.mrf.mxu0
        %v869 = vadd.f32 0.0, %v868
        %v870 = vpop.f32.mrf.mxu0
        %v871 = vpop.f32.mrf.mxu0
        %v872 = vadd.f32 0.0, %v871
        %v873 = vpop.f32.mrf.mxu0
        %874 = vmatprep.mubr.bf16.mxu0 %v615
        %875 = vmatmul.mubr.bf16.gmra.mxu0 %v614
        %v876 = vpop.f32.mrf.mxu0
        %v877 = vadd.f32 0.0, %v876
        %v878 = vpop.f32.mrf.mxu0
        %v879 = vpop.f32.mrf.mxu0
        %v880 = vadd.f32 0.0, %v879
        %v881 = vpop.f32.mrf.mxu0
        %882 = vmatprep.mubr.bf16.mxu0 %v617
        %883 = vmatmul.mubr.bf16.gmra.mxu0 %v616
        %v884 = vpop.f32.mrf.mxu0
        %v885 = vadd.f32 0.0, %v884
        %v886 = vpop.f32.mrf.mxu0
        %v887 = vpop.f32.mrf.mxu0
        %v888 = vadd.f32 0.0, %v887
        %v889 = vpop.f32.mrf.mxu0
        %890 = vmatprep.mubr.bf16.mxu0 %v619
        %891 = vmatmul.mubr.bf16.gmra.mxu0 %v618
        %v892 = vpop.f32.mrf.mxu0
        %v893 = vadd.f32 0.0, %v892
        %v894 = vpop.f32.mrf.mxu0
        %v895 = vpop.f32.mrf.mxu0
        %v896 = vadd.f32 0.0, %v895
        %v897 = vpop.f32.mrf.mxu0
        %898 = vmatprep.mubr.bf16.mxu0 %v621
        %899 = vmatmul.mubr.bf16.gmra.mxu0 %v620
        %v900 = vpop.f32.mrf.mxu0
        %v901 = vadd.f32 0.0, %v900
        %v902 = vpop.f32.mrf.mxu0
        %v903 = vpop.f32.mrf.mxu0
        %v904 = vadd.f32 0.0, %v903
        %v905 = vpop.f32.mrf.mxu0
        %906 = vmatprep.mubr.bf16.mxu0 %v623
        %907 = vmatmul.mubr.bf16.gmra.mxu0 %v622
        %v908 = vpop.f32.mrf.mxu0
        %v909 = vadd.f32 0.0, %v908
        %v910 = vpop.f32.mrf.mxu0
        %v911 = vpop.f32.mrf.mxu0
        %v912 = vadd.f32 0.0, %v911
        %v913 = vpop.f32.mrf.mxu0
        %914 = vmatprep.mubr.bf16.mxu0 %v625
        %915 = vmatmul.mubr.bf16.gmra.mxu0 %v624
        %v916 = vpop.f32.mrf.mxu0
        %v917 = vadd.f32 0.0, %v916
        %v918 = vpop.f32.mrf.mxu0
        %v919 = vpop.f32.mrf.mxu0
        %v920 = vadd.f32 0.0, %v919
        %v921 = vpop.f32.mrf.mxu0
        %922 = vmatprep.mubr.bf16.mxu0 %v627
        %923 = vmatmul.mubr.bf16.gmra.mxu0 %v626
        %v924 = vpop.f32.mrf.mxu0
        %v925 = vadd.f32 0.0, %v924
        %v926 = vpop.f32.mrf.mxu0
        %v927 = vpop.f32.mrf.mxu0
        %v928 = vadd.f32 0.0, %v927
        %v929 = vpop.f32.mrf.mxu0
        %930 = vmatprep.mubr.bf16.mxu0 %v629
        %931 = vmatmul.mubr.bf16.gmra.mxu0 %v628
        %v932 = vpop.f32.mrf.mxu0
        %v933 = vadd.f32 0.0, %v932
        %v934 = vpop.f32.mrf.mxu0
        %v935 = vpop.f32.mrf.mxu0
        %v936 = vadd.f32 0.0, %v935
        %v937 = vpop.f32.mrf.mxu0
        %938 = vmatprep.mubr.bf16.mxu0 %v631
        %939 = vmatmul.mubr.bf16.gmra.mxu0 %v630
        %v940 = vpop.f32.mrf.mxu0
        %v941 = vadd.f32 0.0, %v940
        %v942 = vpop.f32.mrf.mxu0
        %v943 = vpop.f32.mrf.mxu0
        %v944 = vadd.f32 0.0, %v943
        %v945 = vpop.f32.mrf.mxu0
        %946 = vmatprep.mubr.bf16.mxu0 %v633
        %947 = vmatmul.mubr.bf16.gmra.mxu0 %v632
        %v948 = vpop.f32.mrf.mxu0
        %v949 = vadd.f32 0.0, %v948
        %v950 = vpop.f32.mrf.mxu0
        %v951 = vpop.f32.mrf.mxu0
        %v952 = vadd.f32 0.0, %v951
        %v953 = vpop.f32.mrf.mxu0
        %954 = vmatprep.mubr.bf16.mxu0 %v635
        %955 = vmatmul.mubr.bf16.gmra.mxu0 %v634
        %v956 = vpop.f32.mrf.mxu0
        %v957 = vadd.f32 0.0, %v956
        %v958 = vpop.f32.mrf.mxu0
        %v959 = vpop.f32.mrf.mxu0
        %v960 = vadd.f32 0.0, %v959
        %v961 = vpop.f32.mrf.mxu0
        %962 = vmatprep.mubr.bf16.mxu0 %v637
        %963 = vmatmul.mubr.bf16.gmra.mxu0 %v636
        %v964 = vpop.f32.mrf.mxu0
        %v965 = vadd.f32 0.0, %v964
        %v966 = vpop.f32.mrf.mxu0
        %v967 = vpop.f32.mrf.mxu0
        %v968 = vadd.f32 0.0, %v967
        %v969 = vpop.f32.mrf.mxu0
        %970 = vmatprep.mubr.bf16.mxu0 %v639
        %971 = vmatmul.mubr.bf16.gmra.mxu0 %v638
        %v972 = vpop.f32.mrf.mxu0
        %v973 = vadd.f32 0.0, %v972
        %v974 = vpop.f32.mrf.mxu0
        %v975 = vpop.f32.mrf.mxu0
        %v976 = vadd.f32 0.0, %v975
        %v977 = vpop.f32.mrf.mxu0
        %978 = vmatprep.mubr.bf16.mxu0 %v641
        %979 = vmatmul.mubr.bf16.gmra.mxu0 %v640
        %v980 = vpop.f32.mrf.mxu0
        %v981 = vadd.f32 0.0, %v980
        %v982 = vpop.f32.mrf.mxu0
        %v983 = vpop.f32.mrf.mxu0
        %v984 = vadd.f32 0.0, %v983
        %v985 = vpop.f32.mrf.mxu0
        %986 = vmatprep.mubr.bf16.mxu0 %v643
        %987 = vmatmul.mubr.bf16.gmra.mxu0 %v642
        %v988 = vpop.f32.mrf.mxu0
        %v989 = vadd.f32 0.0, %v988
        %v990 = vpop.f32.mrf.mxu0
        %v991 = vpop.f32.mrf.mxu0
        %v992 = vadd.f32 0.0, %v991
        %v993 = vpop.f32.mrf.mxu0
        %994 = vmatprep.mubr.bf16.mxu0 %v645
        %995 = vmatmul.mubr.bf16.gmra.mxu0 %v644
        %v996 = vpop.f32.mrf.mxu0
        %v997 = vadd.f32 0.0, %v996
        %v998 = vpop.f32.mrf.mxu0
        %v999 = vpop.f32.mrf.mxu0
        %v1000 = vadd.f32 0.0, %v999
        %v1001 = vpop.f32.mrf.mxu0
        %1002 = vmatprep.mubr.bf16.mxu0 %v647
        %1003 = vmatmul.mubr.bf16.gmra.mxu0 %v646
        %v1004 = vpop.f32.mrf.mxu0
        %v1005 = vadd.f32 0.0, %v1004
        %v1006 = vpop.f32.mrf.mxu0
        %v1007 = vpop.f32.mrf.mxu0
        %v1008 = vadd.f32 0.0, %v1007
        %v1009 = vpop.f32.mrf.mxu0
        %1010 = vmatprep.mubr.bf16.mxu0 %v649
        %1011 = vmatmul.mubr.bf16.gmra.mxu0 %v648
        %v1012 = vpop.f32.mrf.mxu0
        %v1013 = vadd.f32 0.0, %v1012
        %v1014 = vpop.f32.mrf.mxu0
        %v1015 = vpop.f32.mrf.mxu0
        %v1016 = vadd.f32 0.0, %v1015
        %v1017 = vpop.f32.mrf.mxu0
        %1018 = vmatprep.mubr.bf16.mxu0 %v651
        %1019 = vmatmul.mubr.bf16.gmra.mxu0 %v650
        %v1020 = vpop.f32.mrf.mxu0
        %v1021 = vadd.f32 0.0, %v1020
        %v1022 = vpop.f32.mrf.mxu0
        %v1023 = vpop.f32.mrf.mxu0
        %v1024 = vadd.f32 0.0, %v1023
        %v1025 = vpop.f32.mrf.mxu0
        %1026 = vmatprep.mubr.bf16.mxu0 %v653
        %1027 = vmatmul.mubr.bf16.gmra.mxu0 %v652
        %v1028 = vpop.f32.mrf.mxu0
        %v1029 = vadd.f32 0.0, %v1028
        %v1030 = vpop.f32.mrf.mxu0
        %v1031 = vpop.f32.mrf.mxu0
        %v1032 = vadd.f32 0.0, %v1031
        %v1033 = vpop.f32.mrf.mxu0
        %1034 = vmatprep.mubr.bf16.mxu0 %v655
        %1035 = vmatmul.mubr.bf16.gmra.mxu0 %v654
        %v1036 = vpop.f32.mrf.mxu0
        %v1037 = vadd.f32 0.0, %v1036
        %v1038 = vpop.f32.mrf.mxu0
        %v1039 = vpop.f32.mrf.mxu0
        %v1040 = vadd.f32 0.0, %v1039
        %v1041 = vpop.f32.mrf.mxu0
        %1042 = vmatprep.mubr.bf16.mxu0 %v657
        %1043 = vmatmul.mubr.bf16.gmra.mxu0 %v656
        %v1044 = vpop.f32.mrf.mxu0
        %v1045 = vadd.f32 0.0, %v1044
        %v1046 = vpop.f32.mrf.mxu0
        %v1047 = vpop.f32.mrf.mxu0
        %v1048 = vadd.f32 0.0, %v1047
        %v1049 = vpop.f32.mrf.mxu0
        %1050 = vdwg.mxu0
        %v1051 = vpack.c.bf16 %v768, %v765
        %v1052 = vpack.c.bf16 %v776, %v773
        %v1053 = vpack.c.bf16 %v784, %v781
        %v1054 = vpack.c.bf16 %v792, %v789
        %v1055 = vld [vmem:[%s4] sm:$0x3]
        %v1056 = vpack.c.bf16 %v800, %v797
        %v1057 = vpack.c.bf16 %v808, %v805
        %v1058 = vpack.c.bf16 %v816, %v813
        %v1059 = vpack.c.bf16 %v824, %v821
        %v1060 = vld [vmem:[%s4 + $0x4] sm:$0x3]
        %vm1061 = vcmask 23552
        %v1063 = vsel %vm1061, %v1056, 0
        %v1066 = vsel %vm1061, %v1057, 0
        %v1069 = vsel %vm1061, %v1058, 0
        %v1072 = vsel %vm1061, %v1059, 0
        %vm1074 = vcmask 1040384
        %vm1075 = vcmask 1041408
        %v1076 = vsel %vm1074, 4294967295, 65535
        %v1077 = vsel %vm1075, %v1076, 0
        %v1079 = vand.u32 %v1060, %v1077
        %1081 = vmatprep.subr.bf16.mxu0 0
        %1082 = vmatpush1.bf16.msra.mxu0 0
        %1083 = vmatprep.subr.bf16.mxu0 0
        %1084 = vmatpush1.bf16.msra.mxu0 0
        %1085 = vmatprep.subr.bf16.mxu0 0
        %1086 = vmatpush1.bf16.msra.mxu0 0
        %1087 = vmatprep.subr.bf16.mxu0 0
        %1088 = vmatpush1.bf16.msra.mxu0 0
        %1089 = vmatprep.subr.bf16.mxu0 0
        %1090 = vmatpush1.bf16.msra.mxu0 0
        %1091 = vmatprep.subr.bf16.mxu0 0
        %1092 = vmatpush1.bf16.msra.mxu0 0
        %1093 = vmatprep.subr.bf16.mxu0 0
        %1094 = vmatpush1.bf16.msra.mxu0 0
        %1095 = vmatprep.subr.bf16.mxu0 0
        %1096 = vmatpush1.bf16.msra.mxu0 %v1079
        %1097 = vmatprep.subr.bf16.mxu0 0
        %1098 = vmatpush2.bf16.msra.mxu0 0
        %1099 = vmatprep.subr.bf16.mxu0 0
        %1100 = vmatpush2.bf16.msra.mxu0 0
        %1101 = vmatprep.subr.bf16.mxu0 0
        %1102 = vmatpush2.bf16.msra.mxu0 0
        %1103 = vmatprep.subr.bf16.mxu0 0
        %1104 = vmatpush2.bf16.msra.mxu0 0
        %1105 = vmatprep.subr.bf16.mxu0 0
        %1106 = vmatpush2.bf16.msra.mxu0 0
        %1107 = vmatprep.subr.bf16.mxu0 0
        %1108 = vmatpush2.bf16.msra.mxu0 0
        %1109 = vmatprep.subr.bf16.mxu0 0
        %1110 = vmatpush2.bf16.msra.mxu0 0
        %1111 = vmatprep.subr.bf16.mxu0 0
        %1112 = vmatpush2.bf16.msra.mxu0 0
        %1113 = vmatprep.mubr.bf16.mxu0 0
        %1114 = vmatmul.mubr.bf16.gmra.mxu0 %v1063
        %v1115 = vpop.f32.mrf.mxu0
        %v1116 = vadd.f32 0.0, %v1115
        %v1117 = vpop.f32.mrf.mxu0
        %v1118 = vpop.f32.mrf.mxu0
        %v1119 = vadd.f32 0.0, %v1118
        %v1120 = vpop.f32.mrf.mxu0
        %1121 = vmatprep.mubr.bf16.mxu0 0
        %1122 = vmatmul.mubr.bf16.gmra.mxu0 %v1066
        %v1123 = vpop.f32.mrf.mxu0
        %v1124 = vadd.f32 0.0, %v1123
        %v1125 = vpop.f32.mrf.mxu0
        %v1126 = vpop.f32.mrf.mxu0
        %v1127 = vadd.f32 0.0, %v1126
        %v1128 = vpop.f32.mrf.mxu0
        %1129 = vmatprep.mubr.bf16.mxu0 0
        %1130 = vmatmul.mubr.bf16.gmra.mxu0 %v1069
        %v1131 = vpop.f32.mrf.mxu0
        %v1132 = vadd.f32 0.0, %v1131
        %v1133 = vpop.f32.mrf.mxu0
        %v1134 = vpop.f32.mrf.mxu0
        %v1135 = vadd.f32 0.0, %v1134
        %v1136 = vpop.f32.mrf.mxu0
        %1137 = vmatprep.mubr.bf16.mxu0 0
        %1138 = vmatmul.mubr.bf16.gmra.mxu0 %v1072
        %v1139 = vpop.f32.mrf.mxu0
        %v1140 = vadd.f32 0.0, %v1139
        %v1141 = vpop.f32.mrf.mxu0
        %v1142 = vpop.f32.mrf.mxu0
        %v1143 = vadd.f32 0.0, %v1142
        %v1144 = vpop.f32.mrf.mxu0
        %1145 = vdwg.mxu0
        %v1147 = vsel %vm1061, %v1051, 0
        %v1150 = vsel %vm1061, %v1052, 0
        %v1153 = vsel %vm1061, %v1053, 0
        %v1156 = vsel %vm1061, %v1054, 0
        %v1159 = vand.u32 %v1055, %v1077
        %1161 = vmatprep.subr.bf16.mxu0 0
        %1162 = vmatpush1.bf16.msra.mxu0 0
        %1163 = vmatprep.subr.bf16.mxu0 0
        %1164 = vmatpush1.bf16.msra.mxu0 0
        %1165 = vmatprep.subr.bf16.mxu0 0
        %1166 = vmatpush1.bf16.msra.mxu0 0
        %1167 = vmatprep.subr.bf16.mxu0 0
        %1168 = vmatpush1.bf16.msra.mxu0 0
        %1169 = vmatprep.subr.bf16.mxu0 0
        %1170 = vmatpush1.bf16.msra.mxu0 0
        %1171 = vmatprep.subr.bf16.mxu0 0
        %1172 = vmatpush1.bf16.msra.mxu0 0
        %1173 = vmatprep.subr.bf16.mxu0 0
        %1174 = vmatpush1.bf16.msra.mxu0 0
        %1175 = vmatprep.subr.bf16.mxu0 0
        %1176 = vmatpush1.bf16.msra.mxu0 %v1159
        %1177 = vmatprep.subr.bf16.mxu0 0
        %1178 = vmatpush2.bf16.msra.mxu0 0
        %1179 = vmatprep.subr.bf16.mxu0 0
        %1180 = vmatpush2.bf16.msra.mxu0 0
        %1181 = vmatprep.subr.bf16.mxu0 0
        %1182 = vmatpush2.bf16.msra.mxu0 0
        %1183 = vmatprep.subr.bf16.mxu0 0
        %1184 = vmatpush2.bf16.msra.mxu0 0
        %1185 = vmatprep.subr.bf16.mxu0 0
        %1186 = vmatpush2.bf16.msra.mxu0 0
        %1187 = vmatprep.subr.bf16.mxu0 0
        %1188 = vmatpush2.bf16.msra.mxu0 0
        %1189 = vmatprep.subr.bf16.mxu0 0
        %1190 = vmatpush2.bf16.msra.mxu0 0
        %1191 = vmatprep.subr.bf16.mxu0 0
        %1192 = vmatpush2.bf16.msra.mxu0 0
        %1193 = vmatprep.mubr.bf16.mxu0 0
        %1194 = vmatmul.mubr.bf16.gmra.mxu0 %v1147
        %v1195 = vpop.f32.mrf.mxu0
        %v1196 = vadd.f32 %v1116, %v1195
        %v1197 = vpop.f32.mrf.mxu0
        %v1198 = vpop.f32.mrf.mxu0
        %v1199 = vadd.f32 %v1119, %v1198
        %v1200 = vpop.f32.mrf.mxu0
        %1201 = vmatprep.mubr.bf16.mxu0 0
        %1202 = vmatmul.mubr.bf16.gmra.mxu0 %v1150
        %v1203 = vpop.f32.mrf.mxu0
        %v1204 = vadd.f32 %v1124, %v1203
        %v1205 = vpop.f32.mrf.mxu0
        %v1206 = vpop.f32.mrf.mxu0
        %v1207 = vadd.f32 %v1127, %v1206
        %v1208 = vpop.f32.mrf.mxu0
        %1209 = vmatprep.mubr.bf16.mxu0 0
        %1210 = vmatmul.mubr.bf16.gmra.mxu0 %v1153
        %v1211 = vpop.f32.mrf.mxu0
        %v1212 = vadd.f32 %v1132, %v1211
        %v1213 = vpop.f32.mrf.mxu0
        %v1214 = vpop.f32.mrf.mxu0
        %v1215 = vadd.f32 %v1135, %v1214
        %v1216 = vpop.f32.mrf.mxu0
        %1217 = vmatprep.mubr.bf16.mxu0 0
        %1218 = vmatmul.mubr.bf16.gmra.mxu0 %v1156
        %v1219 = vpop.f32.mrf.mxu0
        %v1220 = vadd.f32 %v1140, %v1219
        %v1221 = vpop.f32.mrf.mxu0
        %v1222 = vpop.f32.mrf.mxu0
        %v1223 = vadd.f32 %v1143, %v1222
        %v1224 = vpop.f32.mrf.mxu0
        %1225 = vdwg.mxu0
        %v1226 = vpack.c.bf16 %v832, %v829
        %v1227 = vpack.c.bf16 %v840, %v837
        %v1228 = vpack.c.bf16 %v848, %v845
        %v1229 = vpack.c.bf16 %v856, %v853
        %v1230 = vld [vmem:[%s4 + $0x8] sm:$0x3]
        %v1232 = vsel %vm1061, %v1226, 0
        %v1235 = vsel %vm1061, %v1227, 0
        %v1238 = vsel %vm1061, %v1228, 0
        %v1241 = vsel %vm1061, %v1229, 0
        %v1244 = vand.u32 %v1230, %v1077
        %1246 = vmatprep.subr.bf16.mxu0 0
        %1247 = vmatpush1.bf16.msra.mxu0 0
        %1248 = vmatprep.subr.bf16.mxu0 0
        %1249 = vmatpush1.bf16.msra.mxu0 0
        %1250 = vmatprep.subr.bf16.mxu0 0
        %1251 = vmatpush1.bf16.msra.mxu0 0
        %1252 = vmatprep.subr.bf16.mxu0 0
        %1253 = vmatpush1.bf16.msra.mxu0 0
        %1254 = vmatprep.subr.bf16.mxu0 0
        %1255 = vmatpush1.bf16.msra.mxu0 0
        %1256 = vmatprep.subr.bf16.mxu0 0
        %1257 = vmatpush1.bf16.msra.mxu0 0
        %1258 = vmatprep.subr.bf16.mxu0 0
        %1259 = vmatpush1.bf16.msra.mxu0 0
        %1260 = vmatprep.subr.bf16.mxu0 0
        %1261 = vmatpush1.bf16.msra.mxu0 %v1244
        %1262 = vmatprep.subr.bf16.mxu0 0
        %1263 = vmatpush2.bf16.msra.mxu0 0
        %1264 = vmatprep.subr.bf16.mxu0 0
        %1265 = vmatpush2.bf16.msra.mxu0 0
        %1266 = vmatprep.subr.bf16.mxu0 0
        %1267 = vmatpush2.bf16.msra.mxu0 0
        %1268 = vmatprep.subr.bf16.mxu0 0
        %1269 = vmatpush2.bf16.msra.mxu0 0
        %1270 = vmatprep.subr.bf16.mxu0 0
        %1271 = vmatpush2.bf16.msra.mxu0 0
        %1272 = vmatprep.subr.bf16.mxu0 0
        %1273 = vmatpush2.bf16.msra.mxu0 0
        %1274 = vmatprep.subr.bf16.mxu0 0
        %1275 = vmatpush2.bf16.msra.mxu0 0
        %1276 = vmatprep.subr.bf16.mxu0 0
        %1277 = vmatpush2.bf16.msra.mxu0 0
        %1278 = vmatprep.mubr.bf16.mxu0 0
        %1279 = vmatmul.mubr.bf16.gmra.mxu0 %v1232
        %v1280 = vpop.f32.mrf.mxu0
        %v1281 = vadd.f32 0.0, %v1280
        %v1282 = vpop.f32.mrf.mxu0
        %v1283 = vpop.f32.mrf.mxu0
        %v1284 = vadd.f32 0.0, %v1283
        %v1285 = vpop.f32.mrf.mxu0
        %1286 = vmatprep.mubr.bf16.mxu0 0
        %1287 = vmatmul.mubr.bf16.gmra.mxu0 %v1235
        %v1288 = vpop.f32.mrf.mxu0
        %v1289 = vadd.f32 0.0, %v1288
        %v1290 = vpop.f32.mrf.mxu0
        %v1291 = vpop.f32.mrf.mxu0
        %v1292 = vadd.f32 0.0, %v1291
        %v1293 = vpop.f32.mrf.mxu0
        %1294 = vmatprep.mubr.bf16.mxu0 0
        %1295 = vmatmul.mubr.bf16.gmra.mxu0 %v1238
        %v1296 = vpop.f32.mrf.mxu0
        %v1297 = vadd.f32 0.0, %v1296
        %v1298 = vpop.f32.mrf.mxu0
        %v1299 = vpop.f32.mrf.mxu0
        %v1300 = vadd.f32 0.0, %v1299
        %v1301 = vpop.f32.mrf.mxu0
        %1302 = vmatprep.mubr.bf16.mxu0 0
        %1303 = vmatmul.mubr.bf16.gmra.mxu0 %v1241
        %v1304 = vpop.f32.mrf.mxu0
        %v1305 = vadd.f32 0.0, %v1304
        %v1306 = vpop.f32.mrf.mxu0
        %v1307 = vpop.f32.mrf.mxu0
        %v1308 = vadd.f32 0.0, %v1307
        %v1309 = vpop.f32.mrf.mxu0
        %1310 = vdwg.mxu0
        %v1311 = vadd.f32 %v1196, %v1281
        %v1312 = vadd.f32 %v1199, %v1284
        %v1313 = vadd.f32 %v1204, %v1289
        %v1314 = vadd.f32 %v1207, %v1292
        %v1315 = vadd.f32 %v1212, %v1297
        %v1316 = vadd.f32 %v1215, %v1300
        %v1317 = vadd.f32 %v1220, %v1305
        %v1318 = vadd.f32 %v1223, %v1308
        %v1319 = vpack.c.bf16 %v864, %v861
        %v1320 = vpack.c.bf16 %v872, %v869
        %v1321 = vpack.c.bf16 %v880, %v877
        %v1322 = vpack.c.bf16 %v888, %v885
        %v1323 = vld [vmem:[%s4 + $0xc] sm:$0x3]
        %v1325 = vsel %vm1061, %v1319, 0
        %v1328 = vsel %vm1061, %v1320, 0
        %v1331 = vsel %vm1061, %v1321, 0
        %v1334 = vsel %vm1061, %v1322, 0
        %v1337 = vand.u32 %v1323, %v1077
        %1339 = vmatprep.subr.bf16.mxu0 0
        %1340 = vmatpush1.bf16.msra.mxu0 0
        %1341 = vmatprep.subr.bf16.mxu0 0
        %1342 = vmatpush1.bf16.msra.mxu0 0
        %1343 = vmatprep.subr.bf16.mxu0 0
        %1344 = vmatpush1.bf16.msra.mxu0 0
        %1345 = vmatprep.subr.bf16.mxu0 0
        %1346 = vmatpush1.bf16.msra.mxu0 0
        %1347 = vmatprep.subr.bf16.mxu0 0
        %1348 = vmatpush1.bf16.msra.mxu0 0
        %1349 = vmatprep.subr.bf16.mxu0 0
        %1350 = vmatpush1.bf16.msra.mxu0 0
        %1351 = vmatprep.subr.bf16.mxu0 0
        %1352 = vmatpush1.bf16.msra.mxu0 0
        %1353 = vmatprep.subr.bf16.mxu0 0
        %1354 = vmatpush1.bf16.msra.mxu0 %v1337
        %1355 = vmatprep.subr.bf16.mxu0 0
        %1356 = vmatpush2.bf16.msra.mxu0 0
        %1357 = vmatprep.subr.bf16.mxu0 0
        %1358 = vmatpush2.bf16.msra.mxu0 0
        %1359 = vmatprep.subr.bf16.mxu0 0
        %1360 = vmatpush2.bf16.msra.mxu0 0
        %1361 = vmatprep.subr.bf16.mxu0 0
        %1362 = vmatpush2.bf16.msra.mxu0 0
        %1363 = vmatprep.subr.bf16.mxu0 0
        %1364 = vmatpush2.bf16.msra.mxu0 0
        %1365 = vmatprep.subr.bf16.mxu0 0
        %1366 = vmatpush2.bf16.msra.mxu0 0
        %1367 = vmatprep.subr.bf16.mxu0 0
        %1368 = vmatpush2.bf16.msra.mxu0 0
        %1369 = vmatprep.subr.bf16.mxu0 0
        %1370 = vmatpush2.bf16.msra.mxu0 0
        %1371 = vmatprep.mubr.bf16.mxu0 0
        %1372 = vmatmul.mubr.bf16.gmra.mxu0 %v1325
        %v1373 = vpop.f32.mrf.mxu0
        %v1374 = vadd.f32 0.0, %v1373
        %v1375 = vpop.f32.mrf.mxu0
        %v1376 = vpop.f32.mrf.mxu0
        %v1377 = vadd.f32 0.0, %v1376
        %v1378 = vpop.f32.mrf.mxu0
        %1379 = vmatprep.mubr.bf16.mxu0 0
        %1380 = vmatmul.mubr.bf16.gmra.mxu0 %v1328
        %v1381 = vpop.f32.mrf.mxu0
        %v1382 = vadd.f32 0.0, %v1381
        %v1383 = vpop.f32.mrf.mxu0
        %v1384 = vpop.f32.mrf.mxu0
        %v1385 = vadd.f32 0.0, %v1384
        %v1386 = vpop.f32.mrf.mxu0
        %1387 = vmatprep.mubr.bf16.mxu0 0
        %1388 = vmatmul.mubr.bf16.gmra.mxu0 %v1331
        %v1389 = vpop.f32.mrf.mxu0
        %v1390 = vadd.f32 0.0, %v1389
        %v1391 = vpop.f32.mrf.mxu0
        %v1392 = vpop.f32.mrf.mxu0
        %v1393 = vadd.f32 0.0, %v1392
        %v1394 = vpop.f32.mrf.mxu0
        %1395 = vmatprep.mubr.bf16.mxu0 0
        %1396 = vmatmul.mubr.bf16.gmra.mxu0 %v1334
        %v1397 = vpop.f32.mrf.mxu0
        %v1398 = vadd.f32 0.0, %v1397
        %v1399 = vpop.f32.mrf.mxu0
        %v1400 = vpop.f32.mrf.mxu0
        %v1401 = vadd.f32 0.0, %v1400
        %v1402 = vpop.f32.mrf.mxu0
        %1403 = vdwg.mxu0
        %v1404 = vadd.f32 %v1311, %v1374
        %v1405 = vadd.f32 %v1312, %v1377
        %v1406 = vadd.f32 %v1313, %v1382
        %v1407 = vadd.f32 %v1314, %v1385
        %v1408 = vadd.f32 %v1315, %v1390
        %v1409 = vadd.f32 %v1316, %v1393
        %v1410 = vadd.f32 %v1317, %v1398
        %v1411 = vadd.f32 %v1318, %v1401
        %v1412 = vpack.c.bf16 %v896, %v893
        %v1413 = vpack.c.bf16 %v904, %v901
        %v1414 = vpack.c.bf16 %v912, %v909
        %v1415 = vpack.c.bf16 %v920, %v917
        %v1416 = vld [vmem:[%s4 + $0x10] sm:$0x3]
        %v1418 = vsel %vm1061, %v1412, 0
        %v1421 = vsel %vm1061, %v1413, 0
        %v1424 = vsel %vm1061, %v1414, 0
        %v1427 = vsel %vm1061, %v1415, 0
        %v1430 = vand.u32 %v1416, %v1077
        %1432 = vmatprep.subr.bf16.mxu0 0
        %1433 = vmatpush1.bf16.msra.mxu0 0
        %1434 = vmatprep.subr.bf16.mxu0 0
        %1435 = vmatpush1.bf16.msra.mxu0 0
        %1436 = vmatprep.subr.bf16.mxu0 0
        %1437 = vmatpush1.bf16.msra.mxu0 0
        %1438 = vmatprep.subr.bf16.mxu0 0
        %1439 = vmatpush1.bf16.msra.mxu0 0
        %1440 = vmatprep.subr.bf16.mxu0 0
        %1441 = vmatpush1.bf16.msra.mxu0 0
        %1442 = vmatprep.subr.bf16.mxu0 0
        %1443 = vmatpush1.bf16.msra.mxu0 0
        %1444 = vmatprep.subr.bf16.mxu0 0
        %1445 = vmatpush1.bf16.msra.mxu0 0
        %1446 = vmatprep.subr.bf16.mxu0 0
        %1447 = vmatpush1.bf16.msra.mxu0 %v1430
        %1448 = vmatprep.subr.bf16.mxu0 0
        %1449 = vmatpush2.bf16.msra.mxu0 0
        %1450 = vmatprep.subr.bf16.mxu0 0
        %1451 = vmatpush2.bf16.msra.mxu0 0
        %1452 = vmatprep.subr.bf16.mxu0 0
        %1453 = vmatpush2.bf16.msra.mxu0 0
        %1454 = vmatprep.subr.bf16.mxu0 0
        %1455 = vmatpush2.bf16.msra.mxu0 0
        %1456 = vmatprep.subr.bf16.mxu0 0
        %1457 = vmatpush2.bf16.msra.mxu0 0
        %1458 = vmatprep.subr.bf16.mxu0 0
        %1459 = vmatpush2.bf16.msra.mxu0 0
        %1460 = vmatprep.subr.bf16.mxu0 0
        %1461 = vmatpush2.bf16.msra.mxu0 0
        %1462 = vmatprep.subr.bf16.mxu0 0
        %1463 = vmatpush2.bf16.msra.mxu0 0
        %1464 = vmatprep.mubr.bf16.mxu0 0
        %1465 = vmatmul.mubr.bf16.gmra.mxu0 %v1418
        %v1466 = vpop.f32.mrf.mxu0
        %v1467 = vadd.f32 0.0, %v1466
        %v1468 = vpop.f32.mrf.mxu0
        %v1469 = vpop.f32.mrf.mxu0
        %v1470 = vadd.f32 0.0, %v1469
        %v1471 = vpop.f32.mrf.mxu0
        %1472 = vmatprep.mubr.bf16.mxu0 0
        %1473 = vmatmul.mubr.bf16.gmra.mxu0 %v1421
        %v1474 = vpop.f32.mrf.mxu0
        %v1475 = vadd.f32 0.0, %v1474
        %v1476 = vpop.f32.mrf.mxu0
        %v1477 = vpop.f32.mrf.mxu0
        %v1478 = vadd.f32 0.0, %v1477
        %v1479 = vpop.f32.mrf.mxu0
        %1480 = vmatprep.mubr.bf16.mxu0 0
        %1481 = vmatmul.mubr.bf16.gmra.mxu0 %v1424
        %v1482 = vpop.f32.mrf.mxu0
        %v1483 = vadd.f32 0.0, %v1482
        %v1484 = vpop.f32.mrf.mxu0
        %v1485 = vpop.f32.mrf.mxu0
        %v1486 = vadd.f32 0.0, %v1485
        %v1487 = vpop.f32.mrf.mxu0
        %1488 = vmatprep.mubr.bf16.mxu0 0
        %1489 = vmatmul.mubr.bf16.gmra.mxu0 %v1427
        %v1490 = vpop.f32.mrf.mxu0
        %v1491 = vadd.f32 0.0, %v1490
        %v1492 = vpop.f32.mrf.mxu0
        %v1493 = vpop.f32.mrf.mxu0
        %v1494 = vadd.f32 0.0, %v1493
        %v1495 = vpop.f32.mrf.mxu0
        %1496 = vdwg.mxu0
        %v1497 = vadd.f32 %v1404, %v1467
        %v1498 = vadd.f32 %v1405, %v1470
        %v1499 = vadd.f32 %v1406, %v1475
        %v1500 = vadd.f32 %v1407, %v1478
        %v1501 = vadd.f32 %v1408, %v1483
        %v1502 = vadd.f32 %v1409, %v1486
        %v1503 = vadd.f32 %v1410, %v1491
        %v1504 = vadd.f32 %v1411, %v1494
        %v1505 = vpack.c.bf16 %v928, %v925
        %v1506 = vpack.c.bf16 %v936, %v933
        %v1507 = vpack.c.bf16 %v944, %v941
        %v1508 = vpack.c.bf16 %v952, %v949
        %v1509 = vld [vmem:[%s4 + $0x14] sm:$0x3]
        %v1511 = vsel %vm1061, %v1505, 0
        %v1514 = vsel %vm1061, %v1506, 0
        %v1517 = vsel %vm1061, %v1507, 0
        %v1520 = vsel %vm1061, %v1508, 0
        %v1523 = vand.u32 %v1509, %v1077
        %1525 = vmatprep.subr.bf16.mxu0 0
        %1526 = vmatpush1.bf16.msra.mxu0 0
        %1527 = vmatprep.subr.bf16.mxu0 0
        %1528 = vmatpush1.bf16.msra.mxu0 0
        %1529 = vmatprep.subr.bf16.mxu0 0
        %1530 = vmatpush1.bf16.msra.mxu0 0
        %1531 = vmatprep.subr.bf16.mxu0 0
        %1532 = vmatpush1.bf16.msra.mxu0 0
        %1533 = vmatprep.subr.bf16.mxu0 0
        %1534 = vmatpush1.bf16.msra.mxu0 0
        %1535 = vmatprep.subr.bf16.mxu0 0
        %1536 = vmatpush1.bf16.msra.mxu0 0
        %1537 = vmatprep.subr.bf16.mxu0 0
        %1538 = vmatpush1.bf16.msra.mxu0 0
        %1539 = vmatprep.subr.bf16.mxu0 0
        %1540 = vmatpush1.bf16.msra.mxu0 %v1523
        %1541 = vmatprep.subr.bf16.mxu0 0
        %1542 = vmatpush2.bf16.msra.mxu0 0
        %1543 = vmatprep.subr.bf16.mxu0 0
        %1544 = vmatpush2.bf16.msra.mxu0 0
        %1545 = vmatprep.subr.bf16.mxu0 0
        %1546 = vmatpush2.bf16.msra.mxu0 0
        %1547 = vmatprep.subr.bf16.mxu0 0
        %1548 = vmatpush2.bf16.msra.mxu0 0
        %1549 = vmatprep.subr.bf16.mxu0 0
        %1550 = vmatpush2.bf16.msra.mxu0 0
        %1551 = vmatprep.subr.bf16.mxu0 0
        %1552 = vmatpush2.bf16.msra.mxu0 0
        %1553 = vmatprep.subr.bf16.mxu0 0
        %1554 = vmatpush2.bf16.msra.mxu0 0
        %1555 = vmatprep.subr.bf16.mxu0 0
        %1556 = vmatpush2.bf16.msra.mxu0 0
        %1557 = vmatprep.mubr.bf16.mxu0 0
        %1558 = vmatmul.mubr.bf16.gmra.mxu0 %v1511
        %v1559 = vpop.f32.mrf.mxu0
        %v1560 = vadd.f32 0.0, %v1559
        %v1561 = vpop.f32.mrf.mxu0
        %v1562 = vpop.f32.mrf.mxu0
        %v1563 = vadd.f32 0.0, %v1562
        %v1564 = vpop.f32.mrf.mxu0
        %1565 = vmatprep.mubr.bf16.mxu0 0
        %1566 = vmatmul.mubr.bf16.gmra.mxu0 %v1514
        %v1567 = vpop.f32.mrf.mxu0
        %v1568 = vadd.f32 0.0, %v1567
        %v1569 = vpop.f32.mrf.mxu0
        %v1570 = vpop.f32.mrf.mxu0
        %v1571 = vadd.f32 0.0, %v1570
        %v1572 = vpop.f32.mrf.mxu0
        %1573 = vmatprep.mubr.bf16.mxu0 0
        %1574 = vmatmul.mubr.bf16.gmra.mxu0 %v1517
        %v1575 = vpop.f32.mrf.mxu0
        %v1576 = vadd.f32 0.0, %v1575
        %v1577 = vpop.f32.mrf.mxu0
        %v1578 = vpop.f32.mrf.mxu0
        %v1579 = vadd.f32 0.0, %v1578
        %v1580 = vpop.f32.mrf.mxu0
        %1581 = vmatprep.mubr.bf16.mxu0 0
        %1582 = vmatmul.mubr.bf16.gmra.mxu0 %v1520
        %v1583 = vpop.f32.mrf.mxu0
        %v1584 = vadd.f32 0.0, %v1583
        %v1585 = vpop.f32.mrf.mxu0
        %v1586 = vpop.f32.mrf.mxu0
        %v1587 = vadd.f32 0.0, %v1586
        %v1588 = vpop.f32.mrf.mxu0
        %1589 = vdwg.mxu0
        %v1590 = vadd.f32 %v1497, %v1560
        %v1591 = vadd.f32 %v1498, %v1563
        %v1592 = vadd.f32 %v1499, %v1568
        %v1593 = vadd.f32 %v1500, %v1571
        %v1594 = vadd.f32 %v1501, %v1576
        %v1595 = vadd.f32 %v1502, %v1579
        %v1596 = vadd.f32 %v1503, %v1584
        %v1597 = vadd.f32 %v1504, %v1587
        %v1598 = vpack.c.bf16 %v960, %v957
        %v1599 = vpack.c.bf16 %v968, %v965
        %v1600 = vpack.c.bf16 %v976, %v973
        %v1601 = vpack.c.bf16 %v984, %v981
        %v1602 = vld [vmem:[%s4 + $0x18] sm:$0x3]
        %v1604 = vsel %vm1061, %v1598, 0
        %v1607 = vsel %vm1061, %v1599, 0
        %v1610 = vsel %vm1061, %v1600, 0
        %v1613 = vsel %vm1061, %v1601, 0
        %v1616 = vand.u32 %v1602, %v1077
        %1618 = vmatprep.subr.bf16.mxu0 0
        %1619 = vmatpush1.bf16.msra.mxu0 0
        %1620 = vmatprep.subr.bf16.mxu0 0
        %1621 = vmatpush1.bf16.msra.mxu0 0
        %1622 = vmatprep.subr.bf16.mxu0 0
        %1623 = vmatpush1.bf16.msra.mxu0 0
        %1624 = vmatprep.subr.bf16.mxu0 0
        %1625 = vmatpush1.bf16.msra.mxu0 0
        %1626 = vmatprep.subr.bf16.mxu0 0
        %1627 = vmatpush1.bf16.msra.mxu0 0
        %1628 = vmatprep.subr.bf16.mxu0 0
        %1629 = vmatpush1.bf16.msra.mxu0 0
        %1630 = vmatprep.subr.bf16.mxu0 0
        %1631 = vmatpush1.bf16.msra.mxu0 0
        %1632 = vmatprep.subr.bf16.mxu0 0
        %1633 = vmatpush1.bf16.msra.mxu0 %v1616
        %1634 = vmatprep.subr.bf16.mxu0 0
        %1635 = vmatpush2.bf16.msra.mxu0 0
        %1636 = vmatprep.subr.bf16.mxu0 0
        %1637 = vmatpush2.bf16.msra.mxu0 0
        %1638 = vmatprep.subr.bf16.mxu0 0
        %1639 = vmatpush2.bf16.msra.mxu0 0
        %1640 = vmatprep.subr.bf16.mxu0 0
        %1641 = vmatpush2.bf16.msra.mxu0 0
        %1642 = vmatprep.subr.bf16.mxu0 0
        %1643 = vmatpush2.bf16.msra.mxu0 0
        %1644 = vmatprep.subr.bf16.mxu0 0
        %1645 = vmatpush2.bf16.msra.mxu0 0
        %1646 = vmatprep.subr.bf16.mxu0 0
        %1647 = vmatpush2.bf16.msra.mxu0 0
        %1648 = vmatprep.subr.bf16.mxu0 0
        %1649 = vmatpush2.bf16.msra.mxu0 0
        %1650 = vmatprep.mubr.bf16.mxu0 0
        %1651 = vmatmul.mubr.bf16.gmra.mxu0 %v1604
        %v1652 = vpop.f32.mrf.mxu0
        %v1653 = vadd.f32 0.0, %v1652
        %v1654 = vpop.f32.mrf.mxu0
        %v1655 = vpop.f32.mrf.mxu0
        %v1656 = vadd.f32 0.0, %v1655
        %v1657 = vpop.f32.mrf.mxu0
        %1658 = vmatprep.mubr.bf16.mxu0 0
        %1659 = vmatmul.mubr.bf16.gmra.mxu0 %v1607
        %v1660 = vpop.f32.mrf.mxu0
        %v1661 = vadd.f32 0.0, %v1660
        %v1662 = vpop.f32.mrf.mxu0
        %v1663 = vpop.f32.mrf.mxu0
        %v1664 = vadd.f32 0.0, %v1663
        %v1665 = vpop.f32.mrf.mxu0
        %1666 = vmatprep.mubr.bf16.mxu0 0
        %1667 = vmatmul.mubr.bf16.gmra.mxu0 %v1610
        %v1668 = vpop.f32.mrf.mxu0
        %v1669 = vadd.f32 0.0, %v1668
        %v1670 = vpop.f32.mrf.mxu0
        %v1671 = vpop.f32.mrf.mxu0
        %v1672 = vadd.f32 0.0, %v1671
        %v1673 = vpop.f32.mrf.mxu0
        %1674 = vmatprep.mubr.bf16.mxu0 0
        %1675 = vmatmul.mubr.bf16.gmra.mxu0 %v1613
        %v1676 = vpop.f32.mrf.mxu0
        %v1677 = vadd.f32 0.0, %v1676
        %v1678 = vpop.f32.mrf.mxu0
        %v1679 = vpop.f32.mrf.mxu0
        %v1680 = vadd.f32 0.0, %v1679
        %v1681 = vpop.f32.mrf.mxu0
        %1682 = vdwg.mxu0
        %v1683 = vadd.f32 %v1590, %v1653
        %v1684 = vadd.f32 %v1591, %v1656
        %v1685 = vadd.f32 %v1592, %v1661
        %v1686 = vadd.f32 %v1593, %v1664
        %v1687 = vadd.f32 %v1594, %v1669
        %v1688 = vadd.f32 %v1595, %v1672
        %v1689 = vadd.f32 %v1596, %v1677
        %v1690 = vadd.f32 %v1597, %v1680
        %v1691 = vpack.c.bf16 %v992, %v989
        %v1692 = vpack.c.bf16 %v1000, %v997
        %v1693 = vpack.c.bf16 %v1008, %v1005
        %v1694 = vpack.c.bf16 %v1016, %v1013
        %v1695 = vld [vmem:[%s4 + $0x1c] sm:$0x3]
        %v1697 = vsel %vm1061, %v1691, 0
        %v1700 = vsel %vm1061, %v1692, 0
        %v1703 = vsel %vm1061, %v1693, 0
        %v1706 = vsel %vm1061, %v1694, 0
        %v1709 = vand.u32 %v1695, %v1077
        %1711 = vmatprep.subr.bf16.mxu0 0
        %1712 = vmatpush1.bf16.msra.mxu0 0
        %1713 = vmatprep.subr.bf16.mxu0 0
        %1714 = vmatpush1.bf16.msra.mxu0 0
        %1715 = vmatprep.subr.bf16.mxu0 0
        %1716 = vmatpush1.bf16.msra.mxu0 0
        %1717 = vmatprep.subr.bf16.mxu0 0
        %1718 = vmatpush1.bf16.msra.mxu0 0
        %1719 = vmatprep.subr.bf16.mxu0 0
        %1720 = vmatpush1.bf16.msra.mxu0 0
        %1721 = vmatprep.subr.bf16.mxu0 0
        %1722 = vmatpush1.bf16.msra.mxu0 0
        %1723 = vmatprep.subr.bf16.mxu0 0
        %1724 = vmatpush1.bf16.msra.mxu0 0
        %1725 = vmatprep.subr.bf16.mxu0 0
        %1726 = vmatpush1.bf16.msra.mxu0 %v1709
        %1727 = vmatprep.subr.bf16.mxu0 0
        %1728 = vmatpush2.bf16.msra.mxu0 0
        %1729 = vmatprep.subr.bf16.mxu0 0
        %1730 = vmatpush2.bf16.msra.mxu0 0
        %1731 = vmatprep.subr.bf16.mxu0 0
        %1732 = vmatpush2.bf16.msra.mxu0 0
        %1733 = vmatprep.subr.bf16.mxu0 0
        %1734 = vmatpush2.bf16.msra.mxu0 0
        %1735 = vmatprep.subr.bf16.mxu0 0
        %1736 = vmatpush2.bf16.msra.mxu0 0
        %1737 = vmatprep.subr.bf16.mxu0 0
        %1738 = vmatpush2.bf16.msra.mxu0 0
        %1739 = vmatprep.subr.bf16.mxu0 0
        %1740 = vmatpush2.bf16.msra.mxu0 0
        %1741 = vmatprep.subr.bf16.mxu0 0
        %1742 = vmatpush2.bf16.msra.mxu0 0
        %1743 = vmatprep.mubr.bf16.mxu0 0
        %1744 = vmatmul.mubr.bf16.gmra.mxu0 %v1697
        %v1745 = vpop.f32.mrf.mxu0
        %v1746 = vadd.f32 0.0, %v1745
        %v1747 = vpop.f32.mrf.mxu0
        %v1748 = vpop.f32.mrf.mxu0
        %v1749 = vadd.f32 0.0, %v1748
        %v1750 = vpop.f32.mrf.mxu0
        %1751 = vmatprep.mubr.bf16.mxu0 0
        %1752 = vmatmul.mubr.bf16.gmra.mxu0 %v1700
        %v1753 = vpop.f32.mrf.mxu0
        %v1754 = vadd.f32 0.0, %v1753
        %v1755 = vpop.f32.mrf.mxu0
        %v1756 = vpop.f32.mrf.mxu0
        %v1757 = vadd.f32 0.0, %v1756
        %v1758 = vpop.f32.mrf.mxu0
        %1759 = vmatprep.mubr.bf16.mxu0 0
        %1760 = vmatmul.mubr.bf16.gmra.mxu0 %v1703
        %v1761 = vpop.f32.mrf.mxu0
        %v1762 = vadd.f32 0.0, %v1761
        %v1763 = vpop.f32.mrf.mxu0
        %v1764 = vpop.f32.mrf.mxu0
        %v1765 = vadd.f32 0.0, %v1764
        %v1766 = vpop.f32.mrf.mxu0
        %1767 = vmatprep.mubr.bf16.mxu0 0
        %1768 = vmatmul.mubr.bf16.gmra.mxu0 %v1706
        %v1769 = vpop.f32.mrf.mxu0
        %v1770 = vadd.f32 0.0, %v1769
        %v1771 = vpop.f32.mrf.mxu0
        %v1772 = vpop.f32.mrf.mxu0
        %v1773 = vadd.f32 0.0, %v1772
        %v1774 = vpop.f32.mrf.mxu0
        %1775 = vdwg.mxu0
        %v1776 = vadd.f32 %v1683, %v1746
        %v1777 = vadd.f32 %v1684, %v1749
        %v1778 = vadd.f32 %v1685, %v1754
        %v1779 = vadd.f32 %v1686, %v1757
        %v1780 = vadd.f32 %v1687, %v1762
        %v1781 = vadd.f32 %v1688, %v1765
        %v1782 = vadd.f32 %v1689, %v1770
        %v1783 = vadd.f32 %v1690, %v1773
        %v1784 = vpack.c.bf16 %v1024, %v1021
        %v1785 = vpack.c.bf16 %v1032, %v1029
        %v1786 = vpack.c.bf16 %v1040, %v1037
        %v1787 = vpack.c.bf16 %v1048, %v1045
        %v1788 = vld [vmem:[%s4 + $0x20] sm:$0x3]
        %v1790 = vsel %vm1061, %v1784, 0
        %v1793 = vsel %vm1061, %v1785, 0
        %v1796 = vsel %vm1061, %v1786, 0
        %v1799 = vsel %vm1061, %v1787, 0
        %v1802 = vand.u32 %v1788, %v1077
        %1804 = vmatprep.subr.bf16.mxu0 0
        %1805 = vmatpush1.bf16.msra.mxu0 0
        %1806 = vmatprep.subr.bf16.mxu0 0
        %1807 = vmatpush1.bf16.msra.mxu0 0
        %1808 = vmatprep.subr.bf16.mxu0 0
        %1809 = vmatpush1.bf16.msra.mxu0 0
        %1810 = vmatprep.subr.bf16.mxu0 0
        %1811 = vmatpush1.bf16.msra.mxu0 0
        %1812 = vmatprep.subr.bf16.mxu0 0
        %1813 = vmatpush1.bf16.msra.mxu0 0
        %1814 = vmatprep.subr.bf16.mxu0 0
        %1815 = vmatpush1.bf16.msra.mxu0 0
        %1816 = vmatprep.subr.bf16.mxu0 0
        %1817 = vmatpush1.bf16.msra.mxu0 0
        %1818 = vmatprep.subr.bf16.mxu0 0
        %1819 = vmatpush1.bf16.msra.mxu0 %v1802
        %1820 = vmatprep.subr.bf16.mxu0 0
        %1821 = vmatpush2.bf16.msra.mxu0 0
        %1822 = vmatprep.subr.bf16.mxu0 0
        %1823 = vmatpush2.bf16.msra.mxu0 0
        %1824 = vmatprep.subr.bf16.mxu0 0
        %1825 = vmatpush2.bf16.msra.mxu0 0
        %1826 = vmatprep.subr.bf16.mxu0 0
        %1827 = vmatpush2.bf16.msra.mxu0 0
        %1828 = vmatprep.subr.bf16.mxu0 0
        %1829 = vmatpush2.bf16.msra.mxu0 0
        %1830 = vmatprep.subr.bf16.mxu0 0
        %1831 = vmatpush2.bf16.msra.mxu0 0
        %1832 = vmatprep.subr.bf16.mxu0 0
        %1833 = vmatpush2.bf16.msra.mxu0 0
        %1834 = vmatprep.subr.bf16.mxu0 0
        %1835 = vmatpush2.bf16.msra.mxu0 0
        %1836 = vmatprep.mubr.bf16.mxu0 0
        %1837 = vmatmul.mubr.bf16.gmra.mxu0 %v1790
        %v1838 = vpop.f32.mrf.mxu0
        %v1839 = vadd.f32 0.0, %v1838
        %v1840 = vpop.f32.mrf.mxu0
        %v1841 = vpop.f32.mrf.mxu0
        %v1842 = vadd.f32 0.0, %v1841
        %v1843 = vpop.f32.mrf.mxu0
        %1844 = vmatprep.mubr.bf16.mxu0 0
        %1845 = vmatmul.mubr.bf16.gmra.mxu0 %v1793
        %v1846 = vpop.f32.mrf.mxu0
        %v1847 = vadd.f32 0.0, %v1846
        %v1848 = vpop.f32.mrf.mxu0
        %v1849 = vpop.f32.mrf.mxu0
        %v1850 = vadd.f32 0.0, %v1849
        %v1851 = vpop.f32.mrf.mxu0
        %1852 = vmatprep.mubr.bf16.mxu0 0
        %1853 = vmatmul.mubr.bf16.gmra.mxu0 %v1796
        %v1854 = vpop.f32.mrf.mxu0
        %v1855 = vadd.f32 0.0, %v1854
        %v1856 = vpop.f32.mrf.mxu0
        %v1857 = vpop.f32.mrf.mxu0
        %v1858 = vadd.f32 0.0, %v1857
        %v1859 = vpop.f32.mrf.mxu0
        %1860 = vmatprep.mubr.bf16.mxu0 0
        %1861 = vmatmul.mubr.bf16.gmra.mxu0 %v1799
        %v1862 = vpop.f32.mrf.mxu0
        %v1863 = vadd.f32 0.0, %v1862
        %v1864 = vpop.f32.mrf.mxu0
        %v1865 = vpop.f32.mrf.mxu0
        %v1866 = vadd.f32 0.0, %v1865
        %v1867 = vpop.f32.mrf.mxu0
        %1868 = vdwg.mxu0
        %v1869 = vadd.f32 %v1776, %v1839
        %v1870 = vadd.f32 %v1777, %v1842
        %v1871 = vadd.f32 %v1778, %v1847
        %v1872 = vadd.f32 %v1779, %v1850
        %v1873 = vadd.f32 %v1780, %v1855
        %v1874 = vadd.f32 %v1781, %v1858
        %v1875 = vadd.f32 %v1782, %v1863
        %v1876 = vadd.f32 %v1783, %v1866
        %v1877 = vld [vmem:[%s5] sm:$0x1]
        %v1878 = vlaneseq
        %v1879 = vshrl.u32 %v1878, 7
        %v1880 = vsub.s32 0, %v1879
        %v1881 = vrot.slane %v1877, %v1880
        %v1882 = vmul.f32 %v1869, %v1881
        %v1883 = vmul.f32 %v1870, %v1881
        %v1884 = vmul.f32 %v1871, %v1881
        %v1885 = vmul.f32 %v1872, %v1881
        %v1886 = vmul.f32 %v1873, %v1881
        %v1887 = vmul.f32 %v1874, %v1881
        %v1888 = vmul.f32 %v1875, %v1881
        %v1889 = vmul.f32 %v1876, %v1881
        %v1890 = vld [vmem:[%s5 + $0x1] sm:$0x1]
        %v1891 = vlaneseq
        %v1892 = vshrl.u32 %v1891, 7
        %v1893 = vsub.s32 0, %v1892
        %v1894 = vrot.slane %v1890, %v1893
        %v1895 = vadd.f32 %v1882, %v1894
        %v1896 = vadd.f32 %v1883, %v1894
        %v1897 = vadd.f32 %v1884, %v1894
        %v1898 = vadd.f32 %v1885, %v1894
        %v1899 = vadd.f32 %v1886, %v1894
        %v1900 = vadd.f32 %v1887, %v1894
        %v1901 = vadd.f32 %v1888, %v1894
        %v1902 = vadd.f32 %v1889, %v1894
        %v1903 = vadd.f32 %v1895, 3.0
        %v1904 = vadd.f32 %v1896, 3.0
        %v1905 = vadd.f32 %v1897, 3.0
        %v1906 = vadd.f32 %v1898, 3.0
        %v1907 = vadd.f32 %v1899, 3.0
        %v1908 = vadd.f32 %v1900, 3.0
        %v1909 = vadd.f32 %v1901, 3.0
        %v1910 = vadd.f32 %v1902, 3.0
        %v1911 = vmax.f32 %v1903, 0.0
        %v1912 = vmax.f32 %v1904, 0.0
        %v1913 = vmax.f32 %v1905, 0.0
        %v1914 = vmax.f32 %v1906, 0.0
        %v1915 = vmax.f32 %v1907, 0.0
        %v1916 = vmax.f32 %v1908, 0.0
        %v1917 = vmax.f32 %v1909, 0.0
        %v1918 = vmax.f32 %v1910, 0.0
        %v1919 = vmin.f32 %v1911, 6.0
        %v1920 = vmin.f32 %v1912, 6.0
        %v1921 = vmin.f32 %v1913, 6.0
        %v1922 = vmin.f32 %v1914, 6.0
        %v1923 = vmin.f32 %v1915, 6.0
        %v1924 = vmin.f32 %v1916, 6.0
        %v1925 = vmin.f32 %v1917, 6.0
        %v1926 = vmin.f32 %v1918, 6.0
        %v1927 = vmul.f32 %v1895, %v1919
        %v1928 = vmul.f32 %v1896, %v1920
        %v1929 = vmul.f32 %v1897, %v1921
        %v1930 = vmul.f32 %v1898, %v1922
        %v1931 = vmul.f32 %v1899, %v1923
        %v1932 = vmul.f32 %v1900, %v1924
        %v1933 = vmul.f32 %v1901, %v1925
        %v1934 = vmul.f32 %v1902, %v1926
        %v1935 = vmul.f32 %v1927, 0.16666667
        %v1936 = vmul.f32 %v1928, 0.16666667
        %v1937 = vmul.f32 %v1929, 0.16666667
        %v1938 = vmul.f32 %v1930, 0.16666667
        %v1939 = vmul.f32 %v1931, 0.16666667
        %v1940 = vmul.f32 %v1932, 0.16666667
        %v1941 = vmul.f32 %v1933, 0.16666667
        %v1942 = vmul.f32 %v1934, 0.16666667
        %v1943 = vld [vmem:[%s4 + $0x24] sm:$0xf]
        %v1944 = vld [vmem:[%s4 + $0x28] sm:$0x1]
        %v1945 = vunpack.c.l.bf16 %v1943
        %v1946 = vunpack.c.l.bf16 %v1944
        %v1949 = vcombine.high %v1945, %v1945
        %v1951 = vunpack.c.l.s4 1966171168
        %v1952 = vunpack.c.0.s8 %v1951
        %v1953 = vlaneseq
        %v1954 = vshrl.u32 %v1953, 7
        %v1955 = vsub.s32 %v1952, %v1954
        %v1956 = vrot.slane %v1945, %v1955
        %v1958 = vunpack.c.l.s4 1966171168
        %v1959 = vunpack.c.0.s8 %v1958
        %v1960 = vlaneseq
        %v1961 = vshrl.u32 %v1960, 7
        %v1962 = vsub.s32 %v1959, %v1961
        %v1963 = vrot.slane %v1949, %v1962
        %v1964 = vcombine.high %v1956, %v1956
        %v1965 = vcombine.high %v1963, %v1963
        %v1967 = vunpack.c.l.s4 1966171168
        %v1968 = vunpack.c.0.s8 %v1967
        %v1969 = vlaneseq
        %v1970 = vshrl.u32 %v1969, 7
        %v1971 = vsub.s32 %v1968, %v1970
        %v1972 = vrot.slane %v1956, %v1971
        %v1974 = vunpack.c.l.s4 1966171168
        %v1975 = vunpack.c.0.s8 %v1974
        %v1976 = vlaneseq
        %v1977 = vshrl.u32 %v1976, 7
        %v1978 = vsub.s32 %v1975, %v1977
        %v1979 = vrot.slane %v1963, %v1978
        %v1981 = vunpack.c.l.s4 1966171168
        %v1982 = vunpack.c.0.s8 %v1981
        %v1983 = vlaneseq
        %v1984 = vshrl.u32 %v1983, 7
        %v1985 = vsub.s32 %v1982, %v1984
        %v1986 = vrot.slane %v1964, %v1985
        %v1988 = vunpack.c.l.s4 1966171168
        %v1989 = vunpack.c.0.s8 %v1988
        %v1990 = vlaneseq
        %v1991 = vshrl.u32 %v1990, 7
        %v1992 = vsub.s32 %v1989, %v1991
        %v1993 = vrot.slane %v1965, %v1992
        %v1994 = vcombine.high %v1972, %v1972
        %v1995 = vcombine.high %v1979, %v1979
        %v1996 = vcombine.high %v1986, %v1986
        %v1997 = vcombine.high %v1993, %v1993
        %v1999 = vunpack.c.l.s4 1966171168
        %v2000 = vunpack.c.0.s8 %v1999
        %v2001 = vlaneseq
        %v2002 = vshrl.u32 %v2001, 7
        %v2003 = vsub.s32 %v2000, %v2002
        %v2004 = vrot.slane %v1946, %v2003
        %v2006 = vunpack.c.l.s4 1966171168
        %v2007 = vunpack.c.0.s8 %v2006
        %v2008 = vlaneseq
        %v2009 = vshrl.u32 %v2008, 7
        %v2010 = vsub.s32 %v2007, %v2009
        %v2011 = vrot.slane %v2004, %v2010
        %v2012 = vlaneseq
        %v2013 = vshrl.u32 %v2012, 7
        %v2014 = vsub.s32 0, %v2013
        %v2015 = vrot.slane %v1972, %v2014
        %v2016 = vlaneseq
        %v2017 = vshrl.u32 %v2016, 7
        %v2018 = vsub.s32 0, %v2017
        %v2019 = vrot.slane %v1986, %v2018
        %v2020 = vlaneseq
        %v2021 = vshrl.u32 %v2020, 7
        %v2022 = vsub.s32 0, %v2021
        %v2023 = vrot.slane %v1994, %v2022
        %v2024 = vlaneseq
        %v2025 = vshrl.u32 %v2024, 7
        %v2026 = vsub.s32 0, %v2025
        %v2027 = vrot.slane %v1996, %v2026
        %v2028 = vlaneseq
        %v2029 = vshrl.u32 %v2028, 7
        %v2030 = vsub.s32 0, %v2029
        %v2031 = vrot.slane %v1979, %v2030
        %v2032 = vlaneseq
        %v2033 = vshrl.u32 %v2032, 7
        %v2034 = vsub.s32 0, %v2033
        %v2035 = vrot.slane %v1993, %v2034
        %v2036 = vlaneseq
        %v2037 = vshrl.u32 %v2036, 7
        %v2038 = vsub.s32 0, %v2037
        %v2039 = vrot.slane %v1995, %v2038
        %v2040 = vlaneseq
        %v2041 = vshrl.u32 %v2040, 7
        %v2042 = vsub.s32 0, %v2041
        %v2043 = vrot.slane %v1997, %v2042
        %v2044 = vlaneseq
        %v2045 = vshrl.u32 %v2044, 7
        %v2046 = vsub.s32 0, %v2045
        %v2047 = vrot.slane %v2011, %v2046
        %v2057 = vmul.f32 %v2015, %v1935
        %v2058 = vmul.f32 %v2015, %v1936
        %v2059 = vmul.f32 %v2015, %v1937
        %v2060 = vmul.f32 %v2015, %v1938
        %v2061 = vmul.f32 %v2015, %v1939
        %v2062 = vmul.f32 %v2015, %v1940
        %v2063 = vmul.f32 %v2015, %v1941
        %v2064 = vmul.f32 %v2015, %v1942
        %v2065 = vmul.f32 %v2019, %v1935
        %v2066 = vmul.f32 %v2019, %v1936
        %v2067 = vmul.f32 %v2019, %v1937
        %v2068 = vmul.f32 %v2019, %v1938
        %v2069 = vmul.f32 %v2019, %v1939
        %v2070 = vmul.f32 %v2019, %v1940
        %v2071 = vmul.f32 %v2019, %v1941
        %v2072 = vmul.f32 %v2019, %v1942
        %v2073 = vmul.f32 %v2023, %v1935
        %v2074 = vmul.f32 %v2023, %v1936
        %v2075 = vmul.f32 %v2023, %v1937
        %v2076 = vmul.f32 %v2023, %v1938
        %v2077 = vmul.f32 %v2023, %v1939
        %v2078 = vmul.f32 %v2023, %v1940
        %v2079 = vmul.f32 %v2023, %v1941
        %v2080 = vmul.f32 %v2023, %v1942
        %v2081 = vmul.f32 %v2027, %v1935
        %v2082 = vmul.f32 %v2027, %v1936
        %v2083 = vmul.f32 %v2027, %v1937
        %v2084 = vmul.f32 %v2027, %v1938
        %v2085 = vmul.f32 %v2027, %v1939
        %v2086 = vmul.f32 %v2027, %v1940
        %v2087 = vmul.f32 %v2027, %v1941
        %v2088 = vmul.f32 %v2027, %v1942
        %v2089 = vmul.f32 %v2031, %v1935
        %v2090 = vmul.f32 %v2031, %v1936
        %v2091 = vmul.f32 %v2031, %v1937
        %v2092 = vmul.f32 %v2031, %v1938
        %v2093 = vmul.f32 %v2031, %v1939
        %v2094 = vmul.f32 %v2031, %v1940
        %v2095 = vmul.f32 %v2031, %v1941
        %v2096 = vmul.f32 %v2031, %v1942
        %v2097 = vmul.f32 %v2035, %v1935
        %v2098 = vmul.f32 %v2035, %v1936
        %v2099 = vmul.f32 %v2035, %v1937
        %v2100 = vmul.f32 %v2035, %v1938
        %v2101 = vmul.f32 %v2035, %v1939
        %v2102 = vmul.f32 %v2035, %v1940
        %v2103 = vmul.f32 %v2035, %v1941
        %v2104 = vmul.f32 %v2035, %v1942
        %v2105 = vmul.f32 %v2039, %v1935
        %v2106 = vmul.f32 %v2039, %v1936
        %v2107 = vmul.f32 %v2039, %v1937
        %v2108 = vmul.f32 %v2039, %v1938
        %v2109 = vmul.f32 %v2039, %v1939
        %v2110 = vmul.f32 %v2039, %v1940
        %v2111 = vmul.f32 %v2039, %v1941
        %v2112 = vmul.f32 %v2039, %v1942
        %v2113 = vmul.f32 %v2043, %v1935
        %v2114 = vmul.f32 %v2043, %v1936
        %v2115 = vmul.f32 %v2043, %v1937
        %v2116 = vmul.f32 %v2043, %v1938
        %v2117 = vmul.f32 %v2043, %v1939
        %v2118 = vmul.f32 %v2043, %v1940
        %v2119 = vmul.f32 %v2043, %v1941
        %v2120 = vmul.f32 %v2043, %v1942
        %v2121 = vmul.f32 %v2047, %v1935
        %v2122 = vmul.f32 %v2047, %v1936
        %v2123 = vmul.f32 %v2047, %v1937
        %v2124 = vmul.f32 %v2047, %v1938
        %v2125 = vmul.f32 %v2047, %v1939
        %v2126 = vmul.f32 %v2047, %v1940
        %v2127 = vmul.f32 %v2047, %v1941
        %v2128 = vmul.f32 %v2047, %v1942
        %v2129 = vpack.c.bf16 %v2058, %v2057
        %v2130 = vpack.c.bf16 %v2060, %v2059
        %v2131 = vpack.c.bf16 %v2062, %v2061
        %v2132 = vpack.c.bf16 %v2064, %v2063
        %v2133 = vpack.c.bf16 %v2066, %v2065
        %v2134 = vpack.c.bf16 %v2068, %v2067
        %v2135 = vpack.c.bf16 %v2070, %v2069
        %v2136 = vpack.c.bf16 %v2072, %v2071
        %v2137 = vpack.c.bf16 %v2074, %v2073
        %v2138 = vpack.c.bf16 %v2076, %v2075
        %v2139 = vpack.c.bf16 %v2078, %v2077
        %v2140 = vpack.c.bf16 %v2080, %v2079
        %v2141 = vpack.c.bf16 %v2082, %v2081
        %v2142 = vpack.c.bf16 %v2084, %v2083
        %v2143 = vpack.c.bf16 %v2086, %v2085
        %v2144 = vpack.c.bf16 %v2088, %v2087
        %v2145 = vpack.c.bf16 %v2090, %v2089
        %v2146 = vpack.c.bf16 %v2092, %v2091
        %v2147 = vpack.c.bf16 %v2094, %v2093
        %v2148 = vpack.c.bf16 %v2096, %v2095
        %v2149 = vpack.c.bf16 %v2098, %v2097
        %v2150 = vpack.c.bf16 %v2100, %v2099
        %v2151 = vpack.c.bf16 %v2102, %v2101
        %v2152 = vpack.c.bf16 %v2104, %v2103
        %v2153 = vpack.c.bf16 %v2106, %v2105
        %v2154 = vpack.c.bf16 %v2108, %v2107
        %v2155 = vpack.c.bf16 %v2110, %v2109
        %v2156 = vpack.c.bf16 %v2112, %v2111
        %v2157 = vpack.c.bf16 %v2114, %v2113
        %v2158 = vpack.c.bf16 %v2116, %v2115
        %v2159 = vpack.c.bf16 %v2118, %v2117
        %v2160 = vpack.c.bf16 %v2120, %v2119
        %v2161 = vpack.c.bf16 %v2122, %v2121
        %v2162 = vpack.c.bf16 %v2124, %v2123
        %v2163 = vpack.c.bf16 %v2126, %v2125
        %v2164 = vpack.c.bf16 %v2128, %v2127
        %v2165 = vld [vmem:[%s2] sm:$0xff]
        %v2166 = vld [vmem:[%s2 + $0x8] sm:$0xff]
        %v2167 = vld [vmem:[%s2 + $0x10] sm:$0xf]
        %v2168 = vld [vmem:[%s2 + $0x14] sm:$0xff]
        %v2169 = vld [vmem:[%s2 + $0x1c] sm:$0xff]
        %v2170 = vld [vmem:[%s2 + $0x24] sm:$0xf]
        %v2177 = vunpack.c.l.b16 %v2165
        %v2178 = vunpack.c.h.b16 %v2165
        %v2179 = vunpack.c.l.b16 %v2166
        %v2180 = vunpack.c.h.b16 %v2166
        %v2181 = vunpack.c.l.b16 %v2167
        %v2182 = vunpack.c.l.b16 %v2168
        %v2183 = vunpack.c.h.b16 %v2168
        %v2184 = vunpack.c.l.b16 %v2169
        %v2185 = vunpack.c.h.b16 %v2169
        %v2186 = vunpack.c.l.b16 %v2170
        %v2187 = vpack.c.b16 %v2182, %v2177
        %v2188 = vpack.c.b16 %v2183, %v2178
        %v2189 = vpack.c.b16 %v2184, %v2179
        %v2190 = vpack.c.b16 %v2185, %v2180
        %v2191 = vpack.c.b16 %v2186, %v2181
        %vm2196 = vcmask 523264
        %v2198 = vsel %vm2196, %v2191, 0
        %2200 = vmatprep.subr.bf16.mxu0 0
        %2201 = vmatpush1.bf16.msra.mxu0 %v2136
        %2202 = vmatprep.subr.bf16.mxu0 0
        %2203 = vmatpush1.bf16.msra.mxu0 %v2135
        %2204 = vmatprep.subr.bf16.mxu0 0
        %2205 = vmatpush1.bf16.msra.mxu0 %v2134
        %2206 = vmatprep.subr.bf16.mxu0 0
        %2207 = vmatpush1.bf16.msra.mxu0 %v2133
        %2208 = vmatprep.subr.bf16.mxu0 0
        %2209 = vmatpush1.bf16.msra.mxu0 %v2132
        %2210 = vmatprep.subr.bf16.mxu0 0
        %2211 = vmatpush1.bf16.msra.mxu0 %v2131
        %2212 = vmatprep.subr.bf16.mxu0 0
        %2213 = vmatpush1.bf16.msra.mxu0 %v2130
        %2214 = vmatprep.subr.bf16.mxu0 0
        %2215 = vmatpush1.bf16.msra.mxu0 %v2129
        %2216 = vmatprep.subr.bf16.mxu0 0
        %2217 = vmatpush2.bf16.msra.mxu0 %v2144
        %2218 = vmatprep.subr.bf16.mxu0 0
        %2219 = vmatpush2.bf16.msra.mxu0 %v2143
        %2220 = vmatprep.subr.bf16.mxu0 0
        %2221 = vmatpush2.bf16.msra.mxu0 %v2142
        %2222 = vmatprep.subr.bf16.mxu0 0
        %2223 = vmatpush2.bf16.msra.mxu0 %v2141
        %2224 = vmatprep.subr.bf16.mxu0 0
        %2225 = vmatpush2.bf16.msra.mxu0 %v2140
        %2226 = vmatprep.subr.bf16.mxu0 0
        %2227 = vmatpush2.bf16.msra.mxu0 %v2139
        %2228 = vmatprep.subr.bf16.mxu0 0
        %2229 = vmatpush2.bf16.msra.mxu0 %v2138
        %2230 = vmatprep.subr.bf16.mxu0 0
        %2231 = vmatpush2.bf16.msra.mxu0 %v2137
        %2232 = vmatprep.mubr.bf16.mxu0 %v2188
        %2233 = vmatmul.mubr.bf16.gmra.mxu0 %v2187
        %v2234 = vpop.f32.mrf.mxu0
        %v2235 = vadd.f32 0.0, %v2234
        %v2236 = vpop.f32.mrf.mxu0
        %v2237 = vpop.f32.mrf.mxu0
        %v2238 = vadd.f32 0.0, %v2237
        %v2239 = vpop.f32.mrf.mxu0
        %2240 = vdwg.mxu0
        %2241 = vmatprep.subr.bf16.mxu0 0
        %2242 = vmatpush1.bf16.msra.mxu0 %v2152
        %2243 = vmatprep.subr.bf16.mxu0 0
        %2244 = vmatpush1.bf16.msra.mxu0 %v2151
        %2245 = vmatprep.subr.bf16.mxu0 0
        %2246 = vmatpush1.bf16.msra.mxu0 %v2150
        %2247 = vmatprep.subr.bf16.mxu0 0
        %2248 = vmatpush1.bf16.msra.mxu0 %v2149
        %2249 = vmatprep.subr.bf16.mxu0 0
        %2250 = vmatpush1.bf16.msra.mxu0 %v2148
        %2251 = vmatprep.subr.bf16.mxu0 0
        %2252 = vmatpush1.bf16.msra.mxu0 %v2147
        %2253 = vmatprep.subr.bf16.mxu0 0
        %2254 = vmatpush1.bf16.msra.mxu0 %v2146
        %2255 = vmatprep.subr.bf16.mxu0 0
        %2256 = vmatpush1.bf16.msra.mxu0 %v2145
        %2257 = vmatprep.subr.bf16.mxu0 0
        %2258 = vmatpush2.bf16.msra.mxu0 %v2160
        %2259 = vmatprep.subr.bf16.mxu0 0
        %2260 = vmatpush2.bf16.msra.mxu0 %v2159
        %2261 = vmatprep.subr.bf16.mxu0 0
        %2262 = vmatpush2.bf16.msra.mxu0 %v2158
        %2263 = vmatprep.subr.bf16.mxu0 0
        %2264 = vmatpush2.bf16.msra.mxu0 %v2157
        %2265 = vmatprep.subr.bf16.mxu0 0
        %2266 = vmatpush2.bf16.msra.mxu0 %v2156
        %2267 = vmatprep.subr.bf16.mxu0 0
        %2268 = vmatpush2.bf16.msra.mxu0 %v2155
        %2269 = vmatprep.subr.bf16.mxu0 0
        %2270 = vmatpush2.bf16.msra.mxu0 %v2154
        %2271 = vmatprep.subr.bf16.mxu0 0
        %2272 = vmatpush2.bf16.msra.mxu0 %v2153
        %2273 = vmatprep.mubr.bf16.mxu0 %v2190
        %2274 = vmatmul.mubr.bf16.gmra.mxu0 %v2189
        %v2275 = vpop.f32.mrf.mxu0
        %v2276 = vadd.f32 %v2235, %v2275
        %v2277 = vpop.f32.mrf.mxu0
        %v2278 = vpop.f32.mrf.mxu0
        %v2279 = vadd.f32 %v2238, %v2278
        %v2280 = vpop.f32.mrf.mxu0
        %2281 = vdwg.mxu0
        %2282 = vmatprep.subr.bf16.mxu0 0
        %2283 = vmatpush1.bf16.msra.mxu0 0
        %2284 = vmatprep.subr.bf16.mxu0 0
        %2285 = vmatpush1.bf16.msra.mxu0 0
        %2286 = vmatprep.subr.bf16.mxu0 0
        %2287 = vmatpush1.bf16.msra.mxu0 0
        %2288 = vmatprep.subr.bf16.mxu0 0
        %2289 = vmatpush1.bf16.msra.mxu0 0
        %2290 = vmatprep.subr.bf16.mxu0 0
        %2291 = vmatpush1.bf16.msra.mxu0 %v2164
        %2292 = vmatprep.subr.bf16.mxu0 0
        %2293 = vmatpush1.bf16.msra.mxu0 %v2163
        %2294 = vmatprep.subr.bf16.mxu0 0
        %2295 = vmatpush1.bf16.msra.mxu0 %v2162
        %2296 = vmatprep.subr.bf16.mxu0 0
        %2297 = vmatpush1.bf16.msra.mxu0 %v2161
        %2298 = vmatprep.subr.bf16.mxu0 0
        %2299 = vmatpush2.bf16.msra.mxu0 0
        %2300 = vmatprep.subr.bf16.mxu0 0
        %2301 = vmatpush2.bf16.msra.mxu0 0
        %2302 = vmatprep.subr.bf16.mxu0 0
        %2303 = vmatpush2.bf16.msra.mxu0 0
        %2304 = vmatprep.subr.bf16.mxu0 0
        %2305 = vmatpush2.bf16.msra.mxu0 0
        %2306 = vmatprep.subr.bf16.mxu0 0
        %2307 = vmatpush2.bf16.msra.mxu0 0
        %2308 = vmatprep.subr.bf16.mxu0 0
        %2309 = vmatpush2.bf16.msra.mxu0 0
        %2310 = vmatprep.subr.bf16.mxu0 0
        %2311 = vmatpush2.bf16.msra.mxu0 0
        %2312 = vmatprep.subr.bf16.mxu0 0
        %2313 = vmatpush2.bf16.msra.mxu0 0
        %2314 = vmatprep.mubr.bf16.mxu0 0
        %2315 = vmatmul.mubr.bf16.gmra.mxu0 %v2198
        %v2316 = vpop.f32.mrf.mxu0
        %v2317 = vadd.f32 %v2276, %v2316
        %v2318 = vpop.f32.mrf.mxu0
        %v2319 = vpop.f32.mrf.mxu0
        %v2320 = vadd.f32 %v2279, %v2319
        %v2321 = vpop.f32.mrf.mxu0
        %2322 = vdwg.mxu0
        %v2323 = vld [vmem:[%s5 + $0x2] sm:$0x1]
        %v2324 = vlaneseq
        %v2325 = vshrl.u32 %v2324, 7
        %v2326 = vsub.s32 0, %v2325
        %v2327 = vrot.slane %v2323, %v2326
        %v2328 = vmul.f32 %v2317, %v2327
        %v2329 = vmul.f32 %v2320, %v2327
        %v2330 = vld [vmem:[%s5 + $0x3] sm:$0x1]
        %v2331 = vlaneseq
        %v2332 = vshrl.u32 %v2331, 7
        %v2333 = vsub.s32 0, %v2332
        %v2334 = vrot.slane %v2330, %v2333
        %v2335 = vadd.f32 %v2328, %v2334
        %v2336 = vadd.f32 %v2329, %v2334
        %v2337 = vmax.f32 %v2335, 0.0
        %v2338 = vmax.f32 %v2336, 0.0
        %vm2339 = vcmask 64512
        %v2340 = vsel %vm2339, %v2337, 0.0
        %v2341 = vsel %vm2339, %v2338, 0.0
        %v2342 = vadd.f32 %v2340, %v2341
        %v2343 = vrot.slane %v2342, 4
        %v2344 = vadd.f32 %v2342, %v2343
        %v2345 = vrot.slane %v2344, 2
        %v2346 = vadd.f32 %v2344, %v2345
        %v2347 = vrot.slane %v2346, 1
        %v2348 = vadd.f32 %v2346, %v2347
        %v2349 = vrcp.pop 16.0
        %v2350 = vmul.f32 %v2348, %v2349
        %v2351 = vpack.c.bf16 %v2350, %v2350
        %v2352 = vld [vmem:[%s4 + $0x2c] sm:$0xf]
        %v2353 = vld [vmem:[%s5 + $0x4] sm:$0x1]
        %v2355 = vsel %vm2339, %v2351, 0
        %vm2357 = vcmask 1043456
        %v2359 = vsel %vm2357, %v2352, 0
        %2361 = vmatprep.subr.bf16.mxu0 0
        %2362 = vmatpush1.bf16.msra.mxu0 0
        %2363 = vmatprep.subr.bf16.mxu0 0
        %2364 = vmatpush1.bf16.msra.mxu0 0
        %2365 = vmatprep.subr.bf16.mxu0 0
        %2366 = vmatpush1.bf16.msra.mxu0 0
        %2367 = vmatprep.subr.bf16.mxu0 0
        %2368 = vmatpush1.bf16.msra.mxu0 0
        %2369 = vmatprep.subr.bf16.mxu0 0
        %2370 = vmatpush1.bf16.msra.mxu0 0
        %2371 = vmatprep.subr.bf16.mxu0 0
        %2372 = vmatpush1.bf16.msra.mxu0 0
        %2373 = vmatprep.subr.bf16.mxu0 0
        %2374 = vmatpush1.bf16.msra.mxu0 0
        %2375 = vmatprep.subr.bf16.mxu0 0
        %2376 = vmatpush1.bf16.msra.mxu0 %v2359
        %2377 = vmatprep.subr.bf16.mxu0 0
        %2378 = vmatpush2.bf16.msra.mxu0 0
        %2379 = vmatprep.subr.bf16.mxu0 0
        %2380 = vmatpush2.bf16.msra.mxu0 0
        %2381 = vmatprep.subr.bf16.mxu0 0
        %2382 = vmatpush2.bf16.msra.mxu0 0
        %2383 = vmatprep.subr.bf16.mxu0 0
        %2384 = vmatpush2.bf16.msra.mxu0 0
        %2385 = vmatprep.subr.bf16.mxu0 0
        %2386 = vmatpush2.bf16.msra.mxu0 0
        %2387 = vmatprep.subr.bf16.mxu0 0
        %2388 = vmatpush2.bf16.msra.mxu0 0
        %2389 = vmatprep.subr.bf16.mxu0 0
        %2390 = vmatpush2.bf16.msra.mxu0 0
        %2391 = vmatprep.subr.bf16.mxu0 0
        %2392 = vmatpush2.bf16.msra.mxu0 0
        %2393 = vmatprep.mubr.bf16.mxu0 0
        %2394 = vmatmul.mubr.bf16.gmra.mxu0 %v2355
        %v2395 = vpop.f32.mrf.mxu0
        %v2396 = vadd.f32 %v2353, %v2395
        %v2397 = vpop.f32.mrf.mxu0
        %v2398 = vpop.f32.mrf.mxu0
        %v2399 = vpop.f32.mrf.mxu0
        %2400 = vdwg.mxu0
        %v2401 = vmax.f32 %v2396, 0.0
        %v2402 = vpack.c.bf16 %v2401, %v2401
        %v2403 = vld [vmem:[%s4 + $0x30] sm:$0x3]
        %v2404 = vld [vmem:[%s5 + $0x5] sm:$0x1]
        %vm2405 = vcmask 31744
        %v2407 = vsel %vm2405, %v2402, 0
        %v2410 = vsel %vm1075, %v2403, 0
        %2412 = vmatprep.subr.bf16.mxu0 0
        %2413 = vmatpush1.bf16.msra.mxu0 0
        %2414 = vmatprep.subr.bf16.mxu0 0
        %2415 = vmatpush1.bf16.msra.mxu0 0
        %2416 = vmatprep.subr.bf16.mxu0 0
        %2417 = vmatpush1.bf16.msra.mxu0 0
        %2418 = vmatprep.subr.bf16.mxu0 0
        %2419 = vmatpush1.bf16.msra.mxu0 0
        %2420 = vmatprep.subr.bf16.mxu0 0
        %2421 = vmatpush1.bf16.msra.mxu0 0
        %2422 = vmatprep.subr.bf16.mxu0 0
        %2423 = vmatpush1.bf16.msra.mxu0 0
        %2424 = vmatprep.subr.bf16.mxu0 0
        %2425 = vmatpush1.bf16.msra.mxu0 0
        %2426 = vmatprep.subr.bf16.mxu0 0
        %2427 = vmatpush1.bf16.msra.mxu0 %v2410
        %2428 = vmatprep.subr.bf16.mxu0 0
        %2429 = vmatpush2.bf16.msra.mxu0 0
        %2430 = vmatprep.subr.bf16.mxu0 0
        %2431 = vmatpush2.bf16.msra.mxu0 0
        %2432 = vmatprep.subr.bf16.mxu0 0
        %2433 = vmatpush2.bf16.msra.mxu0 0
        %2434 = vmatprep.subr.bf16.mxu0 0
        %2435 = vmatpush2.bf16.msra.mxu0 0
        %2436 = vmatprep.subr.bf16.mxu0 0
        %2437 = vmatpush2.bf16.msra.mxu0 0
        %2438 = vmatprep.subr.bf16.mxu0 0
        %2439 = vmatpush2.bf16.msra.mxu0 0
        %2440 = vmatprep.subr.bf16.mxu0 0
        %2441 = vmatpush2.bf16.msra.mxu0 0
        %2442 = vmatprep.subr.bf16.mxu0 0
        %2443 = vmatpush2.bf16.msra.mxu0 0
        %2444 = vmatprep.mubr.bf16.mxu0 0
        %2445 = vmatmul.mubr.bf16.gmra.mxu0 %v2407
        %v2446 = vpop.f32.mrf.mxu0
        %v2447 = vadd.f32 %v2404, %v2446
        %v2448 = vpop.f32.mrf.mxu0
        %v2449 = vpop.f32.mrf.mxu0
        %v2450 = vpop.f32.mrf.mxu0
        %2451 = vdwg.mxu0
        %v2452 = vadd.f32 %v2447, 3.0
        %v2453 = vmax.f32 %v2452, 0.0
        %v2454 = vmin.f32 %v2453, 6.0
        %v2455 = vmul.f32 %v2454, 0.16666667
        %v2456 = vlaneseq
        %v2457 = vshrl.u32 %v2456, 7
        %v2458 = vsub.s32 0, %v2457
        %v2459 = vrot.slane %v2455, %v2458
        %v2460 = vmul.f32 %v2337, %v2459
        %v2461 = vmul.f32 %v2338, %v2459
        %v2462 = vpack.c.bf16 %v2461, %v2460
        %v2463 = vld [vmem:[%s4 + $0x34] sm:$0xf]
        %v2465 = vsel %vm2339, %v2462, 0
        %v2468 = vsel %vm2357, %v2463, 0
        %2470 = vmatprep.subr.bf16.mxu0 0
        %2471 = vmatpush1.bf16.msra.mxu0 0
        %2472 = vmatprep.subr.bf16.mxu0 0
        %2473 = vmatpush1.bf16.msra.mxu0 0
        %2474 = vmatprep.subr.bf16.mxu0 0
        %2475 = vmatpush1.bf16.msra.mxu0 0
        %2476 = vmatprep.subr.bf16.mxu0 0
        %2477 = vmatpush1.bf16.msra.mxu0 0
        %2478 = vmatprep.subr.bf16.mxu0 0
        %2479 = vmatpush1.bf16.msra.mxu0 0
        %2480 = vmatprep.subr.bf16.mxu0 0
        %2481 = vmatpush1.bf16.msra.mxu0 0
        %2482 = vmatprep.subr.bf16.mxu0 0
        %2483 = vmatpush1.bf16.msra.mxu0 0
        %2484 = vmatprep.subr.bf16.mxu0 0
        %2485 = vmatpush1.bf16.msra.mxu0 %v2468
        %2486 = vmatprep.subr.bf16.mxu0 0
        %2487 = vmatpush2.bf16.msra.mxu0 0
        %2488 = vmatprep.subr.bf16.mxu0 0
        %2489 = vmatpush2.bf16.msra.mxu0 0
        %2490 = vmatprep.subr.bf16.mxu0 0
        %2491 = vmatpush2.bf16.msra.mxu0 0
        %2492 = vmatprep.subr.bf16.mxu0 0
        %2493 = vmatpush2.bf16.msra.mxu0 0
        %2494 = vmatprep.subr.bf16.mxu0 0
        %2495 = vmatpush2.bf16.msra.mxu0 0
        %2496 = vmatprep.subr.bf16.mxu0 0
        %2497 = vmatpush2.bf16.msra.mxu0 0
        %2498 = vmatprep.subr.bf16.mxu0 0
        %2499 = vmatpush2.bf16.msra.mxu0 0
        %2500 = vmatprep.subr.bf16.mxu0 0
        %2501 = vmatpush2.bf16.msra.mxu0 0
        %2502 = vmatprep.mubr.bf16.mxu0 0
        %2503 = vmatmul.mubr.bf16.gmra.mxu0 %v2465
        %v2504 = vpop.f32.mrf.mxu0
        %v2505 = vadd.f32 0.0, %v2504
        %v2506 = vpop.f32.mrf.mxu0
        %v2507 = vpop.f32.mrf.mxu0
        %v2508 = vadd.f32 0.0, %v2507
        %v2509 = vpop.f32.mrf.mxu0
        %2510 = vdwg.mxu0
        %v2511 = vld [vmem:[%s5 + $0x6] sm:$0x1]
        %v2512 = vlaneseq
        %v2513 = vshrl.u32 %v2512, 7
        %v2514 = vsub.s32 0, %v2513
        %v2515 = vrot.slane %v2511, %v2514
        %v2516 = vmul.f32 %v2505, %v2515
        %v2517 = vmul.f32 %v2508, %v2515
        %v2518 = vld [vmem:[%s5 + $0x7] sm:$0x1]
        %v2519 = vlaneseq
        %v2520 = vshrl.u32 %v2519, 7
        %v2521 = vsub.s32 0, %v2520
        %v2522 = vrot.slane %v2518, %v2521
        %v2523 = vadd.f32 %v2516, %v2522
        %v2524 = vadd.f32 %v2517, %v2522
        %v2525 = vpack.c.bf16 %v2524, %v2523
        %v2526 = vld [vmem:[%s4 + $0x40] sm:$0xf]
        %v2528 = vsel %vm2339, %v2525, 0
        %v2531 = vsel %vm2357, %v2526, 0
        %2533 = vmatprep.subr.bf16.mxu0 0
        %2534 = vmatpush1.bf16.msra.mxu0 0
        %2535 = vmatprep.subr.bf16.mxu0 0
        %2536 = vmatpush1.bf16.msra.mxu0 0
        %2537 = vmatprep.subr.bf16.mxu0 0
        %2538 = vmatpush1.bf16.msra.mxu0 0
        %2539 = vmatprep.subr.bf16.mxu0 0
        %2540 = vmatpush1.bf16.msra.mxu0 0
        %2541 = vmatprep.subr.bf16.mxu0 0
        %2542 = vmatpush1.bf16.msra.mxu0 0
        %2543 = vmatprep.subr.bf16.mxu0 0
        %2544 = vmatpush1.bf16.msra.mxu0 0
        %2545 = vmatprep.subr.bf16.mxu0 0
        %2546 = vmatpush1.bf16.msra.mxu0 0
        %2547 = vmatprep.subr.bf16.mxu0 0
        %2548 = vmatpush1.bf16.msra.mxu0 %v2531
        %2549 = vmatprep.subr.bf16.mxu0 0
        %2550 = vmatpush2.bf16.msra.mxu0 0
        %2551 = vmatprep.subr.bf16.mxu0 0
        %2552 = vmatpush2.bf16.msra.mxu0 0
        %2553 = vmatprep.subr.bf16.mxu0 0
        %2554 = vmatpush2.bf16.msra.mxu0 0
        %2555 = vmatprep.subr.bf16.mxu0 0
        %2556 = vmatpush2.bf16.msra.mxu0 0
        %2557 = vmatprep.subr.bf16.mxu0 0
        %2558 = vmatpush2.bf16.msra.mxu0 0
        %2559 = vmatprep.subr.bf16.mxu0 0
        %2560 = vmatpush2.bf16.msra.mxu0 0
        %2561 = vmatprep.subr.bf16.mxu0 0
        %2562 = vmatpush2.bf16.msra.mxu0 0
        %2563 = vmatprep.subr.bf16.mxu0 0
        %2564 = vmatpush2.bf16.msra.mxu0 0
        %2565 = vmatprep.mubr.bf16.mxu0 0
        %2566 = vmatmul.mubr.bf16.gmra.mxu0 %v2528
        %v2567 = vpop.f32.mrf.mxu0
        %v2568 = vadd.f32 0.0, %v2567
        %v2569 = vpop.f32.mrf.mxu0
        %v2570 = vpop.f32.mrf.mxu0
        %v2571 = vadd.f32 0.0, %v2570
        %v2572 = vpop.f32.mrf.mxu0
        %2573 = vdwg.mxu0
        %v2574 = vld [vmem:[%s5 + $0x8] sm:$0x1]
        %v2575 = vlaneseq
        %v2576 = vshrl.u32 %v2575, 7
        %v2577 = vsub.s32 0, %v2576
        %v2578 = vrot.slane %v2574, %v2577
        %v2579 = vmul.f32 %v2568, %v2578
        %v2580 = vmul.f32 %v2571, %v2578
        %v2581 = vld [vmem:[%s5 + $0x9] sm:$0x1]
        %v2582 = vlaneseq
        %v2583 = vshrl.u32 %v2582, 7
        %v2584 = vsub.s32 0, %v2583
        %v2585 = vrot.slane %v2581, %v2584
        %v2586 = vadd.f32 %v2579, %v2585
        %v2587 = vadd.f32 %v2580, %v2585
        %v2588 = vmax.f32 %v2586, 0.0
        %v2589 = vmax.f32 %v2587, 0.0
        %v2590 = vld [vmem:[%s4 + $0x38] sm:$0xf]
        %v2591 = vld [vmem:[%s4 + $0x3c] sm:$0x1]
        %v2592 = vunpack.c.l.bf16 %v2590
        %v2593 = vunpack.c.l.bf16 %v2591
        %v2596 = vcombine.high %v2592, %v2592
        %v2598 = vunpack.c.l.s4 1966171168
        %v2599 = vunpack.c.0.s8 %v2598
        %v2600 = vlaneseq
        %v2601 = vshrl.u32 %v2600, 7
        %v2602 = vsub.s32 %v2599, %v2601
        %v2603 = vrot.slane %v2592, %v2602
        %v2605 = vunpack.c.l.s4 1966171168
        %v2606 = vunpack.c.0.s8 %v2605
        %v2607 = vlaneseq
        %v2608 = vshrl.u32 %v2607, 7
        %v2609 = vsub.s32 %v2606, %v2608
        %v2610 = vrot.slane %v2596, %v2609
        %v2611 = vcombine.high %v2603, %v2603
        %v2612 = vcombine.high %v2610, %v2610
        %v2614 = vunpack.c.l.s4 1966171168
        %v2615 = vunpack.c.0.s8 %v2614
        %v2616 = vlaneseq
        %v2617 = vshrl.u32 %v2616, 7
        %v2618 = vsub.s32 %v2615, %v2617
        %v2619 = vrot.slane %v2603, %v2618
        %v2621 = vunpack.c.l.s4 1966171168
        %v2622 = vunpack.c.0.s8 %v2621
        %v2623 = vlaneseq
        %v2624 = vshrl.u32 %v2623, 7
        %v2625 = vsub.s32 %v2622, %v2624
        %v2626 = vrot.slane %v2610, %v2625
        %v2628 = vunpack.c.l.s4 1966171168
        %v2629 = vunpack.c.0.s8 %v2628
        %v2630 = vlaneseq
        %v2631 = vshrl.u32 %v2630, 7
        %v2632 = vsub.s32 %v2629, %v2631
        %v2633 = vrot.slane %v2611, %v2632
        %v2635 = vunpack.c.l.s4 1966171168
        %v2636 = vunpack.c.0.s8 %v2635
        %v2637 = vlaneseq
        %v2638 = vshrl.u32 %v2637, 7
        %v2639 = vsub.s32 %v2636, %v2638
        %v2640 = vrot.slane %v2612, %v2639
        %v2641 = vcombine.high %v2619, %v2619
        %v2642 = vcombine.high %v2626, %v2626
        %v2643 = vcombine.high %v2633, %v2633
        %v2644 = vcombine.high %v2640, %v2640
        %v2646 = vunpack.c.l.s4 1966171168
        %v2647 = vunpack.c.0.s8 %v2646
        %v2648 = vlaneseq
        %v2649 = vshrl.u32 %v2648, 7
        %v2650 = vsub.s32 %v2647, %v2649
        %v2651 = vrot.slane %v2593, %v2650
        %v2653 = vunpack.c.l.s4 1966171168
        %v2654 = vunpack.c.0.s8 %v2653
        %v2655 = vlaneseq
        %v2656 = vshrl.u32 %v2655, 7
        %v2657 = vsub.s32 %v2654, %v2656
        %v2658 = vrot.slane %v2651, %v2657
        %v2659 = vlaneseq
        %v2660 = vshrl.u32 %v2659, 7
        %v2661 = vsub.s32 0, %v2660
        %v2662 = vrot.slane %v2619, %v2661
        %v2663 = vlaneseq
        %v2664 = vshrl.u32 %v2663, 7
        %v2665 = vsub.s32 0, %v2664
        %v2666 = vrot.slane %v2633, %v2665
        %v2667 = vlaneseq
        %v2668 = vshrl.u32 %v2667, 7
        %v2669 = vsub.s32 0, %v2668
        %v2670 = vrot.slane %v2641, %v2669
        %v2671 = vlaneseq
        %v2672 = vshrl.u32 %v2671, 7
        %v2673 = vsub.s32 0, %v2672
        %v2674 = vrot.slane %v2643, %v2673
        %v2675 = vlaneseq
        %v2676 = vshrl.u32 %v2675, 7
        %v2677 = vsub.s32 0, %v2676
        %v2678 = vrot.slane %v2626, %v2677
        %v2679 = vlaneseq
        %v2680 = vshrl.u32 %v2679, 7
        %v2681 = vsub.s32 0, %v2680
        %v2682 = vrot.slane %v2640, %v2681
        %v2683 = vlaneseq
        %v2684 = vshrl.u32 %v2683, 7
        %v2685 = vsub.s32 0, %v2684
        %v2686 = vrot.slane %v2642, %v2685
        %v2687 = vlaneseq
        %v2688 = vshrl.u32 %v2687, 7
        %v2689 = vsub.s32 0, %v2688
        %v2690 = vrot.slane %v2644, %v2689
        %v2691 = vlaneseq
        %v2692 = vshrl.u32 %v2691, 7
        %v2693 = vsub.s32 0, %v2692
        %v2694 = vrot.slane %v2658, %v2693
        %v2704 = vmul.f32 %v2662, %v2588
        %v2705 = vmul.f32 %v2662, %v2589
        %v2706 = vmul.f32 %v2666, %v2588
        %v2707 = vmul.f32 %v2666, %v2589
        %v2708 = vmul.f32 %v2670, %v2588
        %v2709 = vmul.f32 %v2670, %v2589
        %v2710 = vmul.f32 %v2674, %v2588
        %v2711 = vmul.f32 %v2674, %v2589
        %v2712 = vmul.f32 %v2678, %v2588
        %v2713 = vmul.f32 %v2678, %v2589
        %v2714 = vmul.f32 %v2682, %v2588
        %v2715 = vmul.f32 %v2682, %v2589
        %v2716 = vmul.f32 %v2686, %v2588
        %v2717 = vmul.f32 %v2686, %v2589
        %v2718 = vmul.f32 %v2690, %v2588
        %v2719 = vmul.f32 %v2690, %v2589
        %v2720 = vmul.f32 %v2694, %v2588
        %v2721 = vmul.f32 %v2694, %v2589
        %v2722 = vpack.c.bf16 %v2705, %v2704
        %v2723 = vpack.c.bf16 %v2707, %v2706
        %v2724 = vpack.c.bf16 %v2709, %v2708
        %v2725 = vpack.c.bf16 %v2711, %v2710
        %v2726 = vpack.c.bf16 %v2713, %v2712
        %v2727 = vpack.c.bf16 %v2715, %v2714
        %v2728 = vpack.c.bf16 %v2717, %v2716
        %v2729 = vpack.c.bf16 %v2719, %v2718
        %v2730 = vpack.c.bf16 %v2721, %v2720
        %v2731 = vld [vmem:[%s3] sm:$0xf]
        %v2734 = vunpack.c.l.s4 1983009808
        %v2735 = vunpack.c.0.s8 %v2734
        %v2736 = vlaneseq
        %v2737 = vshrl.u32 %v2736, 7
        %v2738 = vsub.s32 %v2735, %v2737
        %v2739 = vrot.slane %v2731, %v2738
        %v2740 = vcombine.high %v2739, %v2739
        %vm2742 = vcmask 130048
        %v2744 = vsel %vm2742, %v2740, 0
        %2746 = vmatprep.subr.bf16.mxu0 0
        %2747 = vmatpush1.bf16.msra.mxu0 %v2729
        %2748 = vmatprep.subr.bf16.mxu0 0
        %2749 = vmatpush1.bf16.msra.mxu0 %v2728
        %2750 = vmatprep.subr.bf16.mxu0 0
        %2751 = vmatpush1.bf16.msra.mxu0 %v2727
        %2752 = vmatprep.subr.bf16.mxu0 0
        %2753 = vmatpush1.bf16.msra.mxu0 %v2726
        %2754 = vmatprep.subr.bf16.mxu0 0
        %2755 = vmatpush1.bf16.msra.mxu0 %v2725
        %2756 = vmatprep.subr.bf16.mxu0 0
        %2757 = vmatpush1.bf16.msra.mxu0 %v2724
        %2758 = vmatprep.subr.bf16.mxu0 0
        %2759 = vmatpush1.bf16.msra.mxu0 %v2723
        %2760 = vmatprep.subr.bf16.mxu0 0
        %2761 = vmatpush1.bf16.msra.mxu0 %v2722
        %2762 = vmatprep.subr.bf16.mxu0 0
        %2763 = vmatpush2.bf16.msra.mxu0 0
        %2764 = vmatprep.subr.bf16.mxu0 0
        %2765 = vmatpush2.bf16.msra.mxu0 0
        %2766 = vmatprep.subr.bf16.mxu0 0
        %2767 = vmatpush2.bf16.msra.mxu0 0
        %2768 = vmatprep.subr.bf16.mxu0 0
        %2769 = vmatpush2.bf16.msra.mxu0 0
        %2770 = vmatprep.subr.bf16.mxu0 0
        %2771 = vmatpush2.bf16.msra.mxu0 0
        %2772 = vmatprep.subr.bf16.mxu0 0
        %2773 = vmatpush2.bf16.msra.mxu0 0
        %2774 = vmatprep.subr.bf16.mxu0 0
        %2775 = vmatpush2.bf16.msra.mxu0 0
        %2776 = vmatprep.subr.bf16.mxu0 0
        %2777 = vmatpush2.bf16.msra.mxu0 %v2730
        %2778 = vmatprep.mubr.bf16.mxu0 %v2744
        %2779 = vmatmul.mubr.bf16.gmra.mxu0 %v2739
        %v2780 = vpop.f32.mrf.mxu0
        %v2781 = vadd.f32 0.0, %v2780
        %v2782 = vpop.f32.mrf.mxu0
        %v2783 = vpop.f32.mrf.mxu0
        %v2784 = vpop.f32.mrf.mxu0
        %2785 = vdwg.mxu0
        %v2786 = vld [vmem:[%s5 + $0xa] sm:$0x1]
        %v2787 = vlaneseq
        %v2788 = vshrl.u32 %v2787, 7
        %v2789 = vsub.s32 0, %v2788
        %v2790 = vrot.slane %v2786, %v2789
        %v2791 = vmul.f32 %v2781, %v2790
        %v2792 = vld [vmem:[%s5 + $0xb] sm:$0x1]
        %v2793 = vlaneseq
        %v2794 = vshrl.u32 %v2793, 7
        %v2795 = vsub.s32 0, %v2794
        %v2796 = vrot.slane %v2792, %v2795
        %v2797 = vadd.f32 %v2791, %v2796
        %v2798 = vmax.f32 %v2797, 0.0
        %v2799 = vpack.c.bf16 %v2798, %v2798
        %v2800 = vld [vmem:[%s4 + $0x44] sm:$0xf]
        %v2801 = vld [vmem:[%s4 + $0x48] sm:$0xf]
        %v2804 = vunpack.c.l.b16 %v2800
        %v2805 = vunpack.c.l.b16 %v2801
        %v2806 = vpack.c.b16 %v2805, %v2804
        %v2809 = vsel %vm2742, %v2799, 0
        %2811 = vmatprep.subr.bf16.mxu0 0
        %2812 = vmatpush1.bf16.msra.mxu0 0
        %2813 = vmatprep.subr.bf16.mxu0 0
        %2814 = vmatpush1.bf16.msra.mxu0 0
        %2815 = vmatprep.subr.bf16.mxu0 0
        %2816 = vmatpush1.bf16.msra.mxu0 0
        %2817 = vmatprep.subr.bf16.mxu0 0
        %2818 = vmatpush1.bf16.msra.mxu0 0
        %2819 = vmatprep.subr.bf16.mxu0 0
        %2820 = vmatpush1.bf16.msra.mxu0 0
        %2821 = vmatprep.subr.bf16.mxu0 0
        %2822 = vmatpush1.bf16.msra.mxu0 0
        %2823 = vmatprep.subr.bf16.mxu0 0
        %2824 = vmatpush1.bf16.msra.mxu0 0
        %2825 = vmatprep.subr.bf16.mxu0 0
        %2826 = vmatpush1.bf16.msra.mxu0 %v2806
        %2827 = vmatprep.subr.bf16.mxu0 0
        %2828 = vmatpush2.bf16.msra.mxu0 0
        %2829 = vmatprep.subr.bf16.mxu0 0
        %2830 = vmatpush2.bf16.msra.mxu0 0
        %2831 = vmatprep.subr.bf16.mxu0 0
        %2832 = vmatpush2.bf16.msra.mxu0 0
        %2833 = vmatprep.subr.bf16.mxu0 0
        %2834 = vmatpush2.bf16.msra.mxu0 0
        %2835 = vmatprep.subr.bf16.mxu0 0
        %2836 = vmatpush2.bf16.msra.mxu0 0
        %2837 = vmatprep.subr.bf16.mxu0 0
        %2838 = vmatpush2.bf16.msra.mxu0 0
        %2839 = vmatprep.subr.bf16.mxu0 0
        %2840 = vmatpush2.bf16.msra.mxu0 0
        %2841 = vmatprep.subr.bf16.mxu0 0
        %2842 = vmatpush2.bf16.msra.mxu0 0
        %2843 = vmatprep.mubr.bf16.mxu0 0
        %2844 = vmatmul.mubr.bf16.gmra.mxu0 %v2809
        %v2845 = vpop.f32.mrf.mxu0
        %v2846 = vadd.f32 0.0, %v2845
        %v2847 = vpop.f32.mrf.mxu0
        %v2848 = vpop.f32.mrf.mxu0
        %v2849 = vpop.f32.mrf.mxu0
        %2850 = vdwg.mxu0
        %v2851 = vld [vmem:[%s5 + $0xc] sm:$0x1]
        %v2852 = vlaneseq
        %v2853 = vshrl.u32 %v2852, 7
        %v2854 = vsub.s32 0, %v2853
        %v2855 = vrot.slane %v2851, %v2854
        %v2856 = vmul.f32 %v2846, %v2855
        %v2857 = vld [vmem:[%s5 + $0xd] sm:$0x1]
        %v2858 = vlaneseq
        %v2859 = vshrl.u32 %v2858, 7
        %v2860 = vsub.s32 0, %v2859
        %v2861 = vrot.slane %v2857, %v2860
        %v2862 = vadd.f32 %v2856, %v2861
        %v2863 = vpack.c.bf16 %v2862, %v2862
        %v2864 = vld [vmem:[%s4 + $0x4c] sm:$0xf]
        %v2865 = vld [vmem:[%s4 + $0x50] sm:$0xf]
        %v2868 = vunpack.c.l.b16 %v2864
        %v2869 = vunpack.c.l.b16 %v2865
        %v2870 = vpack.c.b16 %v2869, %v2868
        %v2873 = vsel %vm2742, %v2863, 0
        %2875 = vmatprep.subr.bf16.mxu0 0
        %2876 = vmatpush1.bf16.msra.mxu0 0
        %2877 = vmatprep.subr.bf16.mxu0 0
        %2878 = vmatpush1.bf16.msra.mxu0 0
        %2879 = vmatprep.subr.bf16.mxu0 0
        %2880 = vmatpush1.bf16.msra.mxu0 0
        %2881 = vmatprep.subr.bf16.mxu0 0
        %2882 = vmatpush1.bf16.msra.mxu0 0
        %2883 = vmatprep.subr.bf16.mxu0 0
        %2884 = vmatpush1.bf16.msra.mxu0 0
        %2885 = vmatprep.subr.bf16.mxu0 0
        %2886 = vmatpush1.bf16.msra.mxu0 0
        %2887 = vmatprep.subr.bf16.mxu0 0
        %2888 = vmatpush1.bf16.msra.mxu0 0
        %2889 = vmatprep.subr.bf16.mxu0 0
        %2890 = vmatpush1.bf16.msra.mxu0 %v2870
        %2891 = vmatprep.subr.bf16.mxu0 0
        %2892 = vmatpush2.bf16.msra.mxu0 0
        %2893 = vmatprep.subr.bf16.mxu0 0
        %2894 = vmatpush2.bf16.msra.mxu0 0
        %2895 = vmatprep.subr.bf16.mxu0 0
        %2896 = vmatpush2.bf16.msra.mxu0 0
        %2897 = vmatprep.subr.bf16.mxu0 0
        %2898 = vmatpush2.bf16.msra.mxu0 0
        %2899 = vmatprep.subr.bf16.mxu0 0
        %2900 = vmatpush2.bf16.msra.mxu0 0
        %2901 = vmatprep.subr.bf16.mxu0 0
        %2902 = vmatpush2.bf16.msra.mxu0 0
        %2903 = vmatprep.subr.bf16.mxu0 0
        %2904 = vmatpush2.bf16.msra.mxu0 0
        %2905 = vmatprep.subr.bf16.mxu0 0
        %2906 = vmatpush2.bf16.msra.mxu0 0
        %2907 = vmatprep.mubr.bf16.mxu0 0
        %2908 = vmatmul.mubr.bf16.gmra.mxu0 %v2873
        %v2909 = vpop.f32.mrf.mxu0
        %v2910 = vadd.f32 0.0, %v2909
        %v2911 = vpop.f32.mrf.mxu0
        %v2912 = vpop.f32.mrf.mxu0
        %v2913 = vpop.f32.mrf.mxu0
        %2914 = vdwg.mxu0
        %v2915 = vld [vmem:[%s5 + $0x1e] sm:$0x1]
        %v2916 = vlaneseq
        %v2917 = vshrl.u32 %v2916, 7
        %v2918 = vsub.s32 0, %v2917
        %v2919 = vrot.slane %v2915, %v2918
        %v2920 = vmul.f32 %v2910, %v2919
        %v2921 = vld [vmem:[%s5 + $0x1f] sm:$0x1]
        %v2922 = vlaneseq
        %v2923 = vshrl.u32 %v2922, 7
        %v2924 = vsub.s32 0, %v2923
        %v2925 = vrot.slane %v2921, %v2924
        %v2926 = vadd.f32 %v2920, %v2925
        %v2927 = vmax.f32 %v2926, 0.0
        %v2928 = vld [vmem:[%s5 + $0xe] sm:$0xff]
        %v2929 = vld [vmem:[%s5 + $0x16] sm:$0xff]
        %v2930 = vlaneseq
        %v2931 = vshrl.u32 %v2930, 7
        %v2932 = vsub.s32 0, %v2931
        %v2933 = vrot.slane %v2927, %v2932
        %v2934 = vmul.f32 %v2933, %v2928
        %v2935 = vlaneseq
        %v2936 = vshrl.u32 %v2935, 7
        %v2937 = vsub.s32 1, %v2936
        %v2938 = vrot.slane %v2927, %v2937
        %v2939 = vmul.f32 %v2938, %v2928
        %v2941 = vrot.slane %v2939, 4
        %v2943 = vadd.f32 %v2934, %v2941
        %v2944 = vlaneseq
        %v2945 = vshrl.u32 %v2944, 7
        %v2946 = vsub.s32 2, %v2945
        %v2947 = vrot.slane %v2927, %v2946
        %v2948 = vmul.f32 %v2947, %v2929
        %v2949 = vadd.f32 %v2943, %v2948
        %v2950 = vlaneseq
        %v2951 = vshrl.u32 %v2950, 7
        %v2952 = vsub.s32 3, %v2951
        %v2953 = vrot.slane %v2927, %v2952
        %v2954 = vmul.f32 %v2953, %v2929
        %v2956 = vrot.slane %v2954, 4
        %v2958 = vadd.f32 %v2949, %v2956
        %v2959 = vld [vmem:[%s5 + $0x20] sm:$0x1]
        %v2960 = vlaneseq
        %v2961 = vshrl.u32 %v2960, 7
        %v2962 = vsub.s32 0, %v2961
        %v2963 = vrot.slane %v2959, %v2962
        %v2964 = vmul.f32 %v2958, %v2963
        %v2965 = vld [vmem:[%s5 + $0x21] sm:$0x1]
        %v2966 = vlaneseq
        %v2967 = vshrl.u32 %v2966, 7
        %v2968 = vsub.s32 0, %v2967
        %v2969 = vrot.slane %v2965, %v2968
        %v2970 = vadd.f32 %v2964, %v2969
        %v2971 = vmax.f32 %v2970, 0.0
        %v2972 = vpack.c.bf16 %v2971, %v2971
        %v2973 = vld [vmem:[%s4 + $0x54] sm:$0xf]
        %v2974 = vld [vmem:[%s4 + $0x58] sm:$0xf]
        %v2975 = vld [vmem:[%s4 + $0x5c] sm:$0xf]
        %v2979 = vunpack.c.l.b16 %v2973
        %v2980 = vunpack.c.l.b16 %v2974
        %v2981 = vunpack.c.l.b16 %v2975
        %v2982 = vpack.c.b16 %v2980, %v2979
        %v2983 = vpack.c.b16 %v2981, %v2981
        %vm2985 = vcmask 195584
        %v2987 = vsel %vm2985, %v2972, 0
        %v2990 = vsel %vm2357, %v2983, 0
        %2992 = vmatprep.subr.bf16.mxu0 0
        %2993 = vmatpush1.bf16.msra.mxu0 0
        %2994 = vmatprep.subr.bf16.mxu0 0
        %2995 = vmatpush1.bf16.msra.mxu0 0
        %2996 = vmatprep.subr.bf16.mxu0 0
        %2997 = vmatpush1.bf16.msra.mxu0 0
        %2998 = vmatprep.subr.bf16.mxu0 0
        %2999 = vmatpush1.bf16.msra.mxu0 0
        %3000 = vmatprep.subr.bf16.mxu0 0
        %3001 = vmatpush1.bf16.msra.mxu0 0
        %3002 = vmatprep.subr.bf16.mxu0 0
        %3003 = vmatpush1.bf16.msra.mxu0 0
        %3004 = vmatprep.subr.bf16.mxu0 0
        %3005 = vmatpush1.bf16.msra.mxu0 %v2990
        %3006 = vmatprep.subr.bf16.mxu0 0
        %3007 = vmatpush1.bf16.msra.mxu0 %v2982
        %3008 = vmatprep.subr.bf16.mxu0 0
        %3009 = vmatpush2.bf16.msra.mxu0 0
        %3010 = vmatprep.subr.bf16.mxu0 0
        %3011 = vmatpush2.bf16.msra.mxu0 0
        %3012 = vmatprep.subr.bf16.mxu0 0
        %3013 = vmatpush2.bf16.msra.mxu0 0
        %3014 = vmatprep.subr.bf16.mxu0 0
        %3015 = vmatpush2.bf16.msra.mxu0 0
        %3016 = vmatprep.subr.bf16.mxu0 0
        %3017 = vmatpush2.bf16.msra.mxu0 0
        %3018 = vmatprep.subr.bf16.mxu0 0
        %3019 = vmatpush2.bf16.msra.mxu0 0
        %3020 = vmatprep.subr.bf16.mxu0 0
        %3021 = vmatpush2.bf16.msra.mxu0 0
        %3022 = vmatprep.subr.bf16.mxu0 0
        %3023 = vmatpush2.bf16.msra.mxu0 0
        %3024 = vmatprep.mubr.bf16.mxu0 0
        %3025 = vmatmul.mubr.bf16.gmra.mxu0 %v2987
        %v3026 = vpop.f32.mrf.mxu0
        %v3027 = vadd.f32 0.0, %v3026
        %v3028 = vpop.f32.mrf.mxu0
        %v3029 = vpop.f32.mrf.mxu0
        %v3030 = vpop.f32.mrf.mxu0
        %3031 = vdwg.mxu0
        %v3032 = vld [vmem:[%s5 + $0x22] sm:$0x1]
        %v3033 = vlaneseq
        %v3034 = vshrl.u32 %v3033, 7
        %v3035 = vsub.s32 0, %v3034
        %v3036 = vrot.slane %v3032, %v3035
        %v3037 = vmul.f32 %v3027, %v3036
        %v3038 = vld [vmem:[%s5 + $0x23] sm:$0x1]
        %v3039 = vlaneseq
        %v3040 = vshrl.u32 %v3039, 7
        %v3041 = vsub.s32 0, %v3040
        %v3042 = vrot.slane %v3038, %v3041
        %v3043 = vadd.f32 %v3037, %v3042
        %v3044 = vadd.f32 %v3043, %v2862
        %v3045 = vpack.c.bf16 %v3044, %v3044
        %v3046 = vld [vmem:[%s4 + $0x60] sm:$0xf]
        %v3047 = vld [vmem:[%s4 + $0x64] sm:$0xf]
        %v3050 = vunpack.c.l.b16 %v3046
        %v3051 = vunpack.c.l.b16 %v3047
        %v3052 = vpack.c.b16 %v3051, %v3050
        %v3055 = vsel %vm2742, %v3045, 0
        %3057 = vmatprep.subr.bf16.mxu0 0
        %3058 = vmatpush1.bf16.msra.mxu0 0
        %3059 = vmatprep.subr.bf16.mxu0 0
        %3060 = vmatpush1.bf16.msra.mxu0 0
        %3061 = vmatprep.subr.bf16.mxu0 0
        %3062 = vmatpush1.bf16.msra.mxu0 0
        %3063 = vmatprep.subr.bf16.mxu0 0
        %3064 = vmatpush1.bf16.msra.mxu0 0
        %3065 = vmatprep.subr.bf16.mxu0 0
        %3066 = vmatpush1.bf16.msra.mxu0 0
        %3067 = vmatprep.subr.bf16.mxu0 0
        %3068 = vmatpush1.bf16.msra.mxu0 0
        %3069 = vmatprep.subr.bf16.mxu0 0
        %3070 = vmatpush1.bf16.msra.mxu0 0
        %3071 = vmatprep.subr.bf16.mxu0 0
        %3072 = vmatpush1.bf16.msra.mxu0 %v3052
        %3073 = vmatprep.subr.bf16.mxu0 0
        %3074 = vmatpush2.bf16.msra.mxu0 0
        %3075 = vmatprep.subr.bf16.mxu0 0
        %3076 = vmatpush2.bf16.msra.mxu0 0
        %3077 = vmatprep.subr.bf16.mxu0 0
        %3078 = vmatpush2.bf16.msra.mxu0 0
        %3079 = vmatprep.subr.bf16.mxu0 0
        %3080 = vmatpush2.bf16.msra.mxu0 0
        %3081 = vmatprep.subr.bf16.mxu0 0
        %3082 = vmatpush2.bf16.msra.mxu0 0
        %3083 = vmatprep.subr.bf16.mxu0 0
        %3084 = vmatpush2.bf16.msra.mxu0 0
        %3085 = vmatprep.subr.bf16.mxu0 0
        %3086 = vmatpush2.bf16.msra.mxu0 0
        %3087 = vmatprep.subr.bf16.mxu0 0
        %3088 = vmatpush2.bf16.msra.mxu0 0
        %3089 = vmatprep.mubr.bf16.mxu0 0
        %3090 = vmatmul.mubr.bf16.gmra.mxu0 %v3055
        %v3091 = vpop.f32.mrf.mxu0
        %v3092 = vadd.f32 0.0, %v3091
        %v3093 = vpop.f32.mrf.mxu0
        %v3094 = vpop.f32.mrf.mxu0
        %v3095 = vpop.f32.mrf.mxu0
        %3096 = vdwg.mxu0
        %v3097 = vld [vmem:[%s5 + $0x28] sm:$0x1]
        %v3098 = vlaneseq
        %v3099 = vshrl.u32 %v3098, 7
        %v3100 = vsub.s32 0, %v3099
        %v3101 = vrot.slane %v3097, %v3100
        %v3102 = vmul.f32 %v3092, %v3101
        %v3103 = vld [vmem:[%s5 + $0x29] sm:$0x1]
        %v3104 = vlaneseq
        %v3105 = vshrl.u32 %v3104, 7
        %v3106 = vsub.s32 0, %v3105
        %v3107 = vrot.slane %v3103, %v3106
        %v3108 = vadd.f32 %v3102, %v3107
        %v3109 = vadd.f32 %v3108, 3.0
        %v3110 = vmax.f32 %v3109, 0.0
        %v3111 = vmin.f32 %v3110, 6.0
        %v3112 = vmul.f32 %v3108, %v3111
        %v3113 = vmul.f32 %v3112, 0.16666667
        %v3114 = vld [vmem:[%s5 + $0x24] sm:$0xf]
        %v3115 = vmul.f32 %v3113, %v3114
        %vm3116 = vcmask 257024
        %v3117 = vsel %vm3116, %v3115, 0.0
        %v3118 = vrot.slane %v3117, 4
        %v3119 = vadd.f32 %v3117, %v3118
        %v3120 = vrot.slane %v3119, 2
        %v3121 = vadd.f32 %v3119, %v3120
        %v3122 = vrot.slane %v3121, 1
        %v3123 = vadd.f32 %v3121, %v3122
        %v3124 = vld [vmem:[%s5 + $0x2a] sm:$0x1]
        %v3125 = vmul.f32 %v3123, %v3124
        %v3126 = vld [vmem:[%s5 + $0x2b] sm:$0x1]
        %v3127 = vadd.f32 %v3125, %v3126
        %v3128 = vadd.f32 %v3127, 3.0
        %v3129 = vmax.f32 %v3128, 0.0
        %v3130 = vmin.f32 %v3129, 6.0
        %v3131 = vmul.f32 %v3127, %v3130
        %v3132 = vmul.f32 %v3131, 0.16666667
        %v3133 = vadd.f32 %v3132, 0.0
        %v3134 = vpack.c.bf16 %v3133, %v3133
        %v3135 = vld [vmem:[%s4 + $0x68] sm:$0xf]
        %v3136 = vld [vmem:[%s4 + $0x6c] sm:$0xf]
        %v3137 = vld [vmem:[%s4 + $0x70] sm:$0xf]
        %v3138 = vld [vmem:[%s4 + $0x74] sm:$0xf]
        %v3139 = vld [vmem:[%s5 + $0x2c] sm:$0x1]
        %v3144 = vunpack.c.l.b16 %v3135
        %v3145 = vunpack.c.l.b16 %v3136
        %v3146 = vunpack.c.l.b16 %v3137
        %v3147 = vunpack.c.l.b16 %v3138
        %v3148 = vpack.c.b16 %v3145, %v3144
        %v3149 = vpack.c.b16 %v3147, %v3146
        %vm3152 = vcmask 261120
        %v3154 = vsel %vm3152, %v3134, 0
        %3156 = vmatprep.subr.bf16.mxu0 0
        %3157 = vmatpush1.bf16.msra.mxu0 0
        %3158 = vmatprep.subr.bf16.mxu0 0
        %3159 = vmatpush1.bf16.msra.mxu0 0
        %3160 = vmatprep.subr.bf16.mxu0 0
        %3161 = vmatpush1.bf16.msra.mxu0 0
        %3162 = vmatprep.subr.bf16.mxu0 0
        %3163 = vmatpush1.bf16.msra.mxu0 0
        %3164 = vmatprep.subr.bf16.mxu0 0
        %3165 = vmatpush1.bf16.msra.mxu0 0
        %3166 = vmatprep.subr.bf16.mxu0 0
        %3167 = vmatpush1.bf16.msra.mxu0 0
        %3168 = vmatprep.subr.bf16.mxu0 0
        %3169 = vmatpush1.bf16.msra.mxu0 %v3149
        %3170 = vmatprep.subr.bf16.mxu0 0
        %3171 = vmatpush1.bf16.msra.mxu0 %v3148
        %3172 = vmatprep.subr.bf16.mxu0 0
        %3173 = vmatpush2.bf16.msra.mxu0 0
        %3174 = vmatprep.subr.bf16.mxu0 0
        %3175 = vmatpush2.bf16.msra.mxu0 0
        %3176 = vmatprep.subr.bf16.mxu0 0
        %3177 = vmatpush2.bf16.msra.mxu0 0
        %3178 = vmatprep.subr.bf16.mxu0 0
        %3179 = vmatpush2.bf16.msra.mxu0 0
        %3180 = vmatprep.subr.bf16.mxu0 0
        %3181 = vmatpush2.bf16.msra.mxu0 0
        %3182 = vmatprep.subr.bf16.mxu0 0
        %3183 = vmatpush2.bf16.msra.mxu0 0
        %3184 = vmatprep.subr.bf16.mxu0 0
        %3185 = vmatpush2.bf16.msra.mxu0 0
        %3186 = vmatprep.subr.bf16.mxu0 0
        %3187 = vmatpush2.bf16.msra.mxu0 0
        %3188 = vmatprep.mubr.bf16.mxu0 0
        %3189 = vmatmul.mubr.bf16.gmra.mxu0 %v3154
        %v3190 = vpop.f32.mrf.mxu0
        %v3191 = vadd.f32 %v3139, %v3190
        %v3192 = vpop.f32.mrf.mxu0
        %v3193 = vpop.f32.mrf.mxu0
        %v3194 = vpop.f32.mrf.mxu0
        %3195 = vdwg.mxu0
        %v3196 = vmax.f32 %v3191, 0.0
        %v3197 = vpack.c.bf16 %v3196, %v3196
        %v3198 = vld [vmem:[%s4 + $0x78] sm:$0xf]
        %v3199 = vld [vmem:[%s5 + $0x2d] sm:$0x1]
        %v3201 = vsel %vm2339, %v3197, 0
        %v3204 = vsel %vm2357, %v3198, 0
        %3206 = vmatprep.subr.bf16.mxu0 0
        %3207 = vmatpush1.bf16.msra.mxu0 0
        %3208 = vmatprep.subr.bf16.mxu0 0
        %3209 = vmatpush1.bf16.msra.mxu0 0
        %3210 = vmatprep.subr.bf16.mxu0 0
        %3211 = vmatpush1.bf16.msra.mxu0 0
        %3212 = vmatprep.subr.bf16.mxu0 0
        %3213 = vmatpush1.bf16.msra.mxu0 0
        %3214 = vmatprep.subr.bf16.mxu0 0
        %3215 = vmatpush1.bf16.msra.mxu0 0
        %3216 = vmatprep.subr.bf16.mxu0 0
        %3217 = vmatpush1.bf16.msra.mxu0 0
        %3218 = vmatprep.subr.bf16.mxu0 0
        %3219 = vmatpush1.bf16.msra.mxu0 0
        %3220 = vmatprep.subr.bf16.mxu0 0
        %3221 = vmatpush1.bf16.msra.mxu0 %v3204
        %3222 = vmatprep.subr.bf16.mxu0 0
        %3223 = vmatpush2.bf16.msra.mxu0 0
        %3224 = vmatprep.subr.bf16.mxu0 0
        %3225 = vmatpush2.bf16.msra.mxu0 0
        %3226 = vmatprep.subr.bf16.mxu0 0
        %3227 = vmatpush2.bf16.msra.mxu0 0
        %3228 = vmatprep.subr.bf16.mxu0 0
        %3229 = vmatpush2.bf16.msra.mxu0 0
        %3230 = vmatprep.subr.bf16.mxu0 0
        %3231 = vmatpush2.bf16.msra.mxu0 0
        %3232 = vmatprep.subr.bf16.mxu0 0
        %3233 = vmatpush2.bf16.msra.mxu0 0
        %3234 = vmatprep.subr.bf16.mxu0 0
        %3235 = vmatpush2.bf16.msra.mxu0 0
        %3236 = vmatprep.subr.bf16.mxu0 0
        %3237 = vmatpush2.bf16.msra.mxu0 0
        %3238 = vmatprep.mubr.bf16.mxu0 0
        %3239 = vmatmul.mubr.bf16.gmra.mxu0 %v3201
        %v3240 = vpop.f32.mrf.mxu0
        %v3241 = vadd.f32 %v3199, %v3240
        %v3242 = vpop.f32.mrf.mxu0
        %v3243 = vpop.f32.mrf.mxu0
        %v3244 = vpop.f32.mrf.mxu0
        %3245 = vdwg.mxu0
        %v3246 = vadd.f32 %v3241, 3.0
        %v3247 = vmax.f32 %v3246, 0.0
        %v3248 = vmin.f32 %v3247, 6.0
        %v3249 = vmul.f32 %v3248, 0.16666667
        %v3250 = vmul.f32 %v3132, %v3249
        %v3251 = vpack.c.bf16 %v3250, %v3250
        %v3252 = vld [vmem:[%s4 + $0x7c] sm:$0xf]
        %v3253 = vld [vmem:[%s4 + $0x80] sm:$0xf]
        %v3254 = vld [vmem:[%s4 + $0x84] sm:$0xf]
        %v3255 = vld [vmem:[%s4 + $0x88] sm:$0xf]
        %v3260 = vunpack.c.l.b16 %v3252
        %v3261 = vunpack.c.l.b16 %v3253
        %v3262 = vunpack.c.l.b16 %v3254
        %v3263 = vunpack.c.l.b16 %v3255
        %v3264 = vpack.c.b16 %v3261, %v3260
        %v3265 = vpack.c.b16 %v3263, %v3262
        %v3269 = vsel %vm3152, %v3251, 0
        %3271 = vmatprep.subr.bf16.mxu0 0
        %3272 = vmatpush1.bf16.msra.mxu0 0
        %3273 = vmatprep.subr.bf16.mxu0 0
        %3274 = vmatpush1.bf16.msra.mxu0 0
        %3275 = vmatprep.subr.bf16.mxu0 0
        %3276 = vmatpush1.bf16.msra.mxu0 0
        %3277 = vmatprep.subr.bf16.mxu0 0
        %3278 = vmatpush1.bf16.msra.mxu0 0
        %3279 = vmatprep.subr.bf16.mxu0 0
        %3280 = vmatpush1.bf16.msra.mxu0 0
        %3281 = vmatprep.subr.bf16.mxu0 0
        %3282 = vmatpush1.bf16.msra.mxu0 0
        %3283 = vmatprep.subr.bf16.mxu0 0
        %3284 = vmatpush1.bf16.msra.mxu0 %v3265
        %3285 = vmatprep.subr.bf16.mxu0 0
        %3286 = vmatpush1.bf16.msra.mxu0 %v3264
        %3287 = vmatprep.subr.bf16.mxu0 0
        %3288 = vmatpush2.bf16.msra.mxu0 0
        %3289 = vmatprep.subr.bf16.mxu0 0
        %3290 = vmatpush2.bf16.msra.mxu0 0
        %3291 = vmatprep.subr.bf16.mxu0 0
        %3292 = vmatpush2.bf16.msra.mxu0 0
        %3293 = vmatprep.subr.bf16.mxu0 0
        %3294 = vmatpush2.bf16.msra.mxu0 0
        %3295 = vmatprep.subr.bf16.mxu0 0
        %3296 = vmatpush2.bf16.msra.mxu0 0
        %3297 = vmatprep.subr.bf16.mxu0 0
        %3298 = vmatpush2.bf16.msra.mxu0 0
        %3299 = vmatprep.subr.bf16.mxu0 0
        %3300 = vmatpush2.bf16.msra.mxu0 0
        %3301 = vmatprep.subr.bf16.mxu0 0
        %3302 = vmatpush2.bf16.msra.mxu0 0
        %3303 = vmatprep.mubr.bf16.mxu0 0
        %3304 = vmatmul.mubr.bf16.gmra.mxu0 %v3269
        %v3305 = vpop.f32.mrf.mxu0
        %v3306 = vadd.f32 0.0, %v3305
        %v3307 = vpop.f32.mrf.mxu0
        %v3308 = vpop.f32.mrf.mxu0
        %v3309 = vpop.f32.mrf.mxu0
        %3310 = vdwg.mxu0
        %v3311 = vld [vmem:[%s5 + $0x2e] sm:$0x1]
        %v3312 = vmul.f32 %v3306, %v3311
        %v3313 = vld [vmem:[%s5 + $0x2f] sm:$0x1]
        %v3314 = vadd.f32 %v3312, %v3313
        %v3315 = vpack.c.bf16 %v3314, %v3314
        %v3316 = vld [vmem:[%s4 + $0x8c] sm:$0xf]
        %v3317 = vld [vmem:[%s4 + $0x90] sm:$0xf]
        %v3318 = vld [vmem:[%s4 + $0x94] sm:$0xf]
        %v3322 = vunpack.c.l.b16 %v3316
        %v3323 = vunpack.c.l.b16 %v3317
        %v3324 = vunpack.c.l.b16 %v3318
        %v3325 = vpack.c.b16 %v3323, %v3322
        %v3326 = vpack.c.b16 %v3324, %v3324
        %v3329 = vsel %vm2985, %v3315, 0
        %v3332 = vsel %vm2357, %v3326, 0
        %3334 = vmatprep.subr.bf16.mxu0 0
        %3335 = vmatpush1.bf16.msra.mxu0 0
        %3336 = vmatprep.subr.bf16.mxu0 0
        %3337 = vmatpush1.bf16.msra.mxu0 0
        %3338 = vmatprep.subr.bf16.mxu0 0
        %3339 = vmatpush1.bf16.msra.mxu0 0
        %3340 = vmatprep.subr.bf16.mxu0 0
        %3341 = vmatpush1.bf16.msra.mxu0 0
        %3342 = vmatprep.subr.bf16.mxu0 0
        %3343 = vmatpush1.bf16.msra.mxu0 0
        %3344 = vmatprep.subr.bf16.mxu0 0
        %3345 = vmatpush1.bf16.msra.mxu0 0
        %3346 = vmatprep.subr.bf16.mxu0 0
        %3347 = vmatpush1.bf16.msra.mxu0 %v3332
        %3348 = vmatprep.subr.bf16.mxu0 0
        %3349 = vmatpush1.bf16.msra.mxu0 %v3325
        %3350 = vmatprep.subr.bf16.mxu0 0
        %3351 = vmatpush2.bf16.msra.mxu0 0
        %3352 = vmatprep.subr.bf16.mxu0 0
        %3353 = vmatpush2.bf16.msra.mxu0 0
        %3354 = vmatprep.subr.bf16.mxu0 0
        %3355 = vmatpush2.bf16.msra.mxu0 0
        %3356 = vmatprep.subr.bf16.mxu0 0
        %3357 = vmatpush2.bf16.msra.mxu0 0
        %3358 = vmatprep.subr.bf16.mxu0 0
        %3359 = vmatpush2.bf16.msra.mxu0 0
        %3360 = vmatprep.subr.bf16.mxu0 0
        %3361 = vmatpush2.bf16.msra.mxu0 0
        %3362 = vmatprep.subr.bf16.mxu0 0
        %3363 = vmatpush2.bf16.msra.mxu0 0
        %3364 = vmatprep.subr.bf16.mxu0 0
        %3365 = vmatpush2.bf16.msra.mxu0 0
        %3366 = vmatprep.mubr.bf16.mxu0 0
        %3367 = vmatmul.mubr.bf16.gmra.mxu0 %v3329
        %v3368 = vpop.f32.mrf.mxu0
        %v3369 = vadd.f32 0.0, %v3368
        %v3370 = vpop.f32.mrf.mxu0
        %v3371 = vpop.f32.mrf.mxu0
        %v3372 = vpop.f32.mrf.mxu0
        %3373 = vdwg.mxu0
        %v3374 = vld [vmem:[%s5 + $0x31] sm:$0x1]
        %v3375 = vmul.f32 %v3369, %v3374
        %v3376 = vld [vmem:[%s5 + $0x32] sm:$0x1]
        %v3377 = vadd.f32 %v3375, %v3376
        %v3378 = vadd.f32 %v3377, 3.0
        %v3379 = vmax.f32 %v3378, 0.0
        %v3380 = vmin.f32 %v3379, 6.0
        %v3381 = vmul.f32 %v3377, %v3380
        %v3382 = vmul.f32 %v3381, 0.16666667
        %v3383 = vld [vmem:[%s5 + $0x30] sm:$0x1]
        %v3384 = vmul.f32 %v3382, %v3383
        %v3385 = vadd.f32 %v3384, 0.0
        %v3386 = vld [vmem:[%s5 + $0x33] sm:$0x1]
        %v3387 = vmul.f32 %v3385, %v3386
        %v3388 = vld [vmem:[%s5 + $0x34] sm:$0x1]
        %v3389 = vadd.f32 %v3387, %v3388
        %v3390 = vadd.f32 %v3389, 3.0
        %v3391 = vmax.f32 %v3390, 0.0
        %v3392 = vmin.f32 %v3391, 6.0
        %v3393 = vmul.f32 %v3389, %v3392
        %v3394 = vmul.f32 %v3393, 0.16666667
        %v3395 = vadd.f32 %v3394, 0.0
        %v3396 = vpack.c.bf16 %v3395, %v3395
        %v3397 = vld [vmem:[%s4 + $0x98] sm:$0xf]
        %v3398 = vld [vmem:[%s4 + $0x9c] sm:$0xf]
        %v3399 = vld [vmem:[%s4 + $0xa0] sm:$0xf]
        %v3400 = vld [vmem:[%s4 + $0xa4] sm:$0xf]
        %v3401 = vld [vmem:[%s4 + $0xa8] sm:$0xf]
        %v3402 = vld [vmem:[%s4 + $0xac] sm:$0xf]
        %v3403 = vld [vmem:[%s5 + $0x35] sm:$0x1]
        %v3410 = vunpack.c.l.b16 %v3397
        %v3411 = vunpack.c.l.b16 %v3398
        %v3412 = vunpack.c.l.b16 %v3399
        %v3413 = vunpack.c.l.b16 %v3400
        %v3414 = vunpack.c.l.b16 %v3401
        %v3415 = vunpack.c.l.b16 %v3402
        %v3416 = vpack.c.b16 %v3411, %v3410
        %v3417 = vpack.c.b16 %v3413, %v3412
        %v3418 = vpack.c.b16 %v3415, %v3414
        %vm3422 = vcmask 392192
        %v3424 = vsel %vm3422, %v3396, 0
        %3426 = vmatprep.subr.bf16.mxu0 0
        %3427 = vmatpush1.bf16.msra.mxu0 0
        %3428 = vmatprep.subr.bf16.mxu0 0
        %3429 = vmatpush1.bf16.msra.mxu0 0
        %3430 = vmatprep.subr.bf16.mxu0 0
        %3431 = vmatpush1.bf16.msra.mxu0 0
        %3432 = vmatprep.subr.bf16.mxu0 0
        %3433 = vmatpush1.bf16.msra.mxu0 0
        %3434 = vmatprep.subr.bf16.mxu0 0
        %3435 = vmatpush1.bf16.msra.mxu0 0
        %3436 = vmatprep.subr.bf16.mxu0 0
        %3437 = vmatpush1.bf16.msra.mxu0 %v3418
        %3438 = vmatprep.subr.bf16.mxu0 0
        %3439 = vmatpush1.bf16.msra.mxu0 %v3417
        %3440 = vmatprep.subr.bf16.mxu0 0
        %3441 = vmatpush1.bf16.msra.mxu0 %v3416
        %3442 = vmatprep.subr.bf16.mxu0 0
        %3443 = vmatpush2.bf16.msra.mxu0 0
        %3444 = vmatprep.subr.bf16.mxu0 0
        %3445 = vmatpush2.bf16.msra.mxu0 0
        %3446 = vmatprep.subr.bf16.mxu0 0
        %3447 = vmatpush2.bf16.msra.mxu0 0
        %3448 = vmatprep.subr.bf16.mxu0 0
        %3449 = vmatpush2.bf16.msra.mxu0 0
        %3450 = vmatprep.subr.bf16.mxu0 0
        %3451 = vmatpush2.bf16.msra.mxu0 0
        %3452 = vmatprep.subr.bf16.mxu0 0
        %3453 = vmatpush2.bf16.msra.mxu0 0
        %3454 = vmatprep.subr.bf16.mxu0 0
        %3455 = vmatpush2.bf16.msra.mxu0 0
        %3456 = vmatprep.subr.bf16.mxu0 0
        %3457 = vmatpush2.bf16.msra.mxu0 0
        %3458 = vmatprep.mubr.bf16.mxu0 0
        %3459 = vmatmul.mubr.bf16.gmra.mxu0 %v3424
        %v3460 = vpop.f32.mrf.mxu0
        %v3461 = vadd.f32 %v3403, %v3460
        %v3462 = vpop.f32.mrf.mxu0
        %v3463 = vpop.f32.mrf.mxu0
        %v3464 = vpop.f32.mrf.mxu0
        %3465 = vdwg.mxu0
        %v3466 = vmax.f32 %v3461, 0.0
        %v3467 = vpack.c.bf16 %v3466, %v3466
        %v3468 = vld [vmem:[%s4 + $0xb0] sm:$0xf]
        %v3469 = vld [vmem:[%s4 + $0xb4] sm:$0x3]
        %v3470 = vld [vmem:[%s5 + $0x36] sm:$0x1]
        %v3473 = vunpack.c.l.b16 %v3468
        %v3474 = vunpack.c.l.b16 %v3469
        %v3475 = vpack.c.b16 %v3474, %v3473
        %vm3476 = vcmask 97280
        %v3478 = vsel %vm3476, %v3467, 0
        %vm3480 = vcmask 1045504
        %v3482 = vsel %vm3480, %v3475, 0
        %3484 = vmatprep.subr.bf16.mxu0 0
        %3485 = vmatpush1.bf16.msra.mxu0 0
        %3486 = vmatprep.subr.bf16.mxu0 0
        %3487 = vmatpush1.bf16.msra.mxu0 0
        %3488 = vmatprep.subr.bf16.mxu0 0
        %3489 = vmatpush1.bf16.msra.mxu0 0
        %3490 = vmatprep.subr.bf16.mxu0 0
        %3491 = vmatpush1.bf16.msra.mxu0 0
        %3492 = vmatprep.subr.bf16.mxu0 0
        %3493 = vmatpush1.bf16.msra.mxu0 0
        %3494 = vmatprep.subr.bf16.mxu0 0
        %3495 = vmatpush1.bf16.msra.mxu0 0
        %3496 = vmatprep.subr.bf16.mxu0 0
        %3497 = vmatpush1.bf16.msra.mxu0 0
        %3498 = vmatprep.subr.bf16.mxu0 0
        %3499 = vmatpush1.bf16.msra.mxu0 %v3482
        %3500 = vmatprep.subr.bf16.mxu0 0
        %3501 = vmatpush2.bf16.msra.mxu0 0
        %3502 = vmatprep.subr.bf16.mxu0 0
        %3503 = vmatpush2.bf16.msra.mxu0 0
        %3504 = vmatprep.subr.bf16.mxu0 0
        %3505 = vmatpush2.bf16.msra.mxu0 0
        %3506 = vmatprep.subr.bf16.mxu0 0
        %3507 = vmatpush2.bf16.msra.mxu0 0
        %3508 = vmatprep.subr.bf16.mxu0 0
        %3509 = vmatpush2.bf16.msra.mxu0 0
        %3510 = vmatprep.subr.bf16.mxu0 0
        %3511 = vmatpush2.bf16.msra.mxu0 0
        %3512 = vmatprep.subr.bf16.mxu0 0
        %3513 = vmatpush2.bf16.msra.mxu0 0
        %3514 = vmatprep.subr.bf16.mxu0 0
        %3515 = vmatpush2.bf16.msra.mxu0 0
        %3516 = vmatprep.mubr.bf16.mxu0 0
        %3517 = vmatmul.mubr.bf16.gmra.mxu0 %v3478
        %v3518 = vpop.f32.mrf.mxu0
        %v3519 = vadd.f32 %v3470, %v3518
        %v3520 = vpop.f32.mrf.mxu0
        %v3521 = vpop.f32.mrf.mxu0
        %v3522 = vpop.f32.mrf.mxu0
        %3523 = vdwg.mxu0
        %v3524 = vadd.f32 %v3519, 3.0
        %v3525 = vmax.f32 %v3524, 0.0
        %v3526 = vmin.f32 %v3525, 6.0
        %v3527 = vmul.f32 %v3526, 0.16666667
        %v3528 = vmul.f32 %v3394, %v3527
        %v3529 = vpack.c.bf16 %v3528, %v3528
        %v3530 = vld [vmem:[%s4 + $0xb8] sm:$0xf]
        %v3531 = vld [vmem:[%s4 + $0xbc] sm:$0xf]
        %v3532 = vld [vmem:[%s4 + $0xc0] sm:$0xf]
        %v3533 = vld [vmem:[%s4 + $0xc4] sm:$0xf]
        %v3534 = vld [vmem:[%s4 + $0xc8] sm:$0xf]
        %v3535 = vld [vmem:[%s4 + $0xcc] sm:$0xf]
        %v3542 = vunpack.c.l.b16 %v3530
        %v3543 = vunpack.c.l.b16 %v3531
        %v3544 = vunpack.c.l.b16 %v3532
        %v3545 = vunpack.c.l.b16 %v3533
        %v3546 = vunpack.c.l.b16 %v3534
        %v3547 = vunpack.c.l.b16 %v3535
        %v3548 = vpack.c.b16 %v3543, %v3542
        %v3549 = vpack.c.b16 %v3545, %v3544
        %v3550 = vpack.c.b16 %v3547, %v3546
        %v3555 = vsel %vm3422, %v3529, 0
        %3557 = vmatprep.subr.bf16.mxu0 0
        %3558 = vmatpush1.bf16.msra.mxu0 0
        %3559 = vmatprep.subr.bf16.mxu0 0
        %3560 = vmatpush1.bf16.msra.mxu0 0
        %3561 = vmatprep.subr.bf16.mxu0 0
        %3562 = vmatpush1.bf16.msra.mxu0 0
        %3563 = vmatprep.subr.bf16.mxu0 0
        %3564 = vmatpush1.bf16.msra.mxu0 0
        %3565 = vmatprep.subr.bf16.mxu0 0
        %3566 = vmatpush1.bf16.msra.mxu0 0
        %3567 = vmatprep.subr.bf16.mxu0 0
        %3568 = vmatpush1.bf16.msra.mxu0 %v3550
        %3569 = vmatprep.subr.bf16.mxu0 0
        %3570 = vmatpush1.bf16.msra.mxu0 %v3549
        %3571 = vmatprep.subr.bf16.mxu0 0
        %3572 = vmatpush1.bf16.msra.mxu0 %v3548
        %3573 = vmatprep.subr.bf16.mxu0 0
        %3574 = vmatpush2.bf16.msra.mxu0 0
        %3575 = vmatprep.subr.bf16.mxu0 0
        %3576 = vmatpush2.bf16.msra.mxu0 0
        %3577 = vmatprep.subr.bf16.mxu0 0
        %3578 = vmatpush2.bf16.msra.mxu0 0
        %3579 = vmatprep.subr.bf16.mxu0 0
        %3580 = vmatpush2.bf16.msra.mxu0 0
        %3581 = vmatprep.subr.bf16.mxu0 0
        %3582 = vmatpush2.bf16.msra.mxu0 0
        %3583 = vmatprep.subr.bf16.mxu0 0
        %3584 = vmatpush2.bf16.msra.mxu0 0
        %3585 = vmatprep.subr.bf16.mxu0 0
        %3586 = vmatpush2.bf16.msra.mxu0 0
        %3587 = vmatprep.subr.bf16.mxu0 0
        %3588 = vmatpush2.bf16.msra.mxu0 0
        %3589 = vmatprep.mubr.bf16.mxu0 0
        %3590 = vmatmul.mubr.bf16.gmra.mxu0 %v3555
        %v3591 = vpop.f32.mrf.mxu0
        %v3592 = vadd.f32 0.0, %v3591
        %v3593 = vpop.f32.mrf.mxu0
        %v3594 = vpop.f32.mrf.mxu0
        %v3595 = vpop.f32.mrf.mxu0
        %3596 = vdwg.mxu0
        %v3597 = vld [vmem:[%s5 + $0x37] sm:$0x1]
        %v3598 = vmul.f32 %v3592, %v3597
        %v3599 = vld [vmem:[%s5 + $0x38] sm:$0x1]
        %v3600 = vadd.f32 %v3598, %v3599
        %v3601 = vadd.f32 %v3600, %v3314
        %v3602 = vadd.f32 %v3601, 0.0
        %v3603 = vpack.c.bf16 %v3602, %v3602
        %v3604 = vld [vmem:[%s4 + $0xd0] sm:$0xf]
        %v3605 = vld [vmem:[%s4 + $0xd4] sm:$0xf]
        %v3606 = vld [vmem:[%s4 + $0xd8] sm:$0xf]
        %v3607 = vld [vmem:[%s5 + $0x39] sm:$0x1]
        %v3611 = vunpack.c.l.b16 %v3604
        %v3612 = vunpack.c.l.b16 %v3605
        %v3613 = vunpack.c.l.b16 %v3606
        %v3614 = vpack.c.b16 %v3612, %v3611
        %v3615 = vpack.c.b16 %v3613, %v3613
        %v3618 = vsel %vm2985, %v3603, 0
        %v3621 = vsel %vm2357, %v3615, 0
        %3623 = vmatprep.subr.bf16.mxu0 0
        %3624 = vmatpush1.bf16.msra.mxu0 0
        %3625 = vmatprep.subr.bf16.mxu0 0
        %3626 = vmatpush1.bf16.msra.mxu0 0
        %3627 = vmatprep.subr.bf16.mxu0 0
        %3628 = vmatpush1.bf16.msra.mxu0 0
        %3629 = vmatprep.subr.bf16.mxu0 0
        %3630 = vmatpush1.bf16.msra.mxu0 0
        %3631 = vmatprep.subr.bf16.mxu0 0
        %3632 = vmatpush1.bf16.msra.mxu0 0
        %3633 = vmatprep.subr.bf16.mxu0 0
        %3634 = vmatpush1.bf16.msra.mxu0 0
        %3635 = vmatprep.subr.bf16.mxu0 0
        %3636 = vmatpush1.bf16.msra.mxu0 %v3621
        %3637 = vmatprep.subr.bf16.mxu0 0
        %3638 = vmatpush1.bf16.msra.mxu0 %v3614
        %3639 = vmatprep.subr.bf16.mxu0 0
        %3640 = vmatpush2.bf16.msra.mxu0 0
        %3641 = vmatprep.subr.bf16.mxu0 0
        %3642 = vmatpush2.bf16.msra.mxu0 0
        %3643 = vmatprep.subr.bf16.mxu0 0
        %3644 = vmatpush2.bf16.msra.mxu0 0
        %3645 = vmatprep.subr.bf16.mxu0 0
        %3646 = vmatpush2.bf16.msra.mxu0 0
        %3647 = vmatprep.subr.bf16.mxu0 0
        %3648 = vmatpush2.bf16.msra.mxu0 0
        %3649 = vmatprep.subr.bf16.mxu0 0
        %3650 = vmatpush2.bf16.msra.mxu0 0
        %3651 = vmatprep.subr.bf16.mxu0 0
        %3652 = vmatpush2.bf16.msra.mxu0 0
        %3653 = vmatprep.subr.bf16.mxu0 0
        %3654 = vmatpush2.bf16.msra.mxu0 0
        %3655 = vmatprep.mubr.bf16.mxu0 0
        %3656 = vmatmul.mubr.bf16.gmra.mxu0 %v3618
        %v3657 = vpop.f32.mrf.mxu0
        %v3658 = vadd.f32 %v3607, %v3657
        %v3659 = vpop.f32.mrf.mxu0
        %v3660 = vpop.f32.mrf.mxu0
        %v3661 = vpop.f32.mrf.mxu0
        %3662 = vdwg.mxu0
        %v3663 = vadd.f32 %v3658, 3.0
        %v3664 = vmax.f32 %v3663, 0.0
        %v3665 = vmin.f32 %v3664, 6.0
        %v3666 = vmul.f32 %v3658, %v3665
        %v3667 = vmul.f32 %v3666, 0.16666667
        %vm3668 = vcmask 253952
        %3669 = vst.msk [vmem:[%s243] sm:$0x1] %vm3668, %v3667
        %s3670 = sand.u32 %s159, 1
        %s3671 = scalar_lea.sflag [#allocation3], %s3670
        %s3672 = sand.u32 %s159, 1
        %s3673 = scalar_lea.vmem [#allocation2], %s3672
        // Predicated region
        $region45: #{forward.1} parent=43 // pred_check
          %p3674 = pneg %p169
        $region46: #{forward.1} parent=43 // pred_check_branch
          %3676 = sbr.rel (%p3674) target = $region48
        $region47: #{forward.1} parent=43 // pred_region
          %s3678 = ssub.s32 16, 16
          %3679 = vsyncadd %s3671, %s3678
          %s3680 = smul.addr %s20, 16
          %s3681 = scalar_lea.hbm %s6, %s3680
          %s3683 = sshll.u32 %s3673, 4
          %s3684 = int_to_ptr.vmem [resolvable:$true] %s3683
          %3686 = dma.vmem_to_hbm [thread:$0]  %s3684, 16, %s3681, %s3671
        $region48: #{forward.1} parent=43 // pred_fallthru
          _
      $region44: #{forward.1} parent=5 // pred_fallthru
        _
      %p3687 = scmp.le.s32.totalorder 2, %s15
      // Predicated region
      $region49: #{forward.1} parent=5 // pred_check
        %p3688 = pneg %p3687
      $region50: #{forward.1} parent=5 // pred_check_branch
        %3690 = sbr.rel (%p3688) target = $region52
      $region51: #{forward.1} parent=5 // pred_region
        %s3691 = ssub.s32 %s15, 2
        // Predicated region
        $region53: #{forward.1} parent=51 // pred_check
          %p3692 = pneg %p175
        $region54: #{forward.1} parent=51 // pred_check_branch
          %3694 = sbr.rel (%p3692) target = $region56
        $region55: #{forward.1} parent=51 // pred_region
          %s3695 = sand.u32 %s160, 1
          %s3696 = scalar_lea.sflag [#allocation3], %s3695
          %s3697 = sand.u32 %s160, 1
          %s3698 = scalar_lea.vmem [#allocation2], %s3697
          %3699 = dma.done %s3696, 16
        $region56: #{forward.1} parent=51 // pred_fallthru
          _
      $region52: #{forward.1} parent=5 // pred_fallthru
        _
    $region6: #{forward.1} parent=1 // loop_footer
      %s19 = sadd.s32 1, %s15
    $region7: #{forward.1} parent=1 // loop_footer_branch
      %14 = sbr.rel target = $region3
    $region8: #{forward.1} parent=1 // loop_exit
      _
    %3700 = vsyncpa [#allocation3], 1
    %s3701 = scalar_lea.sflag [#allocation3], 1
    %3702 = vsyncpa %s3701, 1

</llo_original>
